<compile_context>
chip_gen: v6e
topology: v6e:2x2x1
jax: 0.10.0
libtpu: 0.0.40
codegen_flags: <defaults>
</compile_context>

<pallas_src>
import math
import functools

import jax
import jax.numpy as jnp
from jax.experimental import pallas as pl
from jax.experimental.pallas import tpu as pltpu

NEG_INF = -1e9


def _round_up(x, m):
    return (x + m - 1) // m * m


# ----------------------------- in-kernel helpers -----------------------------

def _layer_norm(x, gamma, beta, eps=1e-6):
    # Matches the custom PyTorch LayerNorm exactly:
    #   gamma * (x - mean) / (std + eps) + beta, with *unbiased* std (ddof=1).
    mean = jnp.mean(x, axis=-1, keepdims=True)
    diff = x - mean
    var = jnp.sum(diff * diff, axis=-1, keepdims=True) * (1.0 / (x.shape[-1] - 1))
    inv = pl.reciprocal(jnp.sqrt(var) + eps, approx=True)   # EUP, not VPU divide
    return gamma * diff * inv + beta


def _split_heads(t, heads, d_k):
    # (T, D) -> head-major (heads, T, d_k).  Lane slices + stack (safe lowering).
    return jnp.stack([t[:, h * d_k:(h + 1) * d_k] for h in range(heads)],
                     axis=0).astype(jnp.bfloat16)


def _attention(q, k, v, bias, heads):
    # q: (Tq, D), k/v: (Tk, D) f32; bias broadcastable to (Tq, Tk) additive mask.
    Tq, D = q.shape
    d_k = D // heads
    scale = 1.0 / math.sqrt(d_k)

    qh = _split_heads(q, heads, d_k)
    kh = _split_heads(k, heads, d_k)
    vh = _split_heads(v, heads, d_k)

    # All heads in one batched score matmul + one batched PV matmul.
    s = jnp.einsum('hqd,hkd->hqk', qh, kh,
                   preferred_element_type=jnp.float32) * scale
    s = s + bias[None]                                  # additive mask (precomputed)
    s = s - jnp.max(s, axis=-1, keepdims=True)          # stable softmax
    p = jnp.exp(s)
    p = p * pl.reciprocal(jnp.sum(p, axis=-1, keepdims=True), approx=True)
    ctx = jnp.einsum('hqk,hkd->hqd', p.astype(jnp.bfloat16), vh,
                     preferred_element_type=jnp.float32)        # (heads, Tq, d_k)
    # Merge heads back to (Tq, D).
    return jnp.concatenate([ctx[h] for h in range(heads)], axis=-1)


# ------------------------------- Pallas kernels -------------------------------

def _decoder_stack_kernel(x0_ref, enc_ref, sbias_ref, tbias_ref,
                          lng_ref, lnb_ref, wqkv_ref, bqkv_ref, wo_ref, bo_ref,
                          w1_ref, b1_ref, w2_ref, b2_ref, fln_g_ref, fln_b_ref,
                          out_ref, x_acc, *, heads):
    l = pl.program_id(1)

    # Layer 0: load the embedded input into the resident activation buffer.
    @pl.when(l == 0)
    def _():
        x_acc[...] = x0_ref[0]

    x = x_acc[...]                       # (T, D) f32 residual stream
    D = x.shape[-1]

    enc_b = enc_ref[0].astype(jnp.bfloat16)   # (S, D) cast once, reused for K/V
    sbias = sbias_ref[0]                      # (1, S) additive source mask
    tbias = tbias_ref[...]                    # (T, T) additive target mask

    lnG = lng_ref[0]                          # (3, D)
    lnB = lnb_ref[0]                          # (3, D)
    Wqkv = wqkv_ref[0]                        # (2, D, 3D) bf16  [self, cross]
    Bqkv = bqkv_ref[0]                        # (2, 3D) f32
    Wo = wo_ref[0]                            # (2, D, D) bf16
    Bo = bo_ref[0]                            # (2, D) f32

    # ---- sublayer 1: masked self-attention + residual ----
    h = _layer_norm(x, lnG[0:1], lnB[0:1]).astype(jnp.bfloat16)
    qkv = jnp.dot(h, Wqkv[0], preferred_element_type=jnp.float32) + Bqkv[0:1]
    ctx = _attention(qkv[:, 0:D], qkv[:, D:2 * D], qkv[:, 2 * D:3 * D],
                     tbias, heads)
    x = x + jnp.dot(ctx.astype(jnp.bfloat16), Wo[0],
                    preferred_element_type=jnp.float32) + Bo[0:1]

    # ---- sublayer 2: encoder (cross) attention + residual ----
    h = _layer_norm(x, lnG[1:2], lnB[1:2]).astype(jnp.bfloat16)
    q = jnp.dot(h, Wqkv[1, :, 0:D],
                preferred_element_type=jnp.float32) + Bqkv[1:2, 0:D]
    kv = jnp.dot(enc_b, Wqkv[1, :, D:3 * D],
                 preferred_element_type=jnp.float32) + Bqkv[1:2, D:3 * D]
    ctx = _attention(q, kv[:, 0:D], kv[:, D:2 * D], sbias, heads)
    x = x + jnp.dot(ctx.astype(jnp.bfloat16), Wo[1],
                    preferred_element_type=jnp.float32) + Bo[1:2]

    # ---- sublayer 3: position-wise feed-forward + residual ----
    h = _layer_norm(x, lnG[2:3], lnB[2:3]).astype(jnp.bfloat16)
    ff = jnp.maximum(
        jnp.dot(h, w1_ref[0], preferred_element_type=jnp.float32) + b1_ref[0], 0.0)
    x = x + (jnp.dot(ff.astype(jnp.bfloat16), w2_ref[0],
                     preferred_element_type=jnp.float32) + b2_ref[0])

    x_acc[...] = x

    # Last layer: apply the decoder's final LayerNorm and emit the activations.
    @pl.when(l == pl.num_programs(1) - 1)
    def _():
        out_ref[0] = _layer_norm(x, fln_g_ref[...], fln_b_ref[...]).astype(out_ref.dtype)


def _vocab_kernel(x_ref, w_ref, b_ref, out_ref):
    # Pure tiled matmul + bias (final LayerNorm already applied upstream).
    out_ref[...] = (jnp.dot(x_ref[...].astype(jnp.bfloat16), w_ref[...],
                            preferred_element_type=jnp.float32)
                    + b_ref[...]).astype(out_ref.dtype)


# ------------------------------ kernel wrappers -------------------------------

def decoder_stack(x, enc, src_bias, tgt_bias, p, heads):
    B, T, D = x.shape
    S = enc.shape[1]
    L = p["ln_g"].shape[0]
    F = p["w1"].shape[2]
    kernel = functools.partial(_decoder_stack_kernel, heads=heads)
    return pl.pallas_call(
        kernel,
        out_shape=jax.ShapeDtypeStruct((B, T, D), jnp.float32),
        grid=(B, L),
        in_specs=[
            pl.BlockSpec((1, T, D), lambda b, l: (b, 0, 0)),            # embedded input
            pl.BlockSpec((1, S, D), lambda b, l: (b, 0, 0)),            # encoder output
            pl.BlockSpec((1, 1, S), lambda b, l: (b, 0, 0)),            # source additive mask
            pl.BlockSpec((T, T), lambda b, l: (0, 0)),                  # target additive mask (batch-invariant)
            pl.BlockSpec((1, 3, D), lambda b, l: (l, 0, 0)),            # LN gammas (per layer)
            pl.BlockSpec((1, 3, D), lambda b, l: (l, 0, 0)),            # LN betas
            pl.BlockSpec((1, 2, D, 3 * D), lambda b, l: (l, 0, 0, 0)),  # fused QKV weights (bf16)
            pl.BlockSpec((1, 2, 3 * D), lambda b, l: (l, 0, 0)),        # QKV biases
            pl.BlockSpec((1, 2, D, D), lambda b, l: (l, 0, 0, 0)),      # attn output weights (bf16)
            pl.BlockSpec((1, 2, D), lambda b, l: (l, 0, 0)),            # attn output biases
            pl.BlockSpec((1, D, F), lambda b, l: (l, 0, 0)),            # ffn w1 (bf16)
            pl.BlockSpec((1, 1, F), lambda b, l: (l, 0, 0)),            # ffn b1
            pl.BlockSpec((1, F, D), lambda b, l: (l, 0, 0)),            # ffn w2 (bf16)
            pl.BlockSpec((1, 1, D), lambda b, l: (l, 0, 0)),            # ffn b2
            pl.BlockSpec((1, D), lambda b, l: (0, 0)),                  # final LN gamma
            pl.BlockSpec((1, D), lambda b, l: (0, 0)),                  # final LN beta
        ],
        out_specs=pl.BlockSpec((1, T, D), lambda b, l: (b, 0, 0)),
        scratch_shapes=[pltpu.VMEM((T, D), jnp.float32)],               # resident activations
        compiler_params=pltpu.CompilerParams(
            dimension_semantics=("parallel", "arbitrary"),
            vmem_limit_bytes=32 * 1024 * 1024),
    )(x, enc, src_bias, tgt_bias,
      p["ln_g"], p["ln_b"], p["attn_wqkv"], p["attn_bqkv"],
      p["attn_wo"], p["attn_bo"], p["w1"], p["b1"], p["w2"], p["b2"],
      p["out_ln_g"], p["out_ln_b"])


def vocab_projection(x, w, bias):
    # x: (B, T, D), already final-LayerNorm'ed by the decoder stack epilogue.
    B, T, D = x.shape
    V = w.shape[1]
    R = B * T
    x2 = x.reshape(R, D)

    # Large row tiles cut how many times the vocab weight is streamed from HBM;
    # vocab tiles are lane-dense (multiple of 128) and capped at 1024 so the
    # double-buffered weight + output tiles also fit v7x's smaller VMEM.
    TILE_R = 512 if R >= 512 else _round_up(R, 8)
    Rp = _round_up(R, TILE_R)
    Vp = _round_up(V, 128)
    TILE_V = min(Vp, 1024)
    Vp = _round_up(Vp, TILE_V)

    if Rp != R:
        x2 = jnp.pad(x2, ((0, Rp - R), (0, 0)))
    wp = jnp.pad(w, ((0, 0), (0, Vp - V))) if Vp != V else w
    bp = jnp.pad(bias, ((0, 0), (0, Vp - V))) if Vp != V else bias

    out = pl.pallas_call(
        _vocab_kernel,
        out_shape=jax.ShapeDtypeStruct((Rp, Vp), jnp.float32),
        grid=(Rp // TILE_R, Vp // TILE_V),
        in_specs=[
            pl.BlockSpec((TILE_R, D), lambda r, v: (r, 0)),     # activation rows
            pl.BlockSpec((D, TILE_V), lambda r, v: (0, v)),     # vocab weight tile (bf16)
            pl.BlockSpec((1, TILE_V), lambda r, v: (0, v)),     # vocab bias tile
        ],
        out_specs=pl.BlockSpec((TILE_R, TILE_V), lambda r, v: (r, v)),
        compiler_params=pltpu.CompilerParams(
            dimension_semantics=("parallel", "parallel"),
            vmem_limit_bytes=32 * 1024 * 1024),
    )(x2, wp, bp)
    return out[:R, :V].reshape(B, T, V)


# ------------------------------ plain-JAX glue --------------------------------

def positional_encoding(max_len, d_model):
    position = jnp.arange(max_len, dtype=jnp.float32)[:, None]
    div_term = jnp.exp(jnp.arange(0, d_model, 2, dtype=jnp.float32)
                       * (-math.log(10000.0) / d_model))
    pe = jnp.zeros((max_len, d_model), jnp.float32)
    pe = pe.at[:, 0::2].set(jnp.sin(position * div_term))
    pe = pe.at[:, 1::2].set(jnp.cos(position * div_term))
    return pe


def init_params(key, vocab, d_model, d_ff, blocks, heads):
    ks = jax.random.split(key, 6)

    def nrm(k, shape, dtype=jnp.float32):
        return (0.02 * jax.random.normal(k, shape, jnp.float32)).astype(dtype)

    return {
        "emb": nrm(ks[0], (vocab, d_model)),
        # Per-layer weights stacked on a leading layer axis (single fused kernel).
        "ln_g": jnp.ones((blocks, 3, d_model), jnp.float32),
        "ln_b": jnp.zeros((blocks, 3, d_model), jnp.float32),
        # [self, cross] x fused (q|k|v) projection, bf16 (f32 accumulation in-kernel).
        "attn_wqkv": nrm(ks[1], (blocks, 2, d_model, 3 * d_model), jnp.bfloat16),
        "attn_bqkv": jnp.zeros((blocks, 2, 3 * d_model), jnp.float32),
        "attn_wo": nrm(ks[2], (blocks, 2, d_model, d_model), jnp.bfloat16),
        "attn_bo": jnp.zeros((blocks, 2, d_model), jnp.float32),
        "w1": nrm(ks[3], (blocks, d_model, d_ff), jnp.bfloat16),
        "b1": jnp.zeros((blocks, 1, d_ff), jnp.float32),
        "w2": nrm(ks[4], (blocks, d_ff, d_model), jnp.bfloat16),
        "b2": jnp.zeros((blocks, 1, d_model), jnp.float32),
        # Final LayerNorm + vocab projection.
        "out_ln_g": jnp.ones((1, d_model), jnp.float32),
        "out_ln_b": jnp.zeros((1, d_model), jnp.float32),
        "out_w": nrm(ks[5], (d_model, vocab), jnp.bfloat16),
        "out_b": jnp.zeros((1, vocab), jnp.float32),
    }


def decoder_forward(tokens, encoder_output, source_mask, target_mask, params, heads):
    _, T = tokens.shape
    d_model = params["emb"].shape[1]
    x = params["emb"][tokens]                        # nn.Embedding lookup
    x = x + positional_encoding(T, d_model)[None]    # PositionalEncoding (dropout = id)

    # Precompute additive masks once (masked_fill(mask == 0, -1e9) equivalent).
    src_bias = jnp.where(source_mask == 0.0, NEG_INF, 0.0).astype(jnp.float32)     # (B,1,S)
    tgt_bias = jnp.where(target_mask[0] == 0.0, NEG_INF, 0.0).astype(jnp.float32)  # (T,T)

    # Whole decoder stack (all layers + final LayerNorm) in one fused kernel,
    # then the tiled vocab projection.
    x = decoder_stack(x, encoder_output, src_bias, tgt_bias, params, heads)
    return vocab_projection(x, params["out_w"], params["out_b"])


# ----------------------------------- main --------------------------------------

if __name__ == "__main__":
    B, T, S = 2, 8, 8
    D_MODEL, D_FF, HEADS, BLOCKS, VOCAB = 32, 64, 4, 2, 50

    key = jax.random.PRNGKey(0)
    k_tok, k_enc, k_par = jax.random.split(key, 3)

    tokens = jax.random.randint(k_tok, (B, T), 0, VOCAB)                     # (B, T) int32
    encoder_output = jax.random.normal(k_enc, (B, S, D_MODEL), jnp.float32)  # (B, S, D)
    source_mask = jnp.ones((B, 1, S), jnp.float32)                           # all visible
    target_mask = jnp.tile(jnp.tril(jnp.ones((T, T), jnp.float32))[None], (B, 1, 1))

    params = init_params(k_par, VOCAB, D_MODEL, D_FF, BLOCKS, HEADS)

    logits = decoder_forward(tokens, encoder_output, source_mask, target_mask,
                             params, HEADS)
    jax.block_until_ready(logits)
    assert logits.shape == (B, T, VOCAB), logits.shape
    print("KERNEL_OK")
</pallas_src>

<mosaic_0001>
module attributes {stable_mosaic.version = 11 : i64} {
  func.func @_decoder_stack_kernel(%arg0: i32, %arg1: i32, %arg2: memref<1x8x32xf32, #tpu.memory_space<vmem>>, %arg3: memref<1x8x32xf32, #tpu.memory_space<vmem>>, %arg4: memref<1x1x8xf32, #tpu.memory_space<vmem>>, %arg5: memref<8x8xf32, #tpu.memory_space<vmem>>, %arg6: memref<1x3x32xf32, #tpu.memory_space<vmem>>, %arg7: memref<1x3x32xf32, #tpu.memory_space<vmem>>, %arg8: memref<1x2x32x96xbf16, #tpu.memory_space<vmem>>, %arg9: memref<1x2x96xf32, #tpu.memory_space<vmem>>, %arg10: memref<1x2x32x32xbf16, #tpu.memory_space<vmem>>, %arg11: memref<1x2x32xf32, #tpu.memory_space<vmem>>, %arg12: memref<1x32x64xbf16, #tpu.memory_space<vmem>>, %arg13: memref<1x1x64xf32, #tpu.memory_space<vmem>>, %arg14: memref<1x64x32xbf16, #tpu.memory_space<vmem>>, %arg15: memref<1x1x32xf32, #tpu.memory_space<vmem>>, %arg16: memref<1x32xf32, #tpu.memory_space<vmem>>, %arg17: memref<1x32xf32, #tpu.memory_space<vmem>>, %arg18: memref<1x8x32xf32, #tpu.memory_space<vmem>>, %arg19: memref<8x32xf32, #tpu.memory_space<vmem>>) attributes {dimension_semantics = [#tpu.dimension_semantics<parallel>, #tpu.dimension_semantics<arbitrary>], iteration_bounds = array<i64: 2, 2>, scalar_prefetch = 0 : i64, scratch_operands = 1 : i64, tpu.core_type = #tpu.core_type<tc>, window_params = [{transform_indices = @transform_0, window_bounds = array<i64: 1, 8, 32>}, {transform_indices = @transform_1, window_bounds = array<i64: 1, 8, 32>}, {transform_indices = @transform_2, window_bounds = array<i64: 1, 1, 8>}, {pipeline_mode = #tpu.pipeline_mode<synchronous>, transform_indices = @transform_3, window_bounds = array<i64: 8, 8>}, {transform_indices = @transform_4, window_bounds = array<i64: 1, 3, 32>}, {transform_indices = @transform_5, window_bounds = array<i64: 1, 3, 32>}, {transform_indices = @transform_6, window_bounds = array<i64: 1, 2, 32, 96>}, {transform_indices = @transform_7, window_bounds = array<i64: 1, 2, 96>}, {transform_indices = @transform_8, window_bounds = array<i64: 1, 2, 32, 32>}, {transform_indices = @transform_9, window_bounds = array<i64: 1, 2, 32>}, {transform_indices = @transform_10, window_bounds = array<i64: 1, 32, 64>}, {transform_indices = @transform_11, window_bounds = array<i64: 1, 1, 64>}, {transform_indices = @transform_12, window_bounds = array<i64: 1, 64, 32>}, {transform_indices = @transform_13, window_bounds = array<i64: 1, 1, 32>}, {pipeline_mode = #tpu.pipeline_mode<synchronous>, transform_indices = @transform_14, window_bounds = array<i64: 1, 32>}, {pipeline_mode = #tpu.pipeline_mode<synchronous>, transform_indices = @transform_15, window_bounds = array<i64: 1, 32>}, {transform_indices = @transform_16, window_bounds = array<i64: 1, 8, 32>}]} {
    %c0_i32 = arith.constant 0 : i32
    %0 = arith.cmpi eq, %arg1, %c0_i32 : i32
    %1 = arith.extui %0 : i1 to i32
    %c0_i32_0 = arith.constant 0 : i32
    %2 = arith.cmpi ne, %1, %c0_i32_0 : i32
    scf.if %2 {
      %c0_77 = arith.constant 0 : index
      %c0_78 = arith.constant 0 : index
      %c0_79 = arith.constant 0 : index
      %269 = vector.load %arg2[%c0_77, %c0_78, %c0_79] : memref<1x8x32xf32, #tpu.memory_space<vmem>>, vector<1x8x32xf32>
      %270 = vector.shape_cast %269 : vector<1x8x32xf32> to vector<8x32xf32>
      %c0_80 = arith.constant 0 : index
      %c0_81 = arith.constant 0 : index
      %271 = vector.load %arg19[%c0_80, %c0_81] : memref<8x32xf32, #tpu.memory_space<vmem>>, vector<8x32xf32>
      tpu.vector_store %arg19[%c0_80, %c0_81], %270 {strides = array<i32>} : memref<8x32xf32, #tpu.memory_space<vmem>>, vector<8x32xf32>,
    } else {
    }
    %c0 = arith.constant 0 : index
    %c0_1 = arith.constant 0 : index
    %3 = vector.load %arg19[%c0, %c0_1] : memref<8x32xf32, #tpu.memory_space<vmem>>, vector<8x32xf32>
    %c0_2 = arith.constant 0 : index
    %c0_3 = arith.constant 0 : index
    %c0_4 = arith.constant 0 : index
    %4 = vector.load %arg3[%c0_2, %c0_3, %c0_4] : memref<1x8x32xf32, #tpu.memory_space<vmem>>, vector<1x8x32xf32>
    %5 = vector.shape_cast %4 : vector<1x8x32xf32> to vector<8x32xf32>
    %6 = arith.truncf %5 : vector<8x32xf32> to vector<8x32xbf16>
    %c0_5 = arith.constant 0 : index
    %c0_6 = arith.constant 0 : index
    %c0_7 = arith.constant 0 : index
    %7 = vector.load %arg4[%c0_5, %c0_6, %c0_7] : memref<1x1x8xf32, #tpu.memory_space<vmem>>, vector<1x1x8xf32>
    %8 = vector.shape_cast %7 : vector<1x1x8xf32> to vector<1x8xf32>
    %c0_8 = arith.constant 0 : index
    %c0_9 = arith.constant 0 : index
    %9 = vector.load %arg5[%c0_8, %c0_9] : memref<8x8xf32, #tpu.memory_space<vmem>>, vector<8x8xf32>
    %c0_10 = arith.constant 0 : index
    %c0_11 = arith.constant 0 : index
    %c0_12 = arith.constant 0 : index
    %10 = vector.load %arg6[%c0_10, %c0_11, %c0_12] : memref<1x3x32xf32, #tpu.memory_space<vmem>>, vector<1x3x32xf32>
    %11 = vector.shape_cast %10 : vector<1x3x32xf32> to vector<3x32xf32>
    %c0_13 = arith.constant 0 : index
    %c0_14 = arith.constant 0 : index
    %c0_15 = arith.constant 0 : index
    %12 = vector.load %arg7[%c0_13, %c0_14, %c0_15] : memref<1x3x32xf32, #tpu.memory_space<vmem>>, vector<1x3x32xf32>
    %13 = vector.shape_cast %12 : vector<1x3x32xf32> to vector<3x32xf32>
    %c0_16 = arith.constant 0 : index
    %c0_17 = arith.constant 0 : index
    %c0_18 = arith.constant 0 : index
    %c0_19 = arith.constant 0 : index
    %14 = vector.load %arg8[%c0_16, %c0_17, %c0_18, %c0_19] : memref<1x2x32x96xbf16, #tpu.memory_space<vmem>>, vector<1x2x32x96xbf16>
    %15 = vector.shape_cast %14 : vector<1x2x32x96xbf16> to vector<2x32x96xbf16>
    %c0_20 = arith.constant 0 : index
    %c0_21 = arith.constant 0 : index
    %c0_22 = arith.constant 0 : index
    %16 = vector.load %arg9[%c0_20, %c0_21, %c0_22] : memref<1x2x96xf32, #tpu.memory_space<vmem>>, vector<1x2x96xf32>
    %17 = vector.shape_cast %16 : vector<1x2x96xf32> to vector<2x96xf32>
    %c0_23 = arith.constant 0 : index
    %c0_24 = arith.constant 0 : index
    %c0_25 = arith.constant 0 : index
    %c0_26 = arith.constant 0 : index
    %18 = vector.load %arg10[%c0_23, %c0_24, %c0_25, %c0_26] : memref<1x2x32x32xbf16, #tpu.memory_space<vmem>>, vector<1x2x32x32xbf16>
    %19 = vector.shape_cast %18 : vector<1x2x32x32xbf16> to vector<2x32x32xbf16>
    %c0_27 = arith.constant 0 : index
    %c0_28 = arith.constant 0 : index
    %c0_29 = arith.constant 0 : index
    %20 = vector.load %arg11[%c0_27, %c0_28, %c0_29] : memref<1x2x32xf32, #tpu.memory_space<vmem>>, vector<1x2x32xf32>
    %21 = vector.shape_cast %20 : vector<1x2x32xf32> to vector<2x32xf32>
    %22 = vector.extract_strided_slice %11 {offsets = [0, 0], sizes = [1, 32], strides = [1, 1]} : vector<3x32xf32> to vector<1x32xf32>
    %23 = vector.extract_strided_slice %13 {offsets = [0, 0], sizes = [1, 32], strides = [1, 1]} : vector<3x32xf32> to vector<1x32xf32>
    %cst = arith.constant dense<0.000000e+00> : vector<8xf32>
    %24 = vector.multi_reduction <add>, %3, %cst [1] : vector<8x32xf32> to vector<8xf32>
    %25 = vector.shape_cast %24 : vector<8xf32> to vector<8x1xf32>
    %cst_30 = arith.constant 3.200000e+01 : f32
    %26 = vector.broadcast %cst_30 : f32 to vector<8x1xf32>
    %27 = arith.divf %25, %26 : vector<8x1xf32>
    %28 = vector.broadcast %27 : vector<8x1xf32> to vector<8x32xf32>
    %29 = arith.subf %3, %28 : vector<8x32xf32>
    %30 = arith.mulf %29, %29 : vector<8x32xf32>
    %cst_31 = arith.constant dense<0.000000e+00> : vector<8xf32>
    %31 = vector.multi_reduction <add>, %30, %cst_31 [1] : vector<8x32xf32> to vector<8xf32>
    %32 = vector.shape_cast %31 : vector<8xf32> to vector<8x1xf32>
    %cst_32 = arith.constant 0.0322580636 : f32
    %33 = vector.broadcast %cst_32 : f32 to vector<8x1xf32>
    %34 = arith.mulf %32, %33 : vector<8x1xf32>
    %35 = math.sqrt %34 : vector<8x1xf32>
    %cst_33 = arith.constant 9.99999997E-7 : f32
    %36 = vector.broadcast %cst_33 : f32 to vector<8x1xf32>
    %37 = arith.addf %35, %36 : vector<8x1xf32>
    %38 = tpu.reciprocal %37 {approx = true} : vector<8x1xf32> -> vector<8x1xf32>
    %39 = vector.broadcast %22 : vector<1x32xf32> to vector<8x32xf32>
    %40 = arith.mulf %39, %29 : vector<8x32xf32>
    %41 = vector.broadcast %38 : vector<8x1xf32> to vector<8x32xf32>
    %42 = arith.mulf %40, %41 : vector<8x32xf32>
    %43 = vector.broadcast %23 : vector<1x32xf32> to vector<8x32xf32>
    %44 = arith.addf %42, %43 : vector<8x32xf32>
    %45 = arith.truncf %44 : vector<8x32xf32> to vector<8x32xbf16>
    %46 = vector.extract_strided_slice %15 {offsets = [0, 0, 0], sizes = [1, 32, 96], strides = [1, 1, 1]} : vector<2x32x96xbf16> to vector<1x32x96xbf16>
    %47 = vector.shape_cast %46 : vector<1x32x96xbf16> to vector<32x96xbf16>
    %cst_34 = arith.constant dense<0.000000e+00> : vector<8x96xf32>
    %48 = tpu.matmul %45, %47, %cst_34 {dimension_numbers = #tpu.dot_dimension_numbers<[1], [0], [0], [1], [0, 0, 1, 1], [], []>} : vector<8x32xbf16>, vector<32x96xbf16>, vector<8x96xf32> -> vector<8x96xf32>
    %49 = vector.extract_strided_slice %17 {offsets = [0, 0], sizes = [1, 96], strides = [1, 1]} : vector<2x96xf32> to vector<1x96xf32>
    %50 = vector.broadcast %49 : vector<1x96xf32> to vector<8x96xf32>
    %51 = arith.addf %48, %50 : vector<8x96xf32>
    %52 = vector.extract_strided_slice %51 {offsets = [0, 0], sizes = [8, 32], strides = [1, 1]} : vector<8x96xf32> to vector<8x32xf32>
    %53 = vector.extract_strided_slice %51 {offsets = [0, 32], sizes = [8, 32], strides = [1, 1]} : vector<8x96xf32> to vector<8x32xf32>
    %54 = vector.extract_strided_slice %51 {offsets = [0, 64], sizes = [8, 32], strides = [1, 1]} : vector<8x96xf32> to vector<8x32xf32>
    %55 = vector.extract_strided_slice %52 {offsets = [0, 0], sizes = [8, 8], strides = [1, 1]} : vector<8x32xf32> to vector<8x8xf32>
    %56 = vector.extract_strided_slice %52 {offsets = [0, 8], sizes = [8, 8], strides = [1, 1]} : vector<8x32xf32> to vector<8x8xf32>
    %57 = vector.extract_strided_slice %52 {offsets = [0, 16], sizes = [8, 8], strides = [1, 1]} : vector<8x32xf32> to vector<8x8xf32>
    %58 = vector.extract_strided_slice %52 {offsets = [0, 24], sizes = [8, 8], strides = [1, 1]} : vector<8x32xf32> to vector<8x8xf32>
    %59 = vector.shape_cast %55 : vector<8x8xf32> to vector<1x8x8xf32>
    %60 = vector.shape_cast %56 : vector<8x8xf32> to vector<1x8x8xf32>
    %61 = vector.shape_cast %57 : vector<8x8xf32> to vector<1x8x8xf32>
    %62 = vector.shape_cast %58 : vector<8x8xf32> to vector<1x8x8xf32>
    %63 = tpu.concatenate %59, %60, %61, %62 in 0 : vector<1x8x8xf32>, vector<1x8x8xf32>, vector<1x8x8xf32>, vector<1x8x8xf32> -> vector<4x8x8xf32>
    %64 = arith.truncf %63 : vector<4x8x8xf32> to vector<4x8x8xbf16>
    %65 = vector.extract_strided_slice %53 {offsets = [0, 0], sizes = [8, 8], strides = [1, 1]} : vector<8x32xf32> to vector<8x8xf32>
    %66 = vector.extract_strided_slice %53 {offsets = [0, 8], sizes = [8, 8], strides = [1, 1]} : vector<8x32xf32> to vector<8x8xf32>
    %67 = vector.extract_strided_slice %53 {offsets = [0, 16], sizes = [8, 8], strides = [1, 1]} : vector<8x32xf32> to vector<8x8xf32>
    %68 = vector.extract_strided_slice %53 {offsets = [0, 24], sizes = [8, 8], strides = [1, 1]} : vector<8x32xf32> to vector<8x8xf32>
    %69 = vector.shape_cast %65 : vector<8x8xf32> to vector<1x8x8xf32>
    %70 = vector.shape_cast %66 : vector<8x8xf32> to vector<1x8x8xf32>
    %71 = vector.shape_cast %67 : vector<8x8xf32> to vector<1x8x8xf32>
    %72 = vector.shape_cast %68 : vector<8x8xf32> to vector<1x8x8xf32>
    %73 = tpu.concatenate %69, %70, %71, %72 in 0 : vector<1x8x8xf32>, vector<1x8x8xf32>, vector<1x8x8xf32>, vector<1x8x8xf32> -> vector<4x8x8xf32>
    %74 = arith.truncf %73 : vector<4x8x8xf32> to vector<4x8x8xbf16>
    %75 = vector.extract_strided_slice %54 {offsets = [0, 0], sizes = [8, 8], strides = [1, 1]} : vector<8x32xf32> to vector<8x8xf32>
    %76 = vector.extract_strided_slice %54 {offsets = [0, 8], sizes = [8, 8], strides = [1, 1]} : vector<8x32xf32> to vector<8x8xf32>
    %77 = vector.extract_strided_slice %54 {offsets = [0, 16], sizes = [8, 8], strides = [1, 1]} : vector<8x32xf32> to vector<8x8xf32>
    %78 = vector.extract_strided_slice %54 {offsets = [0, 24], sizes = [8, 8], strides = [1, 1]} : vector<8x32xf32> to vector<8x8xf32>
    %79 = vector.shape_cast %75 : vector<8x8xf32> to vector<1x8x8xf32>
    %80 = vector.shape_cast %76 : vector<8x8xf32> to vector<1x8x8xf32>
    %81 = vector.shape_cast %77 : vector<8x8xf32> to vector<1x8x8xf32>
    %82 = vector.shape_cast %78 : vector<8x8xf32> to vector<1x8x8xf32>
    %83 = tpu.concatenate %79, %80, %81, %82 in 0 : vector<1x8x8xf32>, vector<1x8x8xf32>, vector<1x8x8xf32>, vector<1x8x8xf32> -> vector<4x8x8xf32>
    %84 = arith.truncf %83 : vector<4x8x8xf32> to vector<4x8x8xbf16>
    "tpu.trace_start"() <{level = 10 : i32, message = "hqd,hkd->hqk"}> : () -> ()
    %cst_35 = arith.constant dense<0.000000e+00> : vector<4x8x8xf32>
    %85 = tpu.matmul %64, %74, %cst_35 {dimension_numbers = #tpu.dot_dimension_numbers<[2], [2], [1], [1], [0, 0, 0, 1, 1, 1], [0], [0]>} : vector<4x8x8xbf16>, vector<4x8x8xbf16>, vector<4x8x8xf32> -> vector<4x8x8xf32>
    "tpu.trace_stop"() : () -> ()
    %cst_36 = arith.constant 0.353553385 : f32
    %86 = vector.broadcast %cst_36 : f32 to vector<4x8x8xf32>
    %87 = arith.mulf %85, %86 : vector<4x8x8xf32>
    %88 = vector.shape_cast %9 : vector<8x8xf32> to vector<1x8x8xf32>
    %89 = vector.broadcast %88 : vector<1x8x8xf32> to vector<4x8x8xf32>
    %90 = arith.addf %87, %89 : vector<4x8x8xf32>
    %cst_37 = arith.constant dense<0xFF800000> : vector<4x8xf32>
    %91 = vector.multi_reduction <maximumf>, %90, %cst_37 [2] : vector<4x8x8xf32> to vector<4x8xf32>
    %92 = vector.shape_cast %91 : vector<4x8xf32> to vector<4x8x1xf32>
    %93 = vector.broadcast %92 : vector<4x8x1xf32> to vector<4x8x8xf32>
    %94 = arith.subf %90, %93 : vector<4x8x8xf32>
    %95 = math.exp %94 : vector<4x8x8xf32>
    %cst_38 = arith.constant dense<0.000000e+00> : vector<4x8xf32>
    %96 = vector.multi_reduction <add>, %95, %cst_38 [2] : vector<4x8x8xf32> to vector<4x8xf32>
    %97 = vector.shape_cast %96 : vector<4x8xf32> to vector<4x8x1xf32>
    %98 = tpu.reciprocal %97 {approx = true} : vector<4x8x1xf32> -> vector<4x8x1xf32>
    %99 = vector.broadcast %98 : vector<4x8x1xf32> to vector<4x8x8xf32>
    %100 = arith.mulf %95, %99 : vector<4x8x8xf32>
    %101 = arith.truncf %100 : vector<4x8x8xf32> to vector<4x8x8xbf16>
    "tpu.trace_start"() <{level = 10 : i32, message = "hqk,hkd->hqd"}> : () -> ()
    %cst_39 = arith.constant dense<0.000000e+00> : vector<4x8x8xf32>
    %102 = tpu.matmul %101, %84, %cst_39 {dimension_numbers = #tpu.dot_dimension_numbers<[2], [1], [1], [2], [0, 0, 0, 1, 1, 2], [0], [0]>} : vector<4x8x8xbf16>, vector<4x8x8xbf16>, vector<4x8x8xf32> -> vector<4x8x8xf32>
    "tpu.trace_stop"() : () -> ()
    %103 = vector.extract_strided_slice %102 {offsets = [0, 0, 0], sizes = [1, 8, 8], strides = [1, 1, 1]} : vector<4x8x8xf32> to vector<1x8x8xf32>
    %104 = vector.shape_cast %103 : vector<1x8x8xf32> to vector<8x8xf32>
    %105 = vector.extract_strided_slice %102 {offsets = [1, 0, 0], sizes = [1, 8, 8], strides = [1, 1, 1]} : vector<4x8x8xf32> to vector<1x8x8xf32>
    %106 = vector.shape_cast %105 : vector<1x8x8xf32> to vector<8x8xf32>
    %107 = vector.extract_strided_slice %102 {offsets = [2, 0, 0], sizes = [1, 8, 8], strides = [1, 1, 1]} : vector<4x8x8xf32> to vector<1x8x8xf32>
    %108 = vector.shape_cast %107 : vector<1x8x8xf32> to vector<8x8xf32>
    %109 = vector.extract_strided_slice %102 {offsets = [3, 0, 0], sizes = [1, 8, 8], strides = [1, 1, 1]} : vector<4x8x8xf32> to vector<1x8x8xf32>
    %110 = vector.shape_cast %109 : vector<1x8x8xf32> to vector<8x8xf32>
    %111 = tpu.concatenate %104, %106, %108, %110 in 1 : vector<8x8xf32>, vector<8x8xf32>, vector<8x8xf32>, vector<8x8xf32> -> vector<8x32xf32>
    %112 = arith.truncf %111 : vector<8x32xf32> to vector<8x32xbf16>
    %113 = vector.extract_strided_slice %19 {offsets = [0, 0, 0], sizes = [1, 32, 32], strides = [1, 1, 1]} : vector<2x32x32xbf16> to vector<1x32x32xbf16>
    %114 = vector.shape_cast %113 : vector<1x32x32xbf16> to vector<32x32xbf16>
    %cst_40 = arith.constant dense<0.000000e+00> : vector<8x32xf32>
    %115 = tpu.matmul %112, %114, %cst_40 {dimension_numbers = #tpu.dot_dimension_numbers<[1], [0], [0], [1], [0, 0, 1, 1], [], []>} : vector<8x32xbf16>, vector<32x32xbf16>, vector<8x32xf32> -> vector<8x32xf32>
    %116 = arith.addf %3, %115 : vector<8x32xf32>
    %117 = vector.extract_strided_slice %21 {offsets = [0, 0], sizes = [1, 32], strides = [1, 1]} : vector<2x32xf32> to vector<1x32xf32>
    %118 = vector.broadcast %117 : vector<1x32xf32> to vector<8x32xf32>
    %119 = arith.addf %116, %118 : vector<8x32xf32>
    %120 = vector.extract_strided_slice %11 {offsets = [1, 0], sizes = [1, 32], strides = [1, 1]} : vector<3x32xf32> to vector<1x32xf32>
    %121 = vector.extract_strided_slice %13 {offsets = [1, 0], sizes = [1, 32], strides = [1, 1]} : vector<3x32xf32> to vector<1x32xf32>
    %cst_41 = arith.constant dense<0.000000e+00> : vector<8xf32>
    %122 = vector.multi_reduction <add>, %119, %cst_41 [1] : vector<8x32xf32> to vector<8xf32>
    %123 = vector.shape_cast %122 : vector<8xf32> to vector<8x1xf32>
    %cst_42 = arith.constant 3.200000e+01 : f32
    %124 = vector.broadcast %cst_42 : f32 to vector<8x1xf32>
    %125 = arith.divf %123, %124 : vector<8x1xf32>
    %126 = vector.broadcast %125 : vector<8x1xf32> to vector<8x32xf32>
    %127 = arith.subf %119, %126 : vector<8x32xf32>
    %128 = arith.mulf %127, %127 : vector<8x32xf32>
    %cst_43 = arith.constant dense<0.000000e+00> : vector<8xf32>
    %129 = vector.multi_reduction <add>, %128, %cst_43 [1] : vector<8x32xf32> to vector<8xf32>
    %130 = vector.shape_cast %129 : vector<8xf32> to vector<8x1xf32>
    %cst_44 = arith.constant 0.0322580636 : f32
    %131 = vector.broadcast %cst_44 : f32 to vector<8x1xf32>
    %132 = arith.mulf %130, %131 : vector<8x1xf32>
    %133 = math.sqrt %132 : vector<8x1xf32>
    %cst_45 = arith.constant 9.99999997E-7 : f32
    %134 = vector.broadcast %cst_45 : f32 to vector<8x1xf32>
    %135 = arith.addf %133, %134 : vector<8x1xf32>
    %136 = tpu.reciprocal %135 {approx = true} : vector<8x1xf32> -> vector<8x1xf32>
    %137 = vector.broadcast %120 : vector<1x32xf32> to vector<8x32xf32>
    %138 = arith.mulf %137, %127 : vector<8x32xf32>
    %139 = vector.broadcast %136 : vector<8x1xf32> to vector<8x32xf32>
    %140 = arith.mulf %138, %139 : vector<8x32xf32>
    %141 = vector.broadcast %121 : vector<1x32xf32> to vector<8x32xf32>
    %142 = arith.addf %140, %141 : vector<8x32xf32>
    %143 = arith.truncf %142 : vector<8x32xf32> to vector<8x32xbf16>
    %144 = vector.extract_strided_slice %15 {offsets = [1, 0, 0], sizes = [1, 32, 32], strides = [1, 1, 1]} : vector<2x32x96xbf16> to vector<1x32x32xbf16>
    %145 = vector.shape_cast %144 : vector<1x32x32xbf16> to vector<32x32xbf16>
    %cst_46 = arith.constant dense<0.000000e+00> : vector<8x32xf32>
    %146 = tpu.matmul %143, %145, %cst_46 {dimension_numbers = #tpu.dot_dimension_numbers<[1], [0], [0], [1], [0, 0, 1, 1], [], []>} : vector<8x32xbf16>, vector<32x32xbf16>, vector<8x32xf32> -> vector<8x32xf32>
    %147 = vector.extract_strided_slice %17 {offsets = [1, 0], sizes = [1, 32], strides = [1, 1]} : vector<2x96xf32> to vector<1x32xf32>
    %148 = vector.broadcast %147 : vector<1x32xf32> to vector<8x32xf32>
    %149 = arith.addf %146, %148 : vector<8x32xf32>
    %150 = vector.extract_strided_slice %15 {offsets = [1, 0, 32], sizes = [1, 32, 64], strides = [1, 1, 1]} : vector<2x32x96xbf16> to vector<1x32x64xbf16>
    %151 = vector.shape_cast %150 : vector<1x32x64xbf16> to vector<32x64xbf16>
    %cst_47 = arith.constant dense<0.000000e+00> : vector<8x64xf32>
    %152 = tpu.matmul %6, %151, %cst_47 {dimension_numbers = #tpu.dot_dimension_numbers<[1], [0], [0], [1], [0, 0, 1, 1], [], []>} : vector<8x32xbf16>, vector<32x64xbf16>, vector<8x64xf32> -> vector<8x64xf32>
    %153 = vector.extract_strided_slice %17 {offsets = [1, 32], sizes = [1, 64], strides = [1, 1]} : vector<2x96xf32> to vector<1x64xf32>
    %154 = vector.broadcast %153 : vector<1x64xf32> to vector<8x64xf32>
    %155 = arith.addf %152, %154 : vector<8x64xf32>
    %156 = vector.extract_strided_slice %155 {offsets = [0, 0], sizes = [8, 32], strides = [1, 1]} : vector<8x64xf32> to vector<8x32xf32>
    %157 = vector.extract_strided_slice %155 {offsets = [0, 32], sizes = [8, 32], strides = [1, 1]} : vector<8x64xf32> to vector<8x32xf32>
    %158 = vector.extract_strided_slice %149 {offsets = [0, 0], sizes = [8, 8], strides = [1, 1]} : vector<8x32xf32> to vector<8x8xf32>
    %159 = vector.extract_strided_slice %149 {offsets = [0, 8], sizes = [8, 8], strides = [1, 1]} : vector<8x32xf32> to vector<8x8xf32>
    %160 = vector.extract_strided_slice %149 {offsets = [0, 16], sizes = [8, 8], strides = [1, 1]} : vector<8x32xf32> to vector<8x8xf32>
    %161 = vector.extract_strided_slice %149 {offsets = [0, 24], sizes = [8, 8], strides = [1, 1]} : vector<8x32xf32> to vector<8x8xf32>
    %162 = vector.shape_cast %158 : vector<8x8xf32> to vector<1x8x8xf32>
    %163 = vector.shape_cast %159 : vector<8x8xf32> to vector<1x8x8xf32>
    %164 = vector.shape_cast %160 : vector<8x8xf32> to vector<1x8x8xf32>
    %165 = vector.shape_cast %161 : vector<8x8xf32> to vector<1x8x8xf32>
    %166 = tpu.concatenate %162, %163, %164, %165 in 0 : vector<1x8x8xf32>, vector<1x8x8xf32>, vector<1x8x8xf32>, vector<1x8x8xf32> -> vector<4x8x8xf32>
    %167 = arith.truncf %166 : vector<4x8x8xf32> to vector<4x8x8xbf16>
    %168 = vector.extract_strided_slice %156 {offsets = [0, 0], sizes = [8, 8], strides = [1, 1]} : vector<8x32xf32> to vector<8x8xf32>
    %169 = vector.extract_strided_slice %156 {offsets = [0, 8], sizes = [8, 8], strides = [1, 1]} : vector<8x32xf32> to vector<8x8xf32>
    %170 = vector.extract_strided_slice %156 {offsets = [0, 16], sizes = [8, 8], strides = [1, 1]} : vector<8x32xf32> to vector<8x8xf32>
    %171 = vector.extract_strided_slice %156 {offsets = [0, 24], sizes = [8, 8], strides = [1, 1]} : vector<8x32xf32> to vector<8x8xf32>
    %172 = vector.shape_cast %168 : vector<8x8xf32> to vector<1x8x8xf32>
    %173 = vector.shape_cast %169 : vector<8x8xf32> to vector<1x8x8xf32>
    %174 = vector.shape_cast %170 : vector<8x8xf32> to vector<1x8x8xf32>
    %175 = vector.shape_cast %171 : vector<8x8xf32> to vector<1x8x8xf32>
    %176 = tpu.concatenate %172, %173, %174, %175 in 0 : vector<1x8x8xf32>, vector<1x8x8xf32>, vector<1x8x8xf32>, vector<1x8x8xf32> -> vector<4x8x8xf32>
    %177 = arith.truncf %176 : vector<4x8x8xf32> to vector<4x8x8xbf16>
    %178 = vector.extract_strided_slice %157 {offsets = [0, 0], sizes = [8, 8], strides = [1, 1]} : vector<8x32xf32> to vector<8x8xf32>
    %179 = vector.extract_strided_slice %157 {offsets = [0, 8], sizes = [8, 8], strides = [1, 1]} : vector<8x32xf32> to vector<8x8xf32>
    %180 = vector.extract_strided_slice %157 {offsets = [0, 16], sizes = [8, 8], strides = [1, 1]} : vector<8x32xf32> to vector<8x8xf32>
    %181 = vector.extract_strided_slice %157 {offsets = [0, 24], sizes = [8, 8], strides = [1, 1]} : vector<8x32xf32> to vector<8x8xf32>
    %182 = vector.shape_cast %178 : vector<8x8xf32> to vector<1x8x8xf32>
    %183 = vector.shape_cast %179 : vector<8x8xf32> to vector<1x8x8xf32>
    %184 = vector.shape_cast %180 : vector<8x8xf32> to vector<1x8x8xf32>
    %185 = vector.shape_cast %181 : vector<8x8xf32> to vector<1x8x8xf32>
    %186 = tpu.concatenate %182, %183, %184, %185 in 0 : vector<1x8x8xf32>, vector<1x8x8xf32>, vector<1x8x8xf32>, vector<1x8x8xf32> -> vector<4x8x8xf32>
    %187 = arith.truncf %186 : vector<4x8x8xf32> to vector<4x8x8xbf16>
    "tpu.trace_start"() <{level = 10 : i32, message = "hqd,hkd->hqk"}> : () -> ()
    %cst_48 = arith.constant dense<0.000000e+00> : vector<4x8x8xf32>
    %188 = tpu.matmul %167, %177, %cst_48 {dimension_numbers = #tpu.dot_dimension_numbers<[2], [2], [1], [1], [0, 0, 0, 1, 1, 1], [0], [0]>} : vector<4x8x8xbf16>, vector<4x8x8xbf16>, vector<4x8x8xf32> -> vector<4x8x8xf32>
    "tpu.trace_stop"() : () -> ()
    %cst_49 = arith.constant 0.353553385 : f32
    %189 = vector.broadcast %cst_49 : f32 to vector<4x8x8xf32>
    %190 = arith.mulf %188, %189 : vector<4x8x8xf32>
    %191 = vector.shape_cast %8 : vector<1x8xf32> to vector<1x1x8xf32>
    %192 = vector.broadcast %191 : vector<1x1x8xf32> to vector<4x8x8xf32>
    %193 = arith.addf %190, %192 : vector<4x8x8xf32>
    %cst_50 = arith.constant dense<0xFF800000> : vector<4x8xf32>
    %194 = vector.multi_reduction <maximumf>, %193, %cst_50 [2] : vector<4x8x8xf32> to vector<4x8xf32>
    %195 = vector.shape_cast %194 : vector<4x8xf32> to vector<4x8x1xf32>
    %196 = vector.broadcast %195 : vector<4x8x1xf32> to vector<4x8x8xf32>
    %197 = arith.subf %193, %196 : vector<4x8x8xf32>
    %198 = math.exp %197 : vector<4x8x8xf32>
    %cst_51 = arith.constant dense<0.000000e+00> : vector<4x8xf32>
    %199 = vector.multi_reduction <add>, %198, %cst_51 [2] : vector<4x8x8xf32> to vector<4x8xf32>
    %200 = vector.shape_cast %199 : vector<4x8xf32> to vector<4x8x1xf32>
    %201 = tpu.reciprocal %200 {approx = true} : vector<4x8x1xf32> -> vector<4x8x1xf32>
    %202 = vector.broadcast %201 : vector<4x8x1xf32> to vector<4x8x8xf32>
    %203 = arith.mulf %198, %202 : vector<4x8x8xf32>
    %204 = arith.truncf %203 : vector<4x8x8xf32> to vector<4x8x8xbf16>
    "tpu.trace_start"() <{level = 10 : i32, message = "hqk,hkd->hqd"}> : () -> ()
    %cst_52 = arith.constant dense<0.000000e+00> : vector<4x8x8xf32>
    %205 = tpu.matmul %204, %187, %cst_52 {dimension_numbers = #tpu.dot_dimension_numbers<[2], [1], [1], [2], [0, 0, 0, 1, 1, 2], [0], [0]>} : vector<4x8x8xbf16>, vector<4x8x8xbf16>, vector<4x8x8xf32> -> vector<4x8x8xf32>
    "tpu.trace_stop"() : () -> ()
    %206 = vector.extract_strided_slice %205 {offsets = [0, 0, 0], sizes = [1, 8, 8], strides = [1, 1, 1]} : vector<4x8x8xf32> to vector<1x8x8xf32>
    %207 = vector.shape_cast %206 : vector<1x8x8xf32> to vector<8x8xf32>
    %208 = vector.extract_strided_slice %205 {offsets = [1, 0, 0], sizes = [1, 8, 8], strides = [1, 1, 1]} : vector<4x8x8xf32> to vector<1x8x8xf32>
    %209 = vector.shape_cast %208 : vector<1x8x8xf32> to vector<8x8xf32>
    %210 = vector.extract_strided_slice %205 {offsets = [2, 0, 0], sizes = [1, 8, 8], strides = [1, 1, 1]} : vector<4x8x8xf32> to vector<1x8x8xf32>
    %211 = vector.shape_cast %210 : vector<1x8x8xf32> to vector<8x8xf32>
    %212 = vector.extract_strided_slice %205 {offsets = [3, 0, 0], sizes = [1, 8, 8], strides = [1, 1, 1]} : vector<4x8x8xf32> to vector<1x8x8xf32>
    %213 = vector.shape_cast %212 : vector<1x8x8xf32> to vector<8x8xf32>
    %214 = tpu.concatenate %207, %209, %211, %213 in 1 : vector<8x8xf32>, vector<8x8xf32>, vector<8x8xf32>, vector<8x8xf32> -> vector<8x32xf32>
    %215 = arith.truncf %214 : vector<8x32xf32> to vector<8x32xbf16>
    %216 = vector.extract_strided_slice %19 {offsets = [1, 0, 0], sizes = [1, 32, 32], strides = [1, 1, 1]} : vector<2x32x32xbf16> to vector<1x32x32xbf16>
    %217 = vector.shape_cast %216 : vector<1x32x32xbf16> to vector<32x32xbf16>
    %cst_53 = arith.constant dense<0.000000e+00> : vector<8x32xf32>
    %218 = tpu.matmul %215, %217, %cst_53 {dimension_numbers = #tpu.dot_dimension_numbers<[1], [0], [0], [1], [0, 0, 1, 1], [], []>} : vector<8x32xbf16>, vector<32x32xbf16>, vector<8x32xf32> -> vector<8x32xf32>
    %219 = arith.addf %119, %218 : vector<8x32xf32>
    %220 = vector.extract_strided_slice %21 {offsets = [1, 0], sizes = [1, 32], strides = [1, 1]} : vector<2x32xf32> to vector<1x32xf32>
    %221 = vector.broadcast %220 : vector<1x32xf32> to vector<8x32xf32>
    %222 = arith.addf %219, %221 : vector<8x32xf32>
    %223 = vector.extract_strided_slice %11 {offsets = [2, 0], sizes = [1, 32], strides = [1, 1]} : vector<3x32xf32> to vector<1x32xf32>
    %224 = vector.extract_strided_slice %13 {offsets = [2, 0], sizes = [1, 32], strides = [1, 1]} : vector<3x32xf32> to vector<1x32xf32>
    %cst_54 = arith.constant dense<0.000000e+00> : vector<8xf32>
    %225 = vector.multi_reduction <add>, %222, %cst_54 [1] : vector<8x32xf32> to vector<8xf32>
    %226 = vector.shape_cast %225 : vector<8xf32> to vector<8x1xf32>
    %cst_55 = arith.constant 3.200000e+01 : f32
    %227 = vector.broadcast %cst_55 : f32 to vector<8x1xf32>
    %228 = arith.divf %226, %227 : vector<8x1xf32>
    %229 = vector.broadcast %228 : vector<8x1xf32> to vector<8x32xf32>
    %230 = arith.subf %222, %229 : vector<8x32xf32>
    %231 = arith.mulf %230, %230 : vector<8x32xf32>
    %cst_56 = arith.constant dense<0.000000e+00> : vector<8xf32>
    %232 = vector.multi_reduction <add>, %231, %cst_56 [1] : vector<8x32xf32> to vector<8xf32>
    %233 = vector.shape_cast %232 : vector<8xf32> to vector<8x1xf32>
    %cst_57 = arith.constant 0.0322580636 : f32
    %234 = vector.broadcast %cst_57 : f32 to vector<8x1xf32>
    %235 = arith.mulf %233, %234 : vector<8x1xf32>
    %236 = math.sqrt %235 : vector<8x1xf32>
    %cst_58 = arith.constant 9.99999997E-7 : f32
    %237 = vector.broadcast %cst_58 : f32 to vector<8x1xf32>
    %238 = arith.addf %236, %237 : vector<8x1xf32>
    %239 = tpu.reciprocal %238 {approx = true} : vector<8x1xf32> -> vector<8x1xf32>
    %240 = vector.broadcast %223 : vector<1x32xf32> to vector<8x32xf32>
    %241 = arith.mulf %240, %230 : vector<8x32xf32>
    %242 = vector.broadcast %239 : vector<8x1xf32> to vector<8x32xf32>
    %243 = arith.mulf %241, %242 : vector<8x32xf32>
    %244 = vector.broadcast %224 : vector<1x32xf32> to vector<8x32xf32>
    %245 = arith.addf %243, %244 : vector<8x32xf32>
    %246 = arith.truncf %245 : vector<8x32xf32> to vector<8x32xbf16>
    %c0_59 = arith.constant 0 : index
    %c0_60 = arith.constant 0 : index
    %c0_61 = arith.constant 0 : index
    %247 = vector.load %arg12[%c0_59, %c0_60, %c0_61] : memref<1x32x64xbf16, #tpu.memory_space<vmem>>, vector<1x32x64xbf16>
    %248 = vector.shape_cast %247 : vector<1x32x64xbf16> to vector<32x64xbf16>
    %cst_62 = arith.constant dense<0.000000e+00> : vector<8x64xf32>
    %249 = tpu.matmul %246, %248, %cst_62 {dimension_numbers = #tpu.dot_dimension_numbers<[1], [0], [0], [1], [0, 0, 1, 1], [], []>} : vector<8x32xbf16>, vector<32x64xbf16>, vector<8x64xf32> -> vector<8x64xf32>
    %c0_63 = arith.constant 0 : index
    %c0_64 = arith.constant 0 : index
    %c0_65 = arith.constant 0 : index
    %250 = vector.load %arg13[%c0_63, %c0_64, %c0_65] : memref<1x1x64xf32, #tpu.memory_space<vmem>>, vector<1x1x64xf32>
    %251 = vector.shape_cast %250 : vector<1x1x64xf32> to vector<1x64xf32>
    %252 = vector.broadcast %251 : vector<1x64xf32> to vector<8x64xf32>
    %253 = arith.addf %249, %252 : vector<8x64xf32>
    %cst_66 = arith.constant 0.000000e+00 : f32
    %254 = vector.broadcast %cst_66 : f32 to vector<8x64xf32>
    %255 = arith.maximumf %253, %254 : vector<8x64xf32>
    %256 = arith.truncf %255 : vector<8x64xf32> to vector<8x64xbf16>
    %c0_67 = arith.constant 0 : index
    %c0_68 = arith.constant 0 : index
    %c0_69 = arith.constant 0 : index
    %257 = vector.load %arg14[%c0_67, %c0_68, %c0_69] : memref<1x64x32xbf16, #tpu.memory_space<vmem>>, vector<1x64x32xbf16>
    %258 = vector.shape_cast %257 : vector<1x64x32xbf16> to vector<64x32xbf16>
    %cst_70 = arith.constant dense<0.000000e+00> : vector<8x32xf32>
    %259 = tpu.matmul %256, %258, %cst_70 {dimension_numbers = #tpu.dot_dimension_numbers<[1], [0], [0], [1], [0, 0, 1, 1], [], []>} : vector<8x64xbf16>, vector<64x32xbf16>, vector<8x32xf32> -> vector<8x32xf32>
    %c0_71 = arith.constant 0 : index
    %c0_72 = arith.constant 0 : index
    %c0_73 = arith.constant 0 : index
    %260 = vector.load %arg15[%c0_71, %c0_72, %c0_73] : memref<1x1x32xf32, #tpu.memory_space<vmem>>, vector<1x1x32xf32>
    %261 = vector.shape_cast %260 : vector<1x1x32xf32> to vector<1x32xf32>
    %262 = vector.broadcast %261 : vector<1x32xf32> to vector<8x32xf32>
    %263 = arith.addf %259, %262 : vector<8x32xf32>
    %264 = arith.addf %222, %263 : vector<8x32xf32>
    %c0_74 = arith.constant 0 : index
    %c0_75 = arith.constant 0 : index
    %265 = vector.load %arg19[%c0_74, %c0_75] : memref<8x32xf32, #tpu.memory_space<vmem>>, vector<8x32xf32>
    tpu.vector_store %arg19[%c0_74, %c0_75], %264 {strides = array<i32>} : memref<8x32xf32, #tpu.memory_space<vmem>>, vector<8x32xf32>,
    %c1_i32 = arith.constant 1 : i32
    %266 = arith.cmpi eq, %arg1, %c1_i32 : i32
    %267 = arith.extui %266 : i1 to i32
    %c0_i32_76 = arith.constant 0 : i32
    %268 = arith.cmpi ne, %267, %c0_i32_76 : i32
    scf.if %268 {
      %c0_77 = arith.constant 0 : index
      %c0_78 = arith.constant 0 : index
      %269 = vector.load %arg16[%c0_77, %c0_78] : memref<1x32xf32, #tpu.memory_space<vmem>>, vector<1x32xf32>
      %c0_79 = arith.constant 0 : index
      %c0_80 = arith.constant 0 : index
      %270 = vector.load %arg17[%c0_79, %c0_80] : memref<1x32xf32, #tpu.memory_space<vmem>>, vector<1x32xf32>
      %cst_81 = arith.constant dense<0.000000e+00> : vector<8xf32>
      %271 = vector.multi_reduction <add>, %264, %cst_81 [1] : vector<8x32xf32> to vector<8xf32>
      %272 = vector.shape_cast %271 : vector<8xf32> to vector<8x1xf32>
      %cst_82 = arith.constant 3.200000e+01 : f32
      %273 = vector.broadcast %cst_82 : f32 to vector<8x1xf32>
      %274 = arith.divf %272, %273 : vector<8x1xf32>
      %275 = vector.broadcast %274 : vector<8x1xf32> to vector<8x32xf32>
      %276 = arith.subf %264, %275 : vector<8x32xf32>
      %277 = arith.mulf %276, %276 : vector<8x32xf32>
      %cst_83 = arith.constant dense<0.000000e+00> : vector<8xf32>
      %278 = vector.multi_reduction <add>, %277, %cst_83 [1] : vector<8x32xf32> to vector<8xf32>
      %279 = vector.shape_cast %278 : vector<8xf32> to vector<8x1xf32>
      %cst_84 = arith.constant 0.0322580636 : f32
      %280 = vector.broadcast %cst_84 : f32 to vector<8x1xf32>
      %281 = arith.mulf %279, %280 : vector<8x1xf32>
      %282 = math.sqrt %281 : vector<8x1xf32>
      %cst_85 = arith.constant 9.99999997E-7 : f32
      %283 = vector.broadcast %cst_85 : f32 to vector<8x1xf32>
      %284 = arith.addf %282, %283 : vector<8x1xf32>
      %285 = tpu.reciprocal %284 {approx = true} : vector<8x1xf32> -> vector<8x1xf32>
      %286 = vector.broadcast %269 : vector<1x32xf32> to vector<8x32xf32>
      %287 = arith.mulf %286, %276 : vector<8x32xf32>
      %288 = vector.broadcast %285 : vector<8x1xf32> to vector<8x32xf32>
      %289 = arith.mulf %287, %288 : vector<8x32xf32>
      %290 = vector.broadcast %270 : vector<1x32xf32> to vector<8x32xf32>
      %291 = arith.addf %289, %290 : vector<8x32xf32>
      %c0_86 = arith.constant 0 : index
      %c0_87 = arith.constant 0 : index
      %c0_88 = arith.constant 0 : index
      %292 = vector.load %arg18[%c0_86, %c0_87, %c0_88] : memref<1x8x32xf32, #tpu.memory_space<vmem>>, vector<1x8x32xf32>
      %293 = vector.shape_cast %292 : vector<1x8x32xf32> to vector<8x32xf32>
      %294 = vector.shape_cast %291 : vector<8x32xf32> to vector<1x8x32xf32>
      tpu.vector_store %arg18[%c0_86, %c0_87, %c0_88], %294 {strides = array<i32>} : memref<1x8x32xf32, #tpu.memory_space<vmem>>, vector<1x8x32xf32>,
    } else {
    }
    return
  }
  func.func @transform_0(%arg0: i32, %arg1: i32) -> (i32, i32, i32) {
    %c0_i32 = arith.constant 0 : i32
    %c0_i32_0 = arith.constant 0 : i32
    %c0_i32_1 = arith.constant 0 : i32
    return %arg0, %c0_i32, %c0_i32_0 : i32, i32, i32
  }
  func.func @transform_1(%arg0: i32, %arg1: i32) -> (i32, i32, i32) {
    %c0_i32 = arith.constant 0 : i32
    %c0_i32_0 = arith.constant 0 : i32
    %c0_i32_1 = arith.constant 0 : i32
    return %arg0, %c0_i32, %c0_i32_0 : i32, i32, i32
  }
  func.func @transform_2(%arg0: i32, %arg1: i32) -> (i32, i32, i32) {
    %c0_i32 = arith.constant 0 : i32
    %c0_i32_0 = arith.constant 0 : i32
    %c0_i32_1 = arith.constant 0 : i32
    return %arg0, %c0_i32, %c0_i32_0 : i32, i32, i32
  }
  func.func @transform_3(%arg0: i32, %arg1: i32) -> (i32, i32) {
    %c0_i32 = arith.constant 0 : i32
    %c0_i32_0 = arith.constant 0 : i32
    %c0_i32_1 = arith.constant 0 : i32
    return %c0_i32, %c0_i32_0 : i32, i32
  }
  func.func @transform_4(%arg0: i32, %arg1: i32) -> (i32, i32, i32) {
    %c0_i32 = arith.constant 0 : i32
    %c0_i32_0 = arith.constant 0 : i32
    %c0_i32_1 = arith.constant 0 : i32
    return %arg1, %c0_i32, %c0_i32_0 : i32, i32, i32
  }
  func.func @transform_5(%arg0: i32, %arg1: i32) -> (i32, i32, i32) {
    %c0_i32 = arith.constant 0 : i32
    %c0_i32_0 = arith.constant 0 : i32
    %c0_i32_1 = arith.constant 0 : i32
    return %arg1, %c0_i32, %c0_i32_0 : i32, i32, i32
  }
  func.func @transform_6(%arg0: i32, %arg1: i32) -> (i32, i32, i32, i32) {
    %c0_i32 = arith.constant 0 : i32
    %c0_i32_0 = arith.constant 0 : i32
    %c0_i32_1 = arith.constant 0 : i32
    %c0_i32_2 = arith.constant 0 : i32
    return %arg1, %c0_i32, %c0_i32_0, %c0_i32_1 : i32, i32, i32, i32
  }
  func.func @transform_7(%arg0: i32, %arg1: i32) -> (i32, i32, i32) {
    %c0_i32 = arith.constant 0 : i32
    %c0_i32_0 = arith.constant 0 : i32
    %c0_i32_1 = arith.constant 0 : i32
    return %arg1, %c0_i32, %c0_i32_0 : i32, i32, i32
  }
  func.func @transform_8(%arg0: i32, %arg1: i32) -> (i32, i32, i32, i32) {
    %c0_i32 = arith.constant 0 : i32
    %c0_i32_0 = arith.constant 0 : i32
    %c0_i32_1 = arith.constant 0 : i32
    %c0_i32_2 = arith.constant 0 : i32
    return %arg1, %c0_i32, %c0_i32_0, %c0_i32_1 : i32, i32, i32, i32
  }
  func.func @transform_9(%arg0: i32, %arg1: i32) -> (i32, i32, i32) {
    %c0_i32 = arith.constant 0 : i32
    %c0_i32_0 = arith.constant 0 : i32
    %c0_i32_1 = arith.constant 0 : i32
    return %arg1, %c0_i32, %c0_i32_0 : i32, i32, i32
  }
  func.func @transform_10(%arg0: i32, %arg1: i32) -> (i32, i32, i32) {
    %c0_i32 = arith.constant 0 : i32
    %c0_i32_0 = arith.constant 0 : i32
    %c0_i32_1 = arith.constant 0 : i32
    return %arg1, %c0_i32, %c0_i32_0 : i32, i32, i32
  }
  func.func @transform_11(%arg0: i32, %arg1: i32) -> (i32, i32, i32) {
    %c0_i32 = arith.constant 0 : i32
    %c0_i32_0 = arith.constant 0 : i32
    %c0_i32_1 = arith.constant 0 : i32
    return %arg1, %c0_i32, %c0_i32_0 : i32, i32, i32
  }
  func.func @transform_12(%arg0: i32, %arg1: i32) -> (i32, i32, i32) {
    %c0_i32 = arith.constant 0 : i32
    %c0_i32_0 = arith.constant 0 : i32
    %c0_i32_1 = arith.constant 0 : i32
    return %arg1, %c0_i32, %c0_i32_0 : i32, i32, i32
  }
  func.func @transform_13(%arg0: i32, %arg1: i32) -> (i32, i32, i32) {
    %c0_i32 = arith.constant 0 : i32
    %c0_i32_0 = arith.constant 0 : i32
    %c0_i32_1 = arith.constant 0 : i32
    return %arg1, %c0_i32, %c0_i32_0 : i32, i32, i32
  }
  func.func @transform_14(%arg0: i32, %arg1: i32) -> (i32, i32) {
    %c0_i32 = arith.constant 0 : i32
    %c0_i32_0 = arith.constant 0 : i32
    %c0_i32_1 = arith.constant 0 : i32
    return %c0_i32, %c0_i32_0 : i32, i32
  }
  func.func @transform_15(%arg0: i32, %arg1: i32) -> (i32, i32) {
    %c0_i32 = arith.constant 0 : i32
    %c0_i32_0 = arith.constant 0 : i32
    %c0_i32_1 = arith.constant 0 : i32
    return %c0_i32, %c0_i32_0 : i32, i32
  }
  func.func @transform_16(%arg0: i32, %arg1: i32) -> (i32, i32, i32) {
    %c0_i32 = arith.constant 0 : i32
    %c0_i32_0 = arith.constant 0 : i32
    %c0_i32_1 = arith.constant 0 : i32
    return %arg0, %c0_i32, %c0_i32_0 : i32, i32, i32
  }
}

</mosaic_0001>

<llo_original>
// kernel: tpu_custom_call.1
$region0: #{tpu_custom_call.1}
  #allocation0 [shape = 'u32[]', space=smem, size = 0x4, offset = 0x4, fixed_abs, tag = 'smem constant byte address 0x4 - core index']
  #allocation1 [shape = 'u32[144,128]{1,0:T(1,128)}', space=vmem, size = 0x12000, scoped, tag = 'internal scratch']
  #allocation2 [shape = 'f32[8,32]{1,0:T(8,128)}', space=vmem, size = 0x1000, scoped, tag = 'scratch operand']
  %s0 = inlined_call_operand.hbm [shape: f32[2,8,32], index: 0, kind: input, shape index: {}]
  %s1 = inlined_call_operand.hbm [shape: f32[2,8,32], index: 1, kind: input, shape index: {}]
  %s2 = inlined_call_operand.hbm [shape: f32[2,1,8], index: 2, kind: input, shape index: {}]
  %s3 = inlined_call_operand.hbm [shape: f32[8,8], index: 3, kind: input, shape index: {}]
  %s4 = inlined_call_operand.vmem [shape: f32[2,3,32], index: 4, kind: input, shape index: {}]
  %s5 = inlined_call_operand.vmem [shape: f32[2,3,32], index: 5, kind: input, shape index: {}]
  %s6 = inlined_call_operand.vmem [shape: bf16[2,2,32,96], index: 6, kind: input, shape index: {}]
  %s7 = inlined_call_operand.vmem [shape: f32[2,2,96], index: 7, kind: input, shape index: {}]
  %s8 = inlined_call_operand.vmem [shape: bf16[2,2,32,32], index: 8, kind: input, shape index: {}]
  %s9 = inlined_call_operand.vmem [shape: f32[2,2,32], index: 9, kind: input, shape index: {}]
  %s10 = inlined_call_operand.hbm [shape: bf16[2,32,64], index: 10, kind: input, shape index: {}]
  %s11 = inlined_call_operand.vmem [shape: f32[2,1,64], index: 11, kind: input, shape index: {}]
  %s12 = inlined_call_operand.vmem [shape: bf16[2,64,32], index: 12, kind: input, shape index: {}]
  %s13 = inlined_call_operand.vmem [shape: f32[2,1,32], index: 13, kind: input, shape index: {}]
  %s14 = inlined_call_operand.vmem [shape: f32[1,32], index: 14, kind: input, shape index: {}]
  %s15 = inlined_call_operand.vmem [shape: f32[1,32], index: 15, kind: input, shape index: {}]
  %s16 = inlined_call_operand.hbm [shape: f32[2,8,32], index: 16, kind: output, shape index: {}]
  %s17 = sld [smem:[#allocation0]]
  $region125: #{tpu_custom_call.1} parent=0
    _
  %s19 = ssub.s32 1, %s17
  %s20 = scalar_select 0, %s19, %s17
  $region1: #{tpu_custom_call.1} parent=0
    #allocation3 [shape = 'u8[8192]{0}', space=vmem, size = 0x2000, scoped, tag = 'input window, operand 0']
    #allocation4 [shape = 's32[2]{0}', space=sflag, size = 0x8, scoped, tag = 'scoped memory for tpu_custom_call.1']
    #allocation5 [shape = 's32[2]{0}', space=sflag, size = 0x8, scoped, tag = 'scoped memory for tpu_custom_call.1']
    #allocation6 [shape = 'u8[8192]{0}', space=vmem, size = 0x2000, scoped, tag = 'input window, operand 1']
    #allocation7 [shape = 's32[2]{0}', space=sflag, size = 0x8, scoped, tag = 'scoped memory for tpu_custom_call.1']
    #allocation8 [shape = 'u8[1024]{0}', space=vmem, size = 0x400, scoped, tag = 'input window, operand 2']
    #allocation9 [shape = 'u8[4096]{0}', space=vmem, size = 0x1000, scoped, tag = 'input window, operand 3, single buffered']
    #allocation10 [shape = 's32[1]{0}', space=sflag, size = 0x4, scoped, tag = 'scoped memory for tpu_custom_call.1']
    #allocation11 [shape = 'u8[16384]{0}', space=vmem, size = 0x4000, scoped, tag = 'input window, operand 10']
    #allocation12 [shape = 'u8[8192]{0}', space=vmem, size = 0x2000, scoped, tag = 'output window, operand 0']
    %21 = vsyncpa [#allocation4], 0
    %s22 = scalar_lea.sflag [#allocation4], 1
    %23 = vsyncpa %s22, 0
    %24 = vsyncpa [#allocation7], 0
    %s25 = scalar_lea.sflag [#allocation7], 1
    %26 = vsyncpa %s25, 0
    %27 = vsyncpa [#allocation10], 0
    %28 = vsyncpa [#allocation5], 0
    %s29 = scalar_lea.sflag [#allocation5], 1
    %30 = vsyncpa %s29, 0
    loop: start=0, step=1, limit=6
    $region2: #{tpu_custom_call.1} parent=1 // loop_pre_header
      _
    $region3: #{tpu_custom_call.1} parent=1 // loop_header
      %s32 = sphi 0, %s36
      %p33 = scmp.ge.s32.totalorder %s32, 6
      %s39 = sphi 0, %s51
      %s40 = sphi 0, %s47
      %s41 = sphi 0, %s39
      %s42 = sphi 0, %s40
      %s43 = sphi 0, %s41
      %s44 = sphi 0, %s42
      %s54 = sphi 0, %s56
      %s57 = sphi 0, %s54
      %s58 = sphi 0, %s57
      %s74 = sphi 0, %s58
      %s80 = sphi 0, %s82
      %s83 = sphi 0, %s80
      %s84 = sphi 0, %s83
      %s100 = sphi 0, %s84
      %s106 = sphi 0, %s108
      %s109 = sphi 0, %s106
      %s110 = sphi 0, %s109
      %s126 = sphi 0, %s110
      %s130 = sphi 0, %s130
      %s132 = sphi 0, %s130
      %s133 = sphi 0, %s132
      %s147 = sphi 0, %s133
      %s153 = sphi 0, %s155
      %s156 = sphi 0, %s153
      %s157 = sphi 0, %s156
      %s173 = sphi 0, %s157
      %s179 = sphi 0, %s181
      %s182 = sphi 0, %s179
      %s183 = sphi 0, %s182
      %s199 = sphi 0, %s183
      %s205 = sphi 0, %s207
      %s208 = sphi 0, %s205
      %s209 = sphi 0, %s208
      %s225 = sphi 0, %s209
      %s231 = sphi 0, %s233
      %s234 = sphi 0, %s231
      %s235 = sphi 0, %s234
      %s251 = sphi 0, %s235
      %s257 = sphi 0, %s259
      %s260 = sphi 0, %s257
      %s261 = sphi 0, %s260
      %s277 = sphi 0, %s261
      %s283 = sphi 0, %s285
      %s286 = sphi 0, %s283
      %s287 = sphi 0, %s286
      %s303 = sphi 0, %s287
      %s309 = sphi 0, %s311
      %s312 = sphi 0, %s309
      %s313 = sphi 0, %s312
      %s329 = sphi 0, %s313
      %s335 = sphi 0, %s337
      %s338 = sphi 0, %s335
      %s339 = sphi 0, %s338
      %s355 = sphi 0, %s339
      %s361 = sphi 0, %s363
      %s364 = sphi 0, %s361
      %s365 = sphi 0, %s364
      %s381 = sphi 0, %s365
      %s387 = sphi 0, %s389
      %s390 = sphi 0, %s387
      %s391 = sphi 0, %s390
      %s407 = sphi 0, %s391
      %s411 = sphi 0, %s411
      %s413 = sphi 0, %s411
      %s414 = sphi 0, %s413
      %s428 = sphi 0, %s414
      %s432 = sphi 0, %s432
      %s434 = sphi 0, %s432
      %s435 = sphi 0, %s434
      %s449 = sphi 0, %s435
      %s455 = sphi 0, %s457
      %s458 = sphi 0, %s455
      %s459 = sphi 0, %s458
      %s475 = sphi 0, %s459
    $region4: #{tpu_custom_call.1} parent=1 // loop_header_branch
      %35 = sbr.rel (%p33) target = $region8
    $region5: #{tpu_custom_call.1} parent=1 // loop_body
      %s37 = ssub.s32 %s32, 1
      %s38 = ssub.s32 %s32, 2
      %s45 = sadd.s32 1, %s40
      %p46 = scmp.ge.s32.totalorder %s45, 2
      %s47 = scalar_select %p46, 0, %s45
      %s48 = sadd.s32 1, %s39
      %s49 = scalar_select %p46, %s48, %s39
      %p50 = scmp.ge.s32.totalorder %s49, 2
      %s51 = scalar_select %p50, 0, %s49
      %s52 = ssub.s32 %s39, %s51
      %p53 = scmp.eq.s32.totalorder %s52, 0
      %s55 = sadd.s32 %s54, 1
      %s56 = scalar_select %p53, %s54, %s55
      %p59 = pneg %p53
      %p60 = scmp.eq.s32.totalorder %s32, 3
      %p61 = por %p59, %p60
      %p62 = scmp.ne.s32.totalorder %s54, %s57
      %p63 = scmp.eq.s32.totalorder %s32, 0
      %p64 = por %p62, %p63
      %p65 = scmp.ne.s32.totalorder %s54, %s57
      %p66 = scmp.eq.s32.totalorder %s37, 3
      %p67 = por %p65, %p66
      %p68 = scmp.ne.s32.totalorder %s57, %s58
      %p69 = scmp.eq.s32.totalorder %s37, 0
      %p70 = por %p68, %p69
      %p71 = scmp.ne.s32.totalorder %s57, %s58
      %p72 = scmp.eq.s32.totalorder %s38, 3
      %p73 = por %p71, %p72
      %p75 = scmp.ne.s32.totalorder %s58, %s74
      %p76 = scmp.eq.s32.totalorder %s38, 0
      %p77 = por %p75, %p76
      %s78 = ssub.s32 %s39, %s51
      %p79 = scmp.eq.s32.totalorder %s78, 0
      %s81 = sadd.s32 %s80, 1
      %s82 = scalar_select %p79, %s80, %s81
      %p85 = pneg %p79
      %p86 = scmp.eq.s32.totalorder %s32, 3
      %p87 = por %p85, %p86
      %p88 = scmp.ne.s32.totalorder %s80, %s83
      %p89 = scmp.eq.s32.totalorder %s32, 0
      %p90 = por %p88, %p89
      %p91 = scmp.ne.s32.totalorder %s80, %s83
      %p92 = scmp.eq.s32.totalorder %s37, 3
      %p93 = por %p91, %p92
      %p94 = scmp.ne.s32.totalorder %s83, %s84
      %p95 = scmp.eq.s32.totalorder %s37, 0
      %p96 = por %p94, %p95
      %p97 = scmp.ne.s32.totalorder %s83, %s84
      %p98 = scmp.eq.s32.totalorder %s38, 3
      %p99 = por %p97, %p98
      %p101 = scmp.ne.s32.totalorder %s84, %s100
      %p102 = scmp.eq.s32.totalorder %s38, 0
      %p103 = por %p101, %p102
      %s104 = ssub.s32 %s39, %s51
      %p105 = scmp.eq.s32.totalorder %s104, 0
      %s107 = sadd.s32 %s106, 1
      %s108 = scalar_select %p105, %s106, %s107
      %p111 = pneg %p105
      %p112 = scmp.eq.s32.totalorder %s32, 3
      %p113 = por %p111, %p112
      %p114 = scmp.ne.s32.totalorder %s106, %s109
      %p115 = scmp.eq.s32.totalorder %s32, 0
      %p116 = por %p114, %p115
      %p117 = scmp.ne.s32.totalorder %s106, %s109
      %p118 = scmp.eq.s32.totalorder %s37, 3
      %p119 = por %p117, %p118
      %p120 = scmp.ne.s32.totalorder %s109, %s110
      %p121 = scmp.eq.s32.totalorder %s37, 0
      %p122 = por %p120, %p121
      %p123 = scmp.ne.s32.totalorder %s109, %s110
      %p124 = scmp.eq.s32.totalorder %s38, 3
      %p125 = por %p123, %p124
      %p127 = scmp.ne.s32.totalorder %s110, %s126
      %p128 = scmp.eq.s32.totalorder %s38, 0
      %p129 = por %p127, %p128
      %s131 = sadd.s32 %s130, 1
      %p134 = scmp.eq.s32.totalorder %s32, 3
      %p135 = scmp.ne.s32.totalorder %s130, %s132
      %p136 = scmp.eq.s32.totalorder %s32, 0
      %p137 = por %p135, %p136
      %p138 = scmp.ne.s32.totalorder %s130, %s132
      %p139 = scmp.eq.s32.totalorder %s37, 3
      %p140 = por %p138, %p139
      %p141 = scmp.ne.s32.totalorder %s132, %s133
      %p142 = scmp.eq.s32.totalorder %s37, 0
      %p143 = por %p141, %p142
      %p144 = scmp.ne.s32.totalorder %s132, %s133
      %p145 = scmp.eq.s32.totalorder %s38, 3
      %p146 = por %p144, %p145
      %p148 = scmp.ne.s32.totalorder %s133, %s147
      %p149 = scmp.eq.s32.totalorder %s38, 0
      %p150 = por %p148, %p149
      %s151 = ssub.s32 %s40, %s47
      %p152 = scmp.eq.s32.totalorder %s151, 0
      %s154 = sadd.s32 %s153, 1
      %s155 = scalar_select %p152, %s153, %s154
      %p158 = pneg %p152
      %p159 = scmp.eq.s32.totalorder %s32, 3
      %p160 = por %p158, %p159
      %p161 = scmp.ne.s32.totalorder %s153, %s156
      %p162 = scmp.eq.s32.totalorder %s32, 0
      %p163 = por %p161, %p162
      %p164 = scmp.ne.s32.totalorder %s153, %s156
      %p165 = scmp.eq.s32.totalorder %s37, 3
      %p166 = por %p164, %p165
      %p167 = scmp.ne.s32.totalorder %s156, %s157
      %p168 = scmp.eq.s32.totalorder %s37, 0
      %p169 = por %p167, %p168
      %p170 = scmp.ne.s32.totalorder %s156, %s157
      %p171 = scmp.eq.s32.totalorder %s38, 3
      %p172 = por %p170, %p171
      %p174 = scmp.ne.s32.totalorder %s157, %s173
      %p175 = scmp.eq.s32.totalorder %s38, 0
      %p176 = por %p174, %p175
      %s177 = ssub.s32 %s40, %s47
      %p178 = scmp.eq.s32.totalorder %s177, 0
      %s180 = sadd.s32 %s179, 1
      %s181 = scalar_select %p178, %s179, %s180
      %p184 = pneg %p178
      %p185 = scmp.eq.s32.totalorder %s32, 3
      %p186 = por %p184, %p185
      %p187 = scmp.ne.s32.totalorder %s179, %s182
      %p188 = scmp.eq.s32.totalorder %s32, 0
      %p189 = por %p187, %p188
      %p190 = scmp.ne.s32.totalorder %s179, %s182
      %p191 = scmp.eq.s32.totalorder %s37, 3
      %p192 = por %p190, %p191
      %p193 = scmp.ne.s32.totalorder %s182, %s183
      %p194 = scmp.eq.s32.totalorder %s37, 0
      %p195 = por %p193, %p194
      %p196 = scmp.ne.s32.totalorder %s182, %s183
      %p197 = scmp.eq.s32.totalorder %s38, 3
      %p198 = por %p196, %p197
      %p200 = scmp.ne.s32.totalorder %s183, %s199
      %p201 = scmp.eq.s32.totalorder %s38, 0
      %p202 = por %p200, %p201
      %s203 = ssub.s32 %s40, %s47
      %p204 = scmp.eq.s32.totalorder %s203, 0
      %s206 = sadd.s32 %s205, 1
      %s207 = scalar_select %p204, %s205, %s206
      %p210 = pneg %p204
      %p211 = scmp.eq.s32.totalorder %s32, 3
      %p212 = por %p210, %p211
      %p213 = scmp.ne.s32.totalorder %s205, %s208
      %p214 = scmp.eq.s32.totalorder %s32, 0
      %p215 = por %p213, %p214
      %p216 = scmp.ne.s32.totalorder %s205, %s208
      %p217 = scmp.eq.s32.totalorder %s37, 3
      %p218 = por %p216, %p217
      %p219 = scmp.ne.s32.totalorder %s208, %s209
      %p220 = scmp.eq.s32.totalorder %s37, 0
      %p221 = por %p219, %p220
      %p222 = scmp.ne.s32.totalorder %s208, %s209
      %p223 = scmp.eq.s32.totalorder %s38, 3
      %p224 = por %p222, %p223
      %p226 = scmp.ne.s32.totalorder %s209, %s225
      %p227 = scmp.eq.s32.totalorder %s38, 0
      %p228 = por %p226, %p227
      %s229 = ssub.s32 %s40, %s47
      %p230 = scmp.eq.s32.totalorder %s229, 0
      %s232 = sadd.s32 %s231, 1
      %s233 = scalar_select %p230, %s231, %s232
      %p236 = pneg %p230
      %p237 = scmp.eq.s32.totalorder %s32, 3
      %p238 = por %p236, %p237
      %p239 = scmp.ne.s32.totalorder %s231, %s234
      %p240 = scmp.eq.s32.totalorder %s32, 0
      %p241 = por %p239, %p240
      %p242 = scmp.ne.s32.totalorder %s231, %s234
      %p243 = scmp.eq.s32.totalorder %s37, 3
      %p244 = por %p242, %p243
      %p245 = scmp.ne.s32.totalorder %s234, %s235
      %p246 = scmp.eq.s32.totalorder %s37, 0
      %p247 = por %p245, %p246
      %p248 = scmp.ne.s32.totalorder %s234, %s235
      %p249 = scmp.eq.s32.totalorder %s38, 3
      %p250 = por %p248, %p249
      %p252 = scmp.ne.s32.totalorder %s235, %s251
      %p253 = scmp.eq.s32.totalorder %s38, 0
      %p254 = por %p252, %p253
      %s255 = ssub.s32 %s40, %s47
      %p256 = scmp.eq.s32.totalorder %s255, 0
      %s258 = sadd.s32 %s257, 1
      %s259 = scalar_select %p256, %s257, %s258
      %p262 = pneg %p256
      %p263 = scmp.eq.s32.totalorder %s32, 3
      %p264 = por %p262, %p263
      %p265 = scmp.ne.s32.totalorder %s257, %s260
      %p266 = scmp.eq.s32.totalorder %s32, 0
      %p267 = por %p265, %p266
      %p268 = scmp.ne.s32.totalorder %s257, %s260
      %p269 = scmp.eq.s32.totalorder %s37, 3
      %p270 = por %p268, %p269
      %p271 = scmp.ne.s32.totalorder %s260, %s261
      %p272 = scmp.eq.s32.totalorder %s37, 0
      %p273 = por %p271, %p272
      %p274 = scmp.ne.s32.totalorder %s260, %s261
      %p275 = scmp.eq.s32.totalorder %s38, 3
      %p276 = por %p274, %p275
      %p278 = scmp.ne.s32.totalorder %s261, %s277
      %p279 = scmp.eq.s32.totalorder %s38, 0
      %p280 = por %p278, %p279
      %s281 = ssub.s32 %s40, %s47
      %p282 = scmp.eq.s32.totalorder %s281, 0
      %s284 = sadd.s32 %s283, 1
      %s285 = scalar_select %p282, %s283, %s284
      %p288 = pneg %p282
      %p289 = scmp.eq.s32.totalorder %s32, 3
      %p290 = por %p288, %p289
      %p291 = scmp.ne.s32.totalorder %s283, %s286
      %p292 = scmp.eq.s32.totalorder %s32, 0
      %p293 = por %p291, %p292
      %p294 = scmp.ne.s32.totalorder %s283, %s286
      %p295 = scmp.eq.s32.totalorder %s37, 3
      %p296 = por %p294, %p295
      %p297 = scmp.ne.s32.totalorder %s286, %s287
      %p298 = scmp.eq.s32.totalorder %s37, 0
      %p299 = por %p297, %p298
      %p300 = scmp.ne.s32.totalorder %s286, %s287
      %p301 = scmp.eq.s32.totalorder %s38, 3
      %p302 = por %p300, %p301
      %p304 = scmp.ne.s32.totalorder %s287, %s303
      %p305 = scmp.eq.s32.totalorder %s38, 0
      %p306 = por %p304, %p305
      %s307 = ssub.s32 %s40, %s47
      %p308 = scmp.eq.s32.totalorder %s307, 0
      %s310 = sadd.s32 %s309, 1
      %s311 = scalar_select %p308, %s309, %s310
      %p314 = pneg %p308
      %p315 = scmp.eq.s32.totalorder %s32, 3
      %p316 = por %p314, %p315
      %p317 = scmp.ne.s32.totalorder %s309, %s312
      %p318 = scmp.eq.s32.totalorder %s32, 0
      %p319 = por %p317, %p318
      %p320 = scmp.ne.s32.totalorder %s309, %s312
      %p321 = scmp.eq.s32.totalorder %s37, 3
      %p322 = por %p320, %p321
      %p323 = scmp.ne.s32.totalorder %s312, %s313
      %p324 = scmp.eq.s32.totalorder %s37, 0
      %p325 = por %p323, %p324
      %p326 = scmp.ne.s32.totalorder %s312, %s313
      %p327 = scmp.eq.s32.totalorder %s38, 3
      %p328 = por %p326, %p327
      %p330 = scmp.ne.s32.totalorder %s313, %s329
      %p331 = scmp.eq.s32.totalorder %s38, 0
      %p332 = por %p330, %p331
      %s333 = ssub.s32 %s40, %s47
      %p334 = scmp.eq.s32.totalorder %s333, 0
      %s336 = sadd.s32 %s335, 1
      %s337 = scalar_select %p334, %s335, %s336
      %p340 = pneg %p334
      %p341 = scmp.eq.s32.totalorder %s32, 3
      %p342 = por %p340, %p341
      %p343 = scmp.ne.s32.totalorder %s335, %s338
      %p344 = scmp.eq.s32.totalorder %s32, 0
      %p345 = por %p343, %p344
      %p346 = scmp.ne.s32.totalorder %s335, %s338
      %p347 = scmp.eq.s32.totalorder %s37, 3
      %p348 = por %p346, %p347
      %p349 = scmp.ne.s32.totalorder %s338, %s339
      %p350 = scmp.eq.s32.totalorder %s37, 0
      %p351 = por %p349, %p350
      %p352 = scmp.ne.s32.totalorder %s338, %s339
      %p353 = scmp.eq.s32.totalorder %s38, 3
      %p354 = por %p352, %p353
      %p356 = scmp.ne.s32.totalorder %s339, %s355
      %p357 = scmp.eq.s32.totalorder %s38, 0
      %p358 = por %p356, %p357
      %s359 = ssub.s32 %s40, %s47
      %p360 = scmp.eq.s32.totalorder %s359, 0
      %s362 = sadd.s32 %s361, 1
      %s363 = scalar_select %p360, %s361, %s362
      %p366 = pneg %p360
      %p367 = scmp.eq.s32.totalorder %s32, 3
      %p368 = por %p366, %p367
      %p369 = scmp.ne.s32.totalorder %s361, %s364
      %p370 = scmp.eq.s32.totalorder %s32, 0
      %p371 = por %p369, %p370
      %p372 = scmp.ne.s32.totalorder %s361, %s364
      %p373 = scmp.eq.s32.totalorder %s37, 3
      %p374 = por %p372, %p373
      %p375 = scmp.ne.s32.totalorder %s364, %s365
      %p376 = scmp.eq.s32.totalorder %s37, 0
      %p377 = por %p375, %p376
      %p378 = scmp.ne.s32.totalorder %s364, %s365
      %p379 = scmp.eq.s32.totalorder %s38, 3
      %p380 = por %p378, %p379
      %p382 = scmp.ne.s32.totalorder %s365, %s381
      %p383 = scmp.eq.s32.totalorder %s38, 0
      %p384 = por %p382, %p383
      %s385 = ssub.s32 %s40, %s47
      %p386 = scmp.eq.s32.totalorder %s385, 0
      %s388 = sadd.s32 %s387, 1
      %s389 = scalar_select %p386, %s387, %s388
      %p392 = pneg %p386
      %p393 = scmp.eq.s32.totalorder %s32, 3
      %p394 = por %p392, %p393
      %p395 = scmp.ne.s32.totalorder %s387, %s390
      %p396 = scmp.eq.s32.totalorder %s32, 0
      %p397 = por %p395, %p396
      %p398 = scmp.ne.s32.totalorder %s387, %s390
      %p399 = scmp.eq.s32.totalorder %s37, 3
      %p400 = por %p398, %p399
      %p401 = scmp.ne.s32.totalorder %s390, %s391
      %p402 = scmp.eq.s32.totalorder %s37, 0
      %p403 = por %p401, %p402
      %p404 = scmp.ne.s32.totalorder %s390, %s391
      %p405 = scmp.eq.s32.totalorder %s38, 3
      %p406 = por %p404, %p405
      %p408 = scmp.ne.s32.totalorder %s391, %s407
      %p409 = scmp.eq.s32.totalorder %s38, 0
      %p410 = por %p408, %p409
      %s412 = sadd.s32 %s411, 1
      %p415 = scmp.eq.s32.totalorder %s32, 3
      %p416 = scmp.ne.s32.totalorder %s411, %s413
      %p417 = scmp.eq.s32.totalorder %s32, 0
      %p418 = por %p416, %p417
      %p419 = scmp.ne.s32.totalorder %s411, %s413
      %p420 = scmp.eq.s32.totalorder %s37, 3
      %p421 = por %p419, %p420
      %p422 = scmp.ne.s32.totalorder %s413, %s414
      %p423 = scmp.eq.s32.totalorder %s37, 0
      %p424 = por %p422, %p423
      %p425 = scmp.ne.s32.totalorder %s413, %s414
      %p426 = scmp.eq.s32.totalorder %s38, 3
      %p427 = por %p425, %p426
      %p429 = scmp.ne.s32.totalorder %s414, %s428
      %p430 = scmp.eq.s32.totalorder %s38, 0
      %p431 = por %p429, %p430
      %s433 = sadd.s32 %s432, 1
      %p436 = scmp.eq.s32.totalorder %s32, 3
      %p437 = scmp.ne.s32.totalorder %s432, %s434
      %p438 = scmp.eq.s32.totalorder %s32, 0
      %p439 = por %p437, %p438
      %p440 = scmp.ne.s32.totalorder %s432, %s434
      %p441 = scmp.eq.s32.totalorder %s37, 3
      %p442 = por %p440, %p441
      %p443 = scmp.ne.s32.totalorder %s434, %s435
      %p444 = scmp.eq.s32.totalorder %s37, 0
      %p445 = por %p443, %p444
      %p446 = scmp.ne.s32.totalorder %s434, %s435
      %p447 = scmp.eq.s32.totalorder %s38, 3
      %p448 = por %p446, %p447
      %p450 = scmp.ne.s32.totalorder %s435, %s449
      %p451 = scmp.eq.s32.totalorder %s38, 0
      %p452 = por %p450, %p451
      %s453 = ssub.s32 %s39, %s51
      %p454 = scmp.eq.s32.totalorder %s453, 0
      %s456 = sadd.s32 %s455, 1
      %s457 = scalar_select %p454, %s455, %s456
      %p460 = pneg %p454
      %p461 = scmp.eq.s32.totalorder %s32, 3
      %p462 = por %p460, %p461
      %p463 = scmp.ne.s32.totalorder %s455, %s458
      %p464 = scmp.eq.s32.totalorder %s32, 0
      %p465 = por %p463, %p464
      %p466 = scmp.ne.s32.totalorder %s455, %s458
      %p467 = scmp.eq.s32.totalorder %s37, 3
      %p468 = por %p466, %p467
      %p469 = scmp.ne.s32.totalorder %s458, %s459
      %p470 = scmp.eq.s32.totalorder %s37, 0
      %p471 = por %p469, %p470
      %p472 = scmp.ne.s32.totalorder %s458, %s459
      %p473 = scmp.eq.s32.totalorder %s38, 3
      %p474 = por %p472, %p473
      %p476 = scmp.ne.s32.totalorder %s459, %s475
      %p477 = scmp.eq.s32.totalorder %s38, 0
      %p478 = por %p476, %p477
      %p479 = scmp.le.s32.totalorder 1, %s32
      %p480 = scmp.lt.s32.totalorder %s32, 5
      %p481 = pnand %p479, %p480
      %p482 = pneg %p481
      // Predicated region
      $region9: #{tpu_custom_call.1} parent=5 // pred_check
        _
      $region10: #{tpu_custom_call.1} parent=5 // pred_check_branch
        %484 = sbr.rel (%p481) target = $region12
      $region11: #{tpu_custom_call.1} parent=5 // pred_region
        %s485 = ssub.s32 %s32, 1
        // Predicated region
        $region13: #{tpu_custom_call.1} parent=11 // pred_check
          %p486 = pneg %p143
        $region14: #{tpu_custom_call.1} parent=11 // pred_check_branch
          %488 = sbr.rel (%p486) target = $region16
        $region15: #{tpu_custom_call.1} parent=11 // pred_region
          %s490 = ssub.s32 128, 128
          %491 = vsyncadd [#allocation10], %s490
          %s493 = sshll.u32 [#allocation9], 4
          %s494 = int_to_ptr.vmem [resolvable:$true] %s493
          %496 = dma.hbm_to_vmem [thread:$0]  %s3, 128, %s494, [#allocation10]
        $region16: #{tpu_custom_call.1} parent=11 // pred_fallthru
          _
        // Predicated region
        $region17: #{tpu_custom_call.1} parent=11 // pred_check
          %p497 = pneg %p424
        $region18: #{tpu_custom_call.1} parent=11 // pred_check_branch
          %499 = sbr.rel (%p497) target = $region20
        $region19: #{tpu_custom_call.1} parent=11 // pred_region
          _
        $region20: #{tpu_custom_call.1} parent=11 // pred_fallthru
          _
        // Predicated region
        $region21: #{tpu_custom_call.1} parent=11 // pred_check
          %p500 = pneg %p445
        $region22: #{tpu_custom_call.1} parent=11 // pred_check_branch
          %502 = sbr.rel (%p500) target = $region24
        $region23: #{tpu_custom_call.1} parent=11 // pred_region
          _
        $region24: #{tpu_custom_call.1} parent=11 // pred_fallthru
          _
      $region12: #{tpu_custom_call.1} parent=5 // pred_fallthru
        _
      %p503 = scmp.lt.s32.totalorder %s32, 4
      // Predicated region
      $region25: #{tpu_custom_call.1} parent=5 // pred_check
        %p504 = pneg %p503
      $region26: #{tpu_custom_call.1} parent=5 // pred_check_branch
        %506 = sbr.rel (%p504) target = $region28
      $region27: #{tpu_custom_call.1} parent=5 // pred_region
        // Predicated region
        $region29: #{tpu_custom_call.1} parent=27 // pred_check
          %p507 = pneg %p64
        $region30: #{tpu_custom_call.1} parent=27 // pred_check_branch
          %509 = sbr.rel (%p507) target = $region32
        $region31: #{tpu_custom_call.1} parent=27 // pred_region
          %s510 = sand.u32 %s32, 1
          %s511 = scalar_lea.sflag [#allocation4], %s510
          %s512 = sand.u32 %s54, 1
          %s513 = smul.addr %s512, 8
          %s514 = scalar_lea.vmem [#allocation3], %s513
          %s516 = ssub.s32 128, 128
          %517 = vsyncadd %s511, %s516
          %s518 = smul.addr %s39, 128
          %s519 = scalar_lea.hbm %s0, %s518
          %s521 = sshll.u32 %s514, 4
          %s522 = int_to_ptr.vmem [resolvable:$true] %s521
          %524 = dma.hbm_to_vmem [thread:$0]  %s519, 128, %s522, %s511
        $region32: #{tpu_custom_call.1} parent=27 // pred_fallthru
          _
        // Predicated region
        $region33: #{tpu_custom_call.1} parent=27 // pred_check
          %p525 = pneg %p90
        $region34: #{tpu_custom_call.1} parent=27 // pred_check_branch
          %527 = sbr.rel (%p525) target = $region36
        $region35: #{tpu_custom_call.1} parent=27 // pred_region
          %s528 = sand.u32 %s32, 1
          %s529 = scalar_lea.sflag [#allocation7], %s528
          %s530 = sand.u32 %s80, 1
          %s531 = smul.addr %s530, 8
          %s532 = scalar_lea.vmem [#allocation6], %s531
          %s534 = ssub.s32 128, 128
          %535 = vsyncadd %s529, %s534
          %s536 = smul.addr %s39, 128
          %s537 = scalar_lea.hbm %s1, %s536
          %s539 = sshll.u32 %s532, 4
          %s540 = int_to_ptr.vmem [resolvable:$true] %s539
          %542 = dma.hbm_to_vmem [thread:$0]  %s537, 128, %s540, %s529
        $region36: #{tpu_custom_call.1} parent=27 // pred_fallthru
          _
        // Predicated region
        $region37: #{tpu_custom_call.1} parent=27 // pred_check
          %p543 = pneg %p116
        $region38: #{tpu_custom_call.1} parent=27 // pred_check_branch
          %545 = sbr.rel (%p543) target = $region40
        $region39: #{tpu_custom_call.1} parent=27 // pred_region
          %s546 = sand.u32 %s32, 1
          %s547 = scalar_lea.sflag [#allocation7], %s546
          %s548 = sand.u32 %s106, 1
          %s549 = scalar_lea.vmem [#allocation8], %s548
          %s551 = ssub.s32 16, 16
          %552 = vsyncadd %s547, %s551
          %s553 = smul.addr %s39, 16
          %s554 = scalar_lea.hbm %s2, %s553
          %s556 = sshll.u32 %s549, 4
          %s557 = int_to_ptr.vmem [resolvable:$true] %s556
          %559 = dma.hbm_to_vmem [thread:$0]  %s554, 16, %s557, %s547
        $region40: #{tpu_custom_call.1} parent=27 // pred_fallthru
          _
        // Predicated region
        $region41: #{tpu_custom_call.1} parent=27 // pred_check
          %p560 = pneg %p163
        $region42: #{tpu_custom_call.1} parent=27 // pred_check_branch
          %562 = sbr.rel (%p560) target = $region44
        $region43: #{tpu_custom_call.1} parent=27 // pred_region
          %p563 = scmp.lt.s32.totalorder %s40, 1
          %s564 = scalar_select %p563, %s40, 1
          %s565 = smul.addr %s564, 4
          %s566 = scalar_lea.vmem %s4, %s565
        $region44: #{tpu_custom_call.1} parent=27 // pred_fallthru
          _
        // Predicated region
        $region45: #{tpu_custom_call.1} parent=27 // pred_check
          %p567 = pneg %p189
        $region46: #{tpu_custom_call.1} parent=27 // pred_check_branch
          %569 = sbr.rel (%p567) target = $region48
        $region47: #{tpu_custom_call.1} parent=27 // pred_region
          %p570 = scmp.lt.s32.totalorder %s40, 1
          %s571 = scalar_select %p570, %s40, 1
          %s572 = smul.addr %s571, 4
          %s573 = scalar_lea.vmem %s5, %s572
        $region48: #{tpu_custom_call.1} parent=27 // pred_fallthru
          _
        // Predicated region
        $region49: #{tpu_custom_call.1} parent=27 // pred_check
          %p574 = pneg %p215
        $region50: #{tpu_custom_call.1} parent=27 // pred_check_branch
          %576 = sbr.rel (%p574) target = $region52
        $region51: #{tpu_custom_call.1} parent=27 // pred_region
          %p577 = scmp.lt.s32.totalorder %s40, 1
          %s578 = scalar_select %p577, %s40, 1
          %s579 = smul.addr %s578, 8
          %s580 = smul.addr %s579, 4
          %s581 = scalar_lea.vmem %s6, %s580
        $region52: #{tpu_custom_call.1} parent=27 // pred_fallthru
          _
        // Predicated region
        $region53: #{tpu_custom_call.1} parent=27 // pred_check
          %p582 = pneg %p241
        $region54: #{tpu_custom_call.1} parent=27 // pred_check_branch
          %584 = sbr.rel (%p582) target = $region56
        $region55: #{tpu_custom_call.1} parent=27 // pred_region
          %p585 = scmp.lt.s32.totalorder %s40, 1
          %s586 = scalar_select %p585, %s40, 1
          %s587 = smul.addr %s586, 2
          %s588 = scalar_lea.vmem %s7, %s587
        $region56: #{tpu_custom_call.1} parent=27 // pred_fallthru
          _
        // Predicated region
        $region57: #{tpu_custom_call.1} parent=27 // pred_check
          %p589 = pneg %p267
        $region58: #{tpu_custom_call.1} parent=27 // pred_check_branch
          %591 = sbr.rel (%p589) target = $region60
        $region59: #{tpu_custom_call.1} parent=27 // pred_region
          %p592 = scmp.lt.s32.totalorder %s40, 1
          %s593 = scalar_select %p592, %s40, 1
          %s594 = smul.addr %s593, 8
          %s595 = smul.addr %s594, 4
          %s596 = scalar_lea.vmem %s8, %s595
        $region60: #{tpu_custom_call.1} parent=27 // pred_fallthru
          _
        // Predicated region
        $region61: #{tpu_custom_call.1} parent=27 // pred_check
          %p597 = pneg %p293
        $region62: #{tpu_custom_call.1} parent=27 // pred_check_branch
          %599 = sbr.rel (%p597) target = $region64
        $region63: #{tpu_custom_call.1} parent=27 // pred_region
          %p600 = scmp.lt.s32.totalorder %s40, 1
          %s601 = scalar_select %p600, %s40, 1
          %s602 = smul.addr %s601, 2
          %s603 = scalar_lea.vmem %s9, %s602
        $region64: #{tpu_custom_call.1} parent=27 // pred_fallthru
          _
        // Predicated region
        $region65: #{tpu_custom_call.1} parent=27 // pred_check
          %p604 = pneg %p319
        $region66: #{tpu_custom_call.1} parent=27 // pred_check_branch
          %606 = sbr.rel (%p604) target = $region68
        $region67: #{tpu_custom_call.1} parent=27 // pred_region
          %s607 = sand.u32 %s32, 1
          %s608 = scalar_lea.sflag [#allocation4], %s607
          %s609 = sand.u32 %s309, 1
          %s610 = smul.addr %s609, 16
          %s611 = scalar_lea.vmem [#allocation11], %s610
          %s613 = ssub.s32 256, 256
          %614 = vsyncadd %s608, %s613
          %s615 = smul.addr %s40, 4
          %s616 = smul.addr %s615, 64
          %s617 = scalar_lea.hbm %s10, %s616
          %s618 = sshll.u32 %s611, 4
          %s619 = int_to_ptr.vmem [resolvable:$true] %s618
          %624 = dma.hbm_to_vmem [thread:$0]  %s617, 256, %s619, %s608, 64, 64, 4
        $region68: #{tpu_custom_call.1} parent=27 // pred_fallthru
          _
        // Predicated region
        $region69: #{tpu_custom_call.1} parent=27 // pred_check
          %p625 = pneg %p345
        $region70: #{tpu_custom_call.1} parent=27 // pred_check_branch
          %627 = sbr.rel (%p625) target = $region72
        $region71: #{tpu_custom_call.1} parent=27 // pred_region
          %p628 = scmp.lt.s32.totalorder %s40, 1
          %s629 = scalar_select %p628, %s40, 1
          %s630 = scalar_lea.vmem %s11, %s629
        $region72: #{tpu_custom_call.1} parent=27 // pred_fallthru
          _
        // Predicated region
        $region73: #{tpu_custom_call.1} parent=27 // pred_check
          %p631 = pneg %p371
        $region74: #{tpu_custom_call.1} parent=27 // pred_check_branch
          %633 = sbr.rel (%p631) target = $region76
        $region75: #{tpu_custom_call.1} parent=27 // pred_region
          %p634 = scmp.lt.s32.totalorder %s40, 1
          %s635 = scalar_select %p634, %s40, 1
          %s636 = smul.addr %s635, 8
          %s637 = smul.addr %s636, 4
          %s638 = scalar_lea.vmem %s12, %s637
        $region76: #{tpu_custom_call.1} parent=27 // pred_fallthru
          _
        // Predicated region
        $region77: #{tpu_custom_call.1} parent=27 // pred_check
          %p639 = pneg %p397
        $region78: #{tpu_custom_call.1} parent=27 // pred_check_branch
          %641 = sbr.rel (%p639) target = $region80
        $region79: #{tpu_custom_call.1} parent=27 // pred_region
          %p642 = scmp.lt.s32.totalorder %s40, 1
          %s643 = scalar_select %p642, %s40, 1
          %s644 = scalar_lea.vmem %s13, %s643
        $region80: #{tpu_custom_call.1} parent=27 // pred_fallthru
          _
      $region28: #{tpu_custom_call.1} parent=5 // pred_fallthru
        _
      %p645 = scmp.le.s32.totalorder 1, %s32
      %p646 = scmp.lt.s32.totalorder %s32, 5
      %p647 = pnand %p645, %p646
      %p648 = pneg %p647
      // Predicated region
      $region81: #{tpu_custom_call.1} parent=5 // pred_check
        _
      $region82: #{tpu_custom_call.1} parent=5 // pred_check_branch
        %650 = sbr.rel (%p647) target = $region84
      $region83: #{tpu_custom_call.1} parent=5 // pred_region
        %s651 = ssub.s32 %s32, 1
        %s652 = sand.u32 %s37, 1
        %s653 = scalar_lea.sflag [#allocation4], %s652
        %s654 = sand.u32 %s57, 1
        %s655 = smul.addr %s654, 8
        %s656 = scalar_lea.vmem [#allocation3], %s655
        // Predicated region
        $region85: #{tpu_custom_call.1} parent=83 // pred_check
          %p657 = pneg %p70
        $region86: #{tpu_custom_call.1} parent=83 // pred_check_branch
          %659 = sbr.rel (%p657) target = $region88
        $region87: #{tpu_custom_call.1} parent=83 // pred_region
          %660 = dma.done %s653, 128
        $region88: #{tpu_custom_call.1} parent=83 // pred_fallthru
          _
        %s661 = sand.u32 %s37, 1
        %s662 = scalar_lea.sflag [#allocation7], %s661
        %s663 = sand.u32 %s83, 1
        %s664 = smul.addr %s663, 8
        %s665 = scalar_lea.vmem [#allocation6], %s664
        // Predicated region
        $region89: #{tpu_custom_call.1} parent=83 // pred_check
          %p666 = pneg %p96
        $region90: #{tpu_custom_call.1} parent=83 // pred_check_branch
          %668 = sbr.rel (%p666) target = $region92
        $region91: #{tpu_custom_call.1} parent=83 // pred_region
          %669 = dma.done %s662, 128
        $region92: #{tpu_custom_call.1} parent=83 // pred_fallthru
          _
        %s670 = sand.u32 %s37, 1
        %s671 = scalar_lea.sflag [#allocation7], %s670
        %s672 = sand.u32 %s109, 1
        %s673 = scalar_lea.vmem [#allocation8], %s672
        // Predicated region
        $region93: #{tpu_custom_call.1} parent=83 // pred_check
          %p674 = pneg %p122
        $region94: #{tpu_custom_call.1} parent=83 // pred_check_branch
          %676 = sbr.rel (%p674) target = $region96
        $region95: #{tpu_custom_call.1} parent=83 // pred_region
          %677 = dma.done %s671, 16
        $region96: #{tpu_custom_call.1} parent=83 // pred_fallthru
          _
        // Predicated region
        $region97: #{tpu_custom_call.1} parent=83 // pred_check
          %p678 = pneg %p143
        $region98: #{tpu_custom_call.1} parent=83 // pred_check_branch
          %680 = sbr.rel (%p678) target = $region100
        $region99: #{tpu_custom_call.1} parent=83 // pred_region
          %681 = dma.done [#allocation10], 128
        $region100: #{tpu_custom_call.1} parent=83 // pred_fallthru
          _
        %s682 = sand.u32 %s37, 1
        %s683 = scalar_lea.sflag [#allocation4], %s682
        %s684 = sand.u32 %s312, 1
        %s685 = smul.addr %s684, 16
        %s686 = scalar_lea.vmem [#allocation11], %s685
        // Predicated region
        $region101: #{tpu_custom_call.1} parent=83 // pred_check
          %p687 = pneg %p325
        $region102: #{tpu_custom_call.1} parent=83 // pred_check_branch
          %689 = sbr.rel (%p687) target = $region104
        $region103: #{tpu_custom_call.1} parent=83 // pred_region
          %690 = dma.done %s683, 256
        $region104: #{tpu_custom_call.1} parent=83 // pred_fallthru
          _
        %s691 = sand.u32 %s37, 1
        %s692 = scalar_lea.sflag [#allocation4], %s691
        %s693 = sand.u32 %s57, 1
        %s694 = smul.addr %s693, 8
        %s695 = scalar_lea.vmem [#allocation3], %s694
        %p696 = pneg %p70
        %p697 = pneg %p67
        %s698 = sand.u32 %s37, 1
        %s699 = scalar_lea.sflag [#allocation7], %s698
        %s700 = sand.u32 %s83, 1
        %s701 = smul.addr %s700, 8
        %s702 = scalar_lea.vmem [#allocation6], %s701
        %p703 = pneg %p96
        %p704 = pneg %p93
        %s705 = sand.u32 %s37, 1
        %s706 = scalar_lea.sflag [#allocation7], %s705
        %s707 = sand.u32 %s109, 1
        %s708 = scalar_lea.vmem [#allocation8], %s707
        %p709 = pneg %p122
        %p710 = pneg %p119
        %p711 = pneg %p143
        %p712 = pneg %p140
        %p713 = scmp.lt.s32.totalorder %s42, 1
        %s714 = scalar_select %p713, %s42, 1
        %s715 = smul.addr %s714, 4
        %s716 = scalar_lea.vmem %s4, %s715
        %p717 = pneg %p169
        %p718 = pneg %p166
        %p719 = scmp.lt.s32.totalorder %s42, 1
        %s720 = scalar_select %p719, %s42, 1
        %s721 = smul.addr %s720, 4
        %s722 = scalar_lea.vmem %s5, %s721
        %p723 = pneg %p195
        %p724 = pneg %p192
        %p725 = scmp.lt.s32.totalorder %s42, 1
        %s726 = scalar_select %p725, %s42, 1
        %s727 = smul.addr %s726, 8
        %s728 = smul.addr %s727, 4
        %s729 = scalar_lea.vmem %s6, %s728
        %p730 = pneg %p221
        %p731 = pneg %p218
        %p732 = scmp.lt.s32.totalorder %s42, 1
        %s733 = scalar_select %p732, %s42, 1
        %s734 = smul.addr %s733, 2
        %s735 = scalar_lea.vmem %s7, %s734
        %p736 = pneg %p247
        %p737 = pneg %p244
        %p738 = scmp.lt.s32.totalorder %s42, 1
        %s739 = scalar_select %p738, %s42, 1
        %s740 = smul.addr %s739, 8
        %s741 = smul.addr %s740, 4
        %s742 = scalar_lea.vmem %s8, %s741
        %p743 = pneg %p273
        %p744 = pneg %p270
        %p745 = scmp.lt.s32.totalorder %s42, 1
        %s746 = scalar_select %p745, %s42, 1
        %s747 = smul.addr %s746, 2
        %s748 = scalar_lea.vmem %s9, %s747
        %p749 = pneg %p299
        %p750 = pneg %p296
        %s751 = sand.u32 %s37, 1
        %s752 = scalar_lea.sflag [#allocation4], %s751
        %s753 = sand.u32 %s312, 1
        %s754 = smul.addr %s753, 16
        %s755 = scalar_lea.vmem [#allocation11], %s754
        %p756 = pneg %p325
        %p757 = pneg %p322
        %p758 = scmp.lt.s32.totalorder %s42, 1
        %s759 = scalar_select %p758, %s42, 1
        %s760 = scalar_lea.vmem %s11, %s759
        %p761 = pneg %p351
        %p762 = pneg %p348
        %p763 = scmp.lt.s32.totalorder %s42, 1
        %s764 = scalar_select %p763, %s42, 1
        %s765 = smul.addr %s764, 8
        %s766 = smul.addr %s765, 4
        %s767 = scalar_lea.vmem %s12, %s766
        %p768 = pneg %p377
        %p769 = pneg %p374
        %p770 = scmp.lt.s32.totalorder %s42, 1
        %s771 = scalar_select %p770, %s42, 1
        %s772 = scalar_lea.vmem %s13, %s771
        %p773 = pneg %p403
        %p774 = pneg %p400
        %p775 = pneg %p424
        %p776 = pneg %p421
        %p777 = pneg %p445
        %p778 = pneg %p442
        %p779 = pneg %p471
        %p780 = pneg %p468
        %s781 = sand.u32 %s458, 1
        %s782 = scalar_lea.sflag [#allocation5], %s781
        %s783 = sand.u32 %s458, 1
        %s784 = smul.addr %s783, 8
        %s785 = scalar_lea.vmem [#allocation12], %s784
        %p786 = scmp.lt.s32.totalorder %s42, 1
        %s787 = scalar_select %p786, %s42, 1
        %s788 = smul.addr %s787, 4
        %s789 = scalar_lea.vmem %s4, %s788
        %p790 = scmp.lt.s32.totalorder %s42, 1
        %s791 = scalar_select %p790, %s42, 1
        %s792 = smul.addr %s791, 4
        %s793 = scalar_lea.vmem %s5, %s792
        %p794 = scmp.lt.s32.totalorder %s42, 1
        %s795 = scalar_select %p794, %s42, 1
        %s796 = smul.addr %s795, 8
        %s797 = smul.addr %s796, 4
        %s798 = scalar_lea.vmem %s6, %s797
        %p799 = scmp.lt.s32.totalorder %s42, 1
        %s800 = scalar_select %p799, %s42, 1
        %s801 = smul.addr %s800, 2
        %s802 = scalar_lea.vmem %s7, %s801
        %p803 = scmp.lt.s32.totalorder %s42, 1
        %s804 = scalar_select %p803, %s42, 1
        %s805 = smul.addr %s804, 8
        %s806 = smul.addr %s805, 4
        %s807 = scalar_lea.vmem %s8, %s806
        %p808 = scmp.lt.s32.totalorder %s42, 1
        %s809 = scalar_select %p808, %s42, 1
        %s810 = smul.addr %s809, 2
        %s811 = scalar_lea.vmem %s9, %s810
        %p812 = scmp.lt.s32.totalorder %s42, 1
        %s813 = scalar_select %p812, %s42, 1
        %s814 = scalar_lea.vmem %s11, %s813
        %p815 = scmp.lt.s32.totalorder %s42, 1
        %s816 = scalar_select %p815, %s42, 1
        %s817 = smul.addr %s816, 8
        %s818 = smul.addr %s817, 4
        %s819 = scalar_lea.vmem %s12, %s818
        %p820 = scmp.lt.s32.totalorder %s42, 1
        %s821 = scalar_select %p820, %s42, 1
        %s822 = scalar_lea.vmem %s13, %s821
        %p824 = scmp.eq.s32.totalorder %s42, 0
        // Predicated region
        $region105: #{tpu_custom_call.1} parent=83 // pred_check
          %p825 = pneg %p824
        $region106: #{tpu_custom_call.1} parent=83 // pred_check_branch
          %827 = sbr.rel (%p825) target = $region108
        $region107: #{tpu_custom_call.1} parent=83 // pred_region
          %v828 = vld [vmem:[%s656] sm:$0xff]
          %vm829 = vcmask 261120
          %830 = vst.msk [vmem:[#allocation2] sm:$0xff] %vm829, %v828
        $region108: #{tpu_custom_call.1} parent=83 // pred_fallthru
          _
        %v831 = vld [vmem:[#allocation2] sm:$0xff]
        %v832 = vld [vmem:[%s665] sm:$0xff]
        %v833 = vpack.c.bf16 %v832, %v832
        %v834 = vld [vmem:[%s673] sm:$0x1]
        %v835 = vld [vmem:[#allocation9] sm:$0xff]
        %v836 = vld [vmem:[%s789] sm:$0x7]
        %v837 = vld [vmem:[%s793] sm:$0x7]
        %v838 = vld [vmem:[%s798] sm:$0xf]
        %v839 = vld [vmem:[%s798 + $0x4] sm:$0xf]
        %v840 = vld [vmem:[%s798 + $0x8] sm:$0xf]
        %v841 = vld [vmem:[%s798 + $0xc] sm:$0xf]
        %v842 = vld [vmem:[%s798 + $0x10] sm:$0xf]
        %v843 = vld [vmem:[%s798 + $0x14] sm:$0xf]
        %v844 = vld [vmem:[%s798 + $0x18] sm:$0xf]
        %v845 = vld [vmem:[%s798 + $0x1c] sm:$0xf]
        %v846 = vld [vmem:[%s802] sm:$0x3]
        %v847 = vld [vmem:[%s807] sm:$0xf]
        %v848 = vld [vmem:[%s807 + $0x4] sm:$0xf]
        %v849 = vld [vmem:[%s807 + $0x8] sm:$0xf]
        %v850 = vld [vmem:[%s807 + $0xc] sm:$0xf]
        %v851 = vld [vmem:[%s807 + $0x10] sm:$0xf]
        %v852 = vld [vmem:[%s807 + $0x14] sm:$0xf]
        %v853 = vld [vmem:[%s807 + $0x18] sm:$0xf]
        %v854 = vld [vmem:[%s807 + $0x1c] sm:$0xf]
        %v855 = vld [vmem:[%s811] sm:$0x3]
        %vm856 = vcmask 261120
        %v857 = vsel %vm856, %v831, 0.0
        %858 = vadd.xlane.f32.xlu0 %v857
        %v859 = vpop.xlane.xlu0 %858
        %v860 = vrcp.pop 32.0
        %v861 = vmul.f32 %v859, %v860
        %v862 = vsub.f32 %v831, %v861
        %v863 = vmul.f32 %v862, %v862
        %v864 = vsel %vm856, %v863, 0.0
        %865 = vadd.xlane.f32.xlu0 %v864
        %v866 = vpop.xlane.xlu0 %865
        %v867 = vmul.f32 %v866, 0.032258064
        %v868 = vrsqrt.pop %v867
        %v869 = vmul.f32 %v867, %v868
        %vm870 = vcmp.eq.f32.partialorder %v867, inf
        %v871 = vsel %vm870, %v867, %v869
        %vm872 = vcmp.eq.f32.partialorder %v867, 0.0
        %v873 = vand.u32 %v867, 2147483648
        %v874 = vsel %vm872, %v873, %v871
        %v875 = vadd.f32 %v874, 1e-06
        %v876 = vrcp.pop %v875
        %v877 = vlaneseq
        %v878 = vshrl.u32 %v877, 7
        %v879 = vsub.s32 0, %v878
        %v880 = vrot.slane %v836, %v879
        %v881 = vmul.f32 %v880, %v862
        %v882 = vmul.f32 %v881, %v876
        %v883 = vlaneseq
        %v884 = vshrl.u32 %v883, 7
        %v885 = vsub.s32 0, %v884
        %v886 = vrot.slane %v837, %v885
        %v887 = vadd.f32 %v882, %v886
        %v888 = vpack.c.bf16 %v887, %v887
        %v889 = vlaneseq
        %v890 = vshrl.u32 %v889, 7
        %v891 = vsub.s32 0, %v890
        %v892 = vrot.slane %v846, %v891
        %v897 = vunpack.c.l.b16 %v838
        %v898 = vunpack.c.l.b16 %v839
        %v899 = vunpack.c.l.b16 %v840
        %v900 = vunpack.c.l.b16 %v841
        %v901 = vpack.c.b16 %v898, %v897
        %v902 = vpack.c.b16 %v900, %v899
        %v906 = vsel %vm856, %v888, 0
        %908 = vmatprep.subr.bf16.mxu0 0
        %909 = vmatpush1.bf16.msra.mxu0 0
        %910 = vmatprep.subr.bf16.mxu0 0
        %911 = vmatpush1.bf16.msra.mxu0 0
        %912 = vmatprep.subr.bf16.mxu0 0
        %913 = vmatpush1.bf16.msra.mxu0 0
        %914 = vmatprep.subr.bf16.mxu0 0
        %915 = vmatpush1.bf16.msra.mxu0 0
        %916 = vmatprep.subr.bf16.mxu0 0
        %917 = vmatpush1.bf16.msra.mxu0 0
        %918 = vmatprep.subr.bf16.mxu0 0
        %919 = vmatpush1.bf16.msra.mxu0 0
        %920 = vmatprep.subr.bf16.mxu0 0
        %921 = vmatpush1.bf16.msra.mxu0 %v902
        %922 = vmatprep.subr.bf16.mxu0 0
        %923 = vmatpush1.bf16.msra.mxu0 %v901
        %924 = vmatprep.subr.bf16.mxu0 0
        %925 = vmatpush2.bf16.msra.mxu0 0
        %926 = vmatprep.subr.bf16.mxu0 0
        %927 = vmatpush2.bf16.msra.mxu0 0
        %928 = vmatprep.subr.bf16.mxu0 0
        %929 = vmatpush2.bf16.msra.mxu0 0
        %930 = vmatprep.subr.bf16.mxu0 0
        %931 = vmatpush2.bf16.msra.mxu0 0
        %932 = vmatprep.subr.bf16.mxu0 0
        %933 = vmatpush2.bf16.msra.mxu0 0
        %934 = vmatprep.subr.bf16.mxu0 0
        %935 = vmatpush2.bf16.msra.mxu0 0
        %936 = vmatprep.subr.bf16.mxu0 0
        %937 = vmatpush2.bf16.msra.mxu0 0
        %938 = vmatprep.subr.bf16.mxu0 0
        %939 = vmatpush2.bf16.msra.mxu0 0
        %940 = vmatprep.mubr.bf16.mxu0 0
        %941 = vmatmul.mubr.bf16.gmra.mxu0 %v906
        %v942 = vpop.f32.mrf.mxu0
        %v943 = vadd.f32 %v892, %v942
        %v944 = vpop.f32.mrf.mxu0
        %v945 = vpop.f32.mrf.mxu0
        %v946 = vpop.f32.mrf.mxu0
        %947 = vdwg.mxu0
        %949 = vrot.lane.b32.xlu0 %v943, 120
        %v950 = vpop.permute.xlu0 %949
        %952 = vrot.lane.b32.xlu0 %v943, 112
        %v953 = vpop.permute.xlu0 %952
        %955 = vrot.lane.b32.xlu0 %v943, 104
        %v956 = vpop.permute.xlu0 %955
        %v958 = vpack.c.bf16 %v943, %v943
        %v959 = vpack.c.bf16 %v950, %v950
        %v960 = vpack.c.bf16 %v953, %v953
        %v961 = vpack.c.bf16 %v956, %v956
        %963 = vrot.lane.b32.xlu0 %v958, 96
        %v964 = vpop.permute.xlu0 %963
        %vm965 = vcmask 64512
        %v967 = vsel %vm965, %v958, 0
        %v970 = vsel %vm965, %v964, 0
        %972 = vmatprep.subr.bf16.mxu0 0
        %973 = vmatpush1.bf16.xpose.msra.mxu0 0
        %974 = vmatprep.subr.bf16.mxu0 0
        %975 = vmatpush1.bf16.xpose.msra.mxu0 0
        %976 = vmatprep.subr.bf16.mxu0 0
        %977 = vmatpush1.bf16.xpose.msra.mxu0 0
        %978 = vmatprep.subr.bf16.mxu0 0
        %979 = vmatpush1.bf16.xpose.msra.mxu0 0
        %980 = vmatprep.subr.bf16.mxu0 0
        %981 = vmatpush1.bf16.xpose.msra.mxu0 0
        %982 = vmatprep.subr.bf16.mxu0 0
        %983 = vmatpush1.bf16.xpose.msra.mxu0 0
        %984 = vmatprep.subr.bf16.mxu0 0
        %985 = vmatpush1.bf16.xpose.msra.mxu0 0
        %986 = vmatprep.subr.bf16.mxu0 0
        %987 = vmatpush1.bf16.xpose.msra.mxu0 %v970
        %988 = vmatprep.subr.bf16.mxu0 0
        %989 = vmatpush2.bf16.xpose.msra.mxu0 0
        %990 = vmatprep.subr.bf16.mxu0 0
        %991 = vmatpush2.bf16.xpose.msra.mxu0 0
        %992 = vmatprep.subr.bf16.mxu0 0
        %993 = vmatpush2.bf16.xpose.msra.mxu0 0
        %994 = vmatprep.subr.bf16.mxu0 0
        %995 = vmatpush2.bf16.xpose.msra.mxu0 0
        %996 = vmatprep.subr.bf16.mxu0 0
        %997 = vmatpush2.bf16.xpose.msra.mxu0 0
        %998 = vmatprep.subr.bf16.mxu0 0
        %999 = vmatpush2.bf16.xpose.msra.mxu0 0
        %1000 = vmatprep.subr.bf16.mxu0 0
        %1001 = vmatpush2.bf16.xpose.msra.mxu0 0
        %1002 = vmatprep.subr.bf16.mxu0 0
        %1003 = vmatpush2.bf16.xpose.msra.mxu0 0
        %1004 = vmatprep.mubr.bf16.mxu0 0
        %1005 = vmatmul.mubr.bf16.gmra.mxu0 %v967
        %v1006 = vpop.f32.mrf.mxu0
        %v1007 = vadd.f32 0.0, %v1006
        %v1008 = vpop.f32.mrf.mxu0
        %v1009 = vpop.f32.mrf.mxu0
        %v1010 = vpop.f32.mrf.mxu0
        %1011 = vdwg.mxu0
        %1013 = vrot.lane.b32.xlu0 %v959, 96
        %v1014 = vpop.permute.xlu0 %1013
        %v1016 = vsel %vm965, %v959, 0
        %v1019 = vsel %vm965, %v1014, 0
        %1021 = vmatprep.subr.bf16.mxu0 0
        %1022 = vmatpush1.bf16.xpose.msra.mxu0 0
        %1023 = vmatprep.subr.bf16.mxu0 0
        %1024 = vmatpush1.bf16.xpose.msra.mxu0 0
        %1025 = vmatprep.subr.bf16.mxu0 0
        %1026 = vmatpush1.bf16.xpose.msra.mxu0 0
        %1027 = vmatprep.subr.bf16.mxu0 0
        %1028 = vmatpush1.bf16.xpose.msra.mxu0 0
        %1029 = vmatprep.subr.bf16.mxu0 0
        %1030 = vmatpush1.bf16.xpose.msra.mxu0 0
        %1031 = vmatprep.subr.bf16.mxu0 0
        %1032 = vmatpush1.bf16.xpose.msra.mxu0 0
        %1033 = vmatprep.subr.bf16.mxu0 0
        %1034 = vmatpush1.bf16.xpose.msra.mxu0 0
        %1035 = vmatprep.subr.bf16.mxu0 0
        %1036 = vmatpush1.bf16.xpose.msra.mxu0 %v1019
        %1037 = vmatprep.subr.bf16.mxu0 0
        %1038 = vmatpush2.bf16.xpose.msra.mxu0 0
        %1039 = vmatprep.subr.bf16.mxu0 0
        %1040 = vmatpush2.bf16.xpose.msra.mxu0 0
        %1041 = vmatprep.subr.bf16.mxu0 0
        %1042 = vmatpush2.bf16.xpose.msra.mxu0 0
        %1043 = vmatprep.subr.bf16.mxu0 0
        %1044 = vmatpush2.bf16.xpose.msra.mxu0 0
        %1045 = vmatprep.subr.bf16.mxu0 0
        %1046 = vmatpush2.bf16.xpose.msra.mxu0 0
        %1047 = vmatprep.subr.bf16.mxu0 0
        %1048 = vmatpush2.bf16.xpose.msra.mxu0 0
        %1049 = vmatprep.subr.bf16.mxu0 0
        %1050 = vmatpush2.bf16.xpose.msra.mxu0 0
        %1051 = vmatprep.subr.bf16.mxu0 0
        %1052 = vmatpush2.bf16.xpose.msra.mxu0 0
        %1053 = vmatprep.mubr.bf16.mxu0 0
        %1054 = vmatmul.mubr.bf16.gmra.mxu0 %v1016
        %v1055 = vpop.f32.mrf.mxu0
        %v1056 = vadd.f32 0.0, %v1055
        %v1057 = vpop.f32.mrf.mxu0
        %v1058 = vpop.f32.mrf.mxu0
        %v1059 = vpop.f32.mrf.mxu0
        %1060 = vdwg.mxu0
        %1062 = vrot.lane.b32.xlu0 %v960, 96
        %v1063 = vpop.permute.xlu0 %1062
        %v1065 = vsel %vm965, %v960, 0
        %v1068 = vsel %vm965, %v1063, 0
        %1070 = vmatprep.subr.bf16.mxu0 0
        %1071 = vmatpush1.bf16.xpose.msra.mxu0 0
        %1072 = vmatprep.subr.bf16.mxu0 0
        %1073 = vmatpush1.bf16.xpose.msra.mxu0 0
        %1074 = vmatprep.subr.bf16.mxu0 0
        %1075 = vmatpush1.bf16.xpose.msra.mxu0 0
        %1076 = vmatprep.subr.bf16.mxu0 0
        %1077 = vmatpush1.bf16.xpose.msra.mxu0 0
        %1078 = vmatprep.subr.bf16.mxu0 0
        %1079 = vmatpush1.bf16.xpose.msra.mxu0 0
        %1080 = vmatprep.subr.bf16.mxu0 0
        %1081 = vmatpush1.bf16.xpose.msra.mxu0 0
        %1082 = vmatprep.subr.bf16.mxu0 0
        %1083 = vmatpush1.bf16.xpose.msra.mxu0 0
        %1084 = vmatprep.subr.bf16.mxu0 0
        %1085 = vmatpush1.bf16.xpose.msra.mxu0 %v1068
        %1086 = vmatprep.subr.bf16.mxu0 0
        %1087 = vmatpush2.bf16.xpose.msra.mxu0 0
        %1088 = vmatprep.subr.bf16.mxu0 0
        %1089 = vmatpush2.bf16.xpose.msra.mxu0 0
        %1090 = vmatprep.subr.bf16.mxu0 0
        %1091 = vmatpush2.bf16.xpose.msra.mxu0 0
        %1092 = vmatprep.subr.bf16.mxu0 0
        %1093 = vmatpush2.bf16.xpose.msra.mxu0 0
        %1094 = vmatprep.subr.bf16.mxu0 0
        %1095 = vmatpush2.bf16.xpose.msra.mxu0 0
        %1096 = vmatprep.subr.bf16.mxu0 0
        %1097 = vmatpush2.bf16.xpose.msra.mxu0 0
        %1098 = vmatprep.subr.bf16.mxu0 0
        %1099 = vmatpush2.bf16.xpose.msra.mxu0 0
        %1100 = vmatprep.subr.bf16.mxu0 0
        %1101 = vmatpush2.bf16.xpose.msra.mxu0 0
        %1102 = vmatprep.mubr.bf16.mxu0 0
        %1103 = vmatmul.mubr.bf16.gmra.mxu0 %v1065
        %v1104 = vpop.f32.mrf.mxu0
        %v1105 = vadd.f32 0.0, %v1104
        %v1106 = vpop.f32.mrf.mxu0
        %v1107 = vpop.f32.mrf.mxu0
        %v1108 = vpop.f32.mrf.mxu0
        %1109 = vdwg.mxu0
        %1111 = vrot.lane.b32.xlu0 %v961, 96
        %v1112 = vpop.permute.xlu0 %1111
        %v1114 = vsel %vm965, %v961, 0
        %v1117 = vsel %vm965, %v1112, 0
        %1119 = vmatprep.subr.bf16.mxu0 0
        %1120 = vmatpush1.bf16.xpose.msra.mxu0 0
        %1121 = vmatprep.subr.bf16.mxu0 0
        %1122 = vmatpush1.bf16.xpose.msra.mxu0 0
        %1123 = vmatprep.subr.bf16.mxu0 0
        %1124 = vmatpush1.bf16.xpose.msra.mxu0 0
        %1125 = vmatprep.subr.bf16.mxu0 0
        %1126 = vmatpush1.bf16.xpose.msra.mxu0 0
        %1127 = vmatprep.subr.bf16.mxu0 0
        %1128 = vmatpush1.bf16.xpose.msra.mxu0 0
        %1129 = vmatprep.subr.bf16.mxu0 0
        %1130 = vmatpush1.bf16.xpose.msra.mxu0 0
        %1131 = vmatprep.subr.bf16.mxu0 0
        %1132 = vmatpush1.bf16.xpose.msra.mxu0 0
        %1133 = vmatprep.subr.bf16.mxu0 0
        %1134 = vmatpush1.bf16.xpose.msra.mxu0 %v1117
        %1135 = vmatprep.subr.bf16.mxu0 0
        %1136 = vmatpush2.bf16.xpose.msra.mxu0 0
        %1137 = vmatprep.subr.bf16.mxu0 0
        %1138 = vmatpush2.bf16.xpose.msra.mxu0 0
        %1139 = vmatprep.subr.bf16.mxu0 0
        %1140 = vmatpush2.bf16.xpose.msra.mxu0 0
        %1141 = vmatprep.subr.bf16.mxu0 0
        %1142 = vmatpush2.bf16.xpose.msra.mxu0 0
        %1143 = vmatprep.subr.bf16.mxu0 0
        %1144 = vmatpush2.bf16.xpose.msra.mxu0 0
        %1145 = vmatprep.subr.bf16.mxu0 0
        %1146 = vmatpush2.bf16.xpose.msra.mxu0 0
        %1147 = vmatprep.subr.bf16.mxu0 0
        %1148 = vmatpush2.bf16.xpose.msra.mxu0 0
        %1149 = vmatprep.subr.bf16.mxu0 0
        %1150 = vmatpush2.bf16.xpose.msra.mxu0 0
        %1151 = vmatprep.mubr.bf16.mxu0 0
        %1152 = vmatmul.mubr.bf16.gmra.mxu0 %v1114
        %v1153 = vpop.f32.mrf.mxu0
        %v1154 = vadd.f32 0.0, %v1153
        %v1155 = vpop.f32.mrf.mxu0
        %v1156 = vpop.f32.mrf.mxu0
        %v1157 = vpop.f32.mrf.mxu0
        %1158 = vdwg.mxu0
        %v1159 = vmul.f32 %v1007, 0.35355338
        %v1160 = vmul.f32 %v1056, 0.35355338
        %v1161 = vmul.f32 %v1105, 0.35355338
        %v1162 = vmul.f32 %v1154, 0.35355338
        %v1163 = vadd.f32 %v1159, %v835
        %v1164 = vadd.f32 %v1160, %v835
        %v1165 = vadd.f32 %v1161, %v835
        %v1166 = vadd.f32 %v1162, %v835
        %v1167 = vsel %vm965, %v1163, -inf
        %1168 = vmax.xlane.f32.xlu0 %v1167
        %v1169 = vpop.xlane.xlu0 %1168
        %v1170 = vsel %vm965, %v1164, -inf
        %1171 = vmax.xlane.f32.xlu0 %v1170
        %v1172 = vpop.xlane.xlu0 %1171
        %v1173 = vsel %vm965, %v1165, -inf
        %1174 = vmax.xlane.f32.xlu0 %v1173
        %v1175 = vpop.xlane.xlu0 %1174
        %v1176 = vsel %vm965, %v1166, -inf
        %1177 = vmax.xlane.f32.xlu0 %v1176
        %v1178 = vpop.xlane.xlu0 %1177
        %v1179 = vsub.f32 %v1163, %v1169
        %v1180 = vsub.f32 %v1164, %v1172
        %v1181 = vsub.f32 %v1165, %v1175
        %v1182 = vsub.f32 %v1166, %v1178
        %v1183 = vmul.f32 %v1179, 1.442695
        %v1184 = vpow.pop %v1183
        %v1185 = vmul.f32 %v1180, 1.442695
        %v1186 = vpow.pop %v1185
        %v1187 = vmul.f32 %v1181, 1.442695
        %v1188 = vpow.pop %v1187
        %v1189 = vmul.f32 %v1182, 1.442695
        %v1190 = vpow.pop %v1189
        %v1191 = vsel %vm965, %v1184, 0.0
        %1192 = vadd.xlane.f32.xlu0 %v1191
        %v1193 = vpop.xlane.xlu0 %1192
        %v1194 = vsel %vm965, %v1186, 0.0
        %1195 = vadd.xlane.f32.xlu0 %v1194
        %v1196 = vpop.xlane.xlu0 %1195
        %v1197 = vsel %vm965, %v1188, 0.0
        %1198 = vadd.xlane.f32.xlu0 %v1197
        %v1199 = vpop.xlane.xlu0 %1198
        %v1200 = vsel %vm965, %v1190, 0.0
        %1201 = vadd.xlane.f32.xlu0 %v1200
        %v1202 = vpop.xlane.xlu0 %1201
        %v1203 = vrcp.pop %v1193
        %v1204 = vrcp.pop %v1196
        %v1205 = vrcp.pop %v1199
        %v1206 = vrcp.pop %v1202
        %v1207 = vmul.f32 %v1184, %v1203
        %v1208 = vmul.f32 %v1186, %v1204
        %v1209 = vmul.f32 %v1188, %v1205
        %v1210 = vmul.f32 %v1190, %v1206
        %v1211 = vpack.c.bf16 %v1207, %v1207
        %v1212 = vpack.c.bf16 %v1208, %v1208
        %v1213 = vpack.c.bf16 %v1209, %v1209
        %v1214 = vpack.c.bf16 %v1210, %v1210
        %1215 = vrot.lane.b32.xlu0 %v958, 64
        %v1216 = vpop.permute.xlu0 %1215
        %v1218 = vsel %vm965, %v1211, 0
        %vm1220 = vcmask 1043456
        %v1222 = vsel %vm1220, %v1216, 0
        %1224 = vmatprep.subr.bf16.mxu0 0
        %1225 = vmatpush1.bf16.msra.mxu0 0
        %1226 = vmatprep.subr.bf16.mxu0 0
        %1227 = vmatpush1.bf16.msra.mxu0 0
        %1228 = vmatprep.subr.bf16.mxu0 0
        %1229 = vmatpush1.bf16.msra.mxu0 0
        %1230 = vmatprep.subr.bf16.mxu0 0
        %1231 = vmatpush1.bf16.msra.mxu0 0
        %1232 = vmatprep.subr.bf16.mxu0 0
        %1233 = vmatpush1.bf16.msra.mxu0 0
        %1234 = vmatprep.subr.bf16.mxu0 0
        %1235 = vmatpush1.bf16.msra.mxu0 0
        %1236 = vmatprep.subr.bf16.mxu0 0
        %1237 = vmatpush1.bf16.msra.mxu0 0
        %1238 = vmatprep.subr.bf16.mxu0 0
        %1239 = vmatpush1.bf16.msra.mxu0 %v1222
        %1240 = vmatprep.subr.bf16.mxu0 0
        %1241 = vmatpush2.bf16.msra.mxu0 0
        %1242 = vmatprep.subr.bf16.mxu0 0
        %1243 = vmatpush2.bf16.msra.mxu0 0
        %1244 = vmatprep.subr.bf16.mxu0 0
        %1245 = vmatpush2.bf16.msra.mxu0 0
        %1246 = vmatprep.subr.bf16.mxu0 0
        %1247 = vmatpush2.bf16.msra.mxu0 0
        %1248 = vmatprep.subr.bf16.mxu0 0
        %1249 = vmatpush2.bf16.msra.mxu0 0
        %1250 = vmatprep.subr.bf16.mxu0 0
        %1251 = vmatpush2.bf16.msra.mxu0 0
        %1252 = vmatprep.subr.bf16.mxu0 0
        %1253 = vmatpush2.bf16.msra.mxu0 0
        %1254 = vmatprep.subr.bf16.mxu0 0
        %1255 = vmatpush2.bf16.msra.mxu0 0
        %1256 = vmatprep.mubr.bf16.mxu0 0
        %1257 = vmatmul.mubr.bf16.gmra.mxu0 %v1218
        %v1258 = vpop.f32.mrf.mxu0
        %v1259 = vadd.f32 0.0, %v1258
        %v1260 = vpop.f32.mrf.mxu0
        %v1261 = vpop.f32.mrf.mxu0
        %v1262 = vpop.f32.mrf.mxu0
        %1263 = vdwg.mxu0
        %1264 = vrot.lane.b32.xlu0 %v959, 64
        %v1265 = vpop.permute.xlu0 %1264
        %v1267 = vsel %vm965, %v1212, 0
        %v1270 = vsel %vm1220, %v1265, 0
        %1272 = vmatprep.subr.bf16.mxu0 0
        %1273 = vmatpush1.bf16.msra.mxu0 0
        %1274 = vmatprep.subr.bf16.mxu0 0
        %1275 = vmatpush1.bf16.msra.mxu0 0
        %1276 = vmatprep.subr.bf16.mxu0 0
        %1277 = vmatpush1.bf16.msra.mxu0 0
        %1278 = vmatprep.subr.bf16.mxu0 0
        %1279 = vmatpush1.bf16.msra.mxu0 0
        %1280 = vmatprep.subr.bf16.mxu0 0
        %1281 = vmatpush1.bf16.msra.mxu0 0
        %1282 = vmatprep.subr.bf16.mxu0 0
        %1283 = vmatpush1.bf16.msra.mxu0 0
        %1284 = vmatprep.subr.bf16.mxu0 0
        %1285 = vmatpush1.bf16.msra.mxu0 0
        %1286 = vmatprep.subr.bf16.mxu0 0
        %1287 = vmatpush1.bf16.msra.mxu0 %v1270
        %1288 = vmatprep.subr.bf16.mxu0 0
        %1289 = vmatpush2.bf16.msra.mxu0 0
        %1290 = vmatprep.subr.bf16.mxu0 0
        %1291 = vmatpush2.bf16.msra.mxu0 0
        %1292 = vmatprep.subr.bf16.mxu0 0
        %1293 = vmatpush2.bf16.msra.mxu0 0
        %1294 = vmatprep.subr.bf16.mxu0 0
        %1295 = vmatpush2.bf16.msra.mxu0 0
        %1296 = vmatprep.subr.bf16.mxu0 0
        %1297 = vmatpush2.bf16.msra.mxu0 0
        %1298 = vmatprep.subr.bf16.mxu0 0
        %1299 = vmatpush2.bf16.msra.mxu0 0
        %1300 = vmatprep.subr.bf16.mxu0 0
        %1301 = vmatpush2.bf16.msra.mxu0 0
        %1302 = vmatprep.subr.bf16.mxu0 0
        %1303 = vmatpush2.bf16.msra.mxu0 0
        %1304 = vmatprep.mubr.bf16.mxu0 0
        %1305 = vmatmul.mubr.bf16.gmra.mxu0 %v1267
        %v1306 = vpop.f32.mrf.mxu0
        %v1307 = vadd.f32 0.0, %v1306
        %v1308 = vpop.f32.mrf.mxu0
        %v1309 = vpop.f32.mrf.mxu0
        %v1310 = vpop.f32.mrf.mxu0
        %1311 = vdwg.mxu0
        %1312 = vrot.lane.b32.xlu0 %v960, 64
        %v1313 = vpop.permute.xlu0 %1312
        %v1315 = vsel %vm965, %v1213, 0
        %v1318 = vsel %vm1220, %v1313, 0
        %1320 = vmatprep.subr.bf16.mxu0 0
        %1321 = vmatpush1.bf16.msra.mxu0 0
        %1322 = vmatprep.subr.bf16.mxu0 0
        %1323 = vmatpush1.bf16.msra.mxu0 0
        %1324 = vmatprep.subr.bf16.mxu0 0
        %1325 = vmatpush1.bf16.msra.mxu0 0
        %1326 = vmatprep.subr.bf16.mxu0 0
        %1327 = vmatpush1.bf16.msra.mxu0 0
        %1328 = vmatprep.subr.bf16.mxu0 0
        %1329 = vmatpush1.bf16.msra.mxu0 0
        %1330 = vmatprep.subr.bf16.mxu0 0
        %1331 = vmatpush1.bf16.msra.mxu0 0
        %1332 = vmatprep.subr.bf16.mxu0 0
        %1333 = vmatpush1.bf16.msra.mxu0 0
        %1334 = vmatprep.subr.bf16.mxu0 0
        %1335 = vmatpush1.bf16.msra.mxu0 %v1318
        %1336 = vmatprep.subr.bf16.mxu0 0
        %1337 = vmatpush2.bf16.msra.mxu0 0
        %1338 = vmatprep.subr.bf16.mxu0 0
        %1339 = vmatpush2.bf16.msra.mxu0 0
        %1340 = vmatprep.subr.bf16.mxu0 0
        %1341 = vmatpush2.bf16.msra.mxu0 0
        %1342 = vmatprep.subr.bf16.mxu0 0
        %1343 = vmatpush2.bf16.msra.mxu0 0
        %1344 = vmatprep.subr.bf16.mxu0 0
        %1345 = vmatpush2.bf16.msra.mxu0 0
        %1346 = vmatprep.subr.bf16.mxu0 0
        %1347 = vmatpush2.bf16.msra.mxu0 0
        %1348 = vmatprep.subr.bf16.mxu0 0
        %1349 = vmatpush2.bf16.msra.mxu0 0
        %1350 = vmatprep.subr.bf16.mxu0 0
        %1351 = vmatpush2.bf16.msra.mxu0 0
        %1352 = vmatprep.mubr.bf16.mxu0 0
        %1353 = vmatmul.mubr.bf16.gmra.mxu0 %v1315
        %v1354 = vpop.f32.mrf.mxu0
        %v1355 = vadd.f32 0.0, %v1354
        %v1356 = vpop.f32.mrf.mxu0
        %v1357 = vpop.f32.mrf.mxu0
        %v1358 = vpop.f32.mrf.mxu0
        %1359 = vdwg.mxu0
        %1360 = vrot.lane.b32.xlu0 %v961, 64
        %v1361 = vpop.permute.xlu0 %1360
        %v1363 = vsel %vm965, %v1214, 0
        %v1366 = vsel %vm1220, %v1361, 0
        %1368 = vmatprep.subr.bf16.mxu0 0
        %1369 = vmatpush1.bf16.msra.mxu0 0
        %1370 = vmatprep.subr.bf16.mxu0 0
        %1371 = vmatpush1.bf16.msra.mxu0 0
        %1372 = vmatprep.subr.bf16.mxu0 0
        %1373 = vmatpush1.bf16.msra.mxu0 0
        %1374 = vmatprep.subr.bf16.mxu0 0
        %1375 = vmatpush1.bf16.msra.mxu0 0
        %1376 = vmatprep.subr.bf16.mxu0 0
        %1377 = vmatpush1.bf16.msra.mxu0 0
        %1378 = vmatprep.subr.bf16.mxu0 0
        %1379 = vmatpush1.bf16.msra.mxu0 0
        %1380 = vmatprep.subr.bf16.mxu0 0
        %1381 = vmatpush1.bf16.msra.mxu0 0
        %1382 = vmatprep.subr.bf16.mxu0 0
        %1383 = vmatpush1.bf16.msra.mxu0 %v1366
        %1384 = vmatprep.subr.bf16.mxu0 0
        %1385 = vmatpush2.bf16.msra.mxu0 0
        %1386 = vmatprep.subr.bf16.mxu0 0
        %1387 = vmatpush2.bf16.msra.mxu0 0
        %1388 = vmatprep.subr.bf16.mxu0 0
        %1389 = vmatpush2.bf16.msra.mxu0 0
        %1390 = vmatprep.subr.bf16.mxu0 0
        %1391 = vmatpush2.bf16.msra.mxu0 0
        %1392 = vmatprep.subr.bf16.mxu0 0
        %1393 = vmatpush2.bf16.msra.mxu0 0
        %1394 = vmatprep.subr.bf16.mxu0 0
        %1395 = vmatpush2.bf16.msra.mxu0 0
        %1396 = vmatprep.subr.bf16.mxu0 0
        %1397 = vmatpush2.bf16.msra.mxu0 0
        %1398 = vmatprep.subr.bf16.mxu0 0
        %1399 = vmatpush2.bf16.msra.mxu0 0
        %1400 = vmatprep.mubr.bf16.mxu0 0
        %1401 = vmatmul.mubr.bf16.gmra.mxu0 %v1363
        %v1402 = vpop.f32.mrf.mxu0
        %v1403 = vadd.f32 0.0, %v1402
        %v1404 = vpop.f32.mrf.mxu0
        %v1405 = vpop.f32.mrf.mxu0
        %v1406 = vpop.f32.mrf.mxu0
        %1407 = vdwg.mxu0
        %1409 = vrot.lane.b32.xlu0 %v1307, 8
        %v1410 = vpop.permute.xlu0 %1409
        %1413 = vrot.lane.b32.xlu0 %v1355, 16
        %v1414 = vpop.permute.xlu0 %1413
        %1417 = vrot.lane.b32.xlu0 %v1403, 24
        %v1418 = vpop.permute.xlu0 %1417
        %v1420 = vsel %vm965, %v1259, %v1410
        %vm1421 = vcmask 130048
        %v1422 = vsel %vm1421, %v1420, %v1414
        %vm1423 = vcmask 195584
        %v1424 = vsel %vm1423, %v1422, %v1418
        %v1425 = vpack.c.bf16 %v1424, %v1424
        %v1430 = vunpack.c.l.b16 %v847
        %v1431 = vunpack.c.l.b16 %v848
        %v1432 = vunpack.c.l.b16 %v849
        %v1433 = vunpack.c.l.b16 %v850
        %v1434 = vpack.c.b16 %v1431, %v1430
        %v1435 = vpack.c.b16 %v1433, %v1432
        %v1439 = vsel %vm856, %v1425, 0
        %1441 = vmatprep.subr.bf16.mxu0 0
        %1442 = vmatpush1.bf16.msra.mxu0 0
        %1443 = vmatprep.subr.bf16.mxu0 0
        %1444 = vmatpush1.bf16.msra.mxu0 0
        %1445 = vmatprep.subr.bf16.mxu0 0
        %1446 = vmatpush1.bf16.msra.mxu0 0
        %1447 = vmatprep.subr.bf16.mxu0 0
        %1448 = vmatpush1.bf16.msra.mxu0 0
        %1449 = vmatprep.subr.bf16.mxu0 0
        %1450 = vmatpush1.bf16.msra.mxu0 0
        %1451 = vmatprep.subr.bf16.mxu0 0
        %1452 = vmatpush1.bf16.msra.mxu0 0
        %1453 = vmatprep.subr.bf16.mxu0 0
        %1454 = vmatpush1.bf16.msra.mxu0 %v1435
        %1455 = vmatprep.subr.bf16.mxu0 0
        %1456 = vmatpush1.bf16.msra.mxu0 %v1434
        %1457 = vmatprep.subr.bf16.mxu0 0
        %1458 = vmatpush2.bf16.msra.mxu0 0
        %1459 = vmatprep.subr.bf16.mxu0 0
        %1460 = vmatpush2.bf16.msra.mxu0 0
        %1461 = vmatprep.subr.bf16.mxu0 0
        %1462 = vmatpush2.bf16.msra.mxu0 0
        %1463 = vmatprep.subr.bf16.mxu0 0
        %1464 = vmatpush2.bf16.msra.mxu0 0
        %1465 = vmatprep.subr.bf16.mxu0 0
        %1466 = vmatpush2.bf16.msra.mxu0 0
        %1467 = vmatprep.subr.bf16.mxu0 0
        %1468 = vmatpush2.bf16.msra.mxu0 0
        %1469 = vmatprep.subr.bf16.mxu0 0
        %1470 = vmatpush2.bf16.msra.mxu0 0
        %1471 = vmatprep.subr.bf16.mxu0 0
        %1472 = vmatpush2.bf16.msra.mxu0 0
        %1473 = vmatprep.mubr.bf16.mxu0 0
        %1474 = vmatmul.mubr.bf16.gmra.mxu0 %v1439
        %v1475 = vpop.f32.mrf.mxu0
        %v1476 = vadd.f32 0.0, %v1475
        %v1477 = vpop.f32.mrf.mxu0
        %v1478 = vpop.f32.mrf.mxu0
        %v1479 = vpop.f32.mrf.mxu0
        %1480 = vdwg.mxu0
        %v1481 = vadd.f32 %v831, %v1476
        %v1482 = vlaneseq
        %v1483 = vshrl.u32 %v1482, 7
        %v1484 = vsub.s32 0, %v1483
        %v1485 = vrot.slane %v855, %v1484
        %v1486 = vadd.f32 %v1481, %v1485
        %v1487 = vsel %vm856, %v1486, 0.0
        %1488 = vadd.xlane.f32.xlu0 %v1487
        %v1489 = vpop.xlane.xlu0 %1488
        %v1490 = vmul.f32 %v1489, %v860
        %v1491 = vsub.f32 %v1486, %v1490
        %v1492 = vmul.f32 %v1491, %v1491
        %v1493 = vsel %vm856, %v1492, 0.0
        %1494 = vadd.xlane.f32.xlu0 %v1493
        %v1495 = vpop.xlane.xlu0 %1494
        %v1496 = vmul.f32 %v1495, 0.032258064
        %v1497 = vrsqrt.pop %v1496
        %v1498 = vmul.f32 %v1496, %v1497
        %vm1499 = vcmp.eq.f32.partialorder %v1496, inf
        %v1500 = vsel %vm1499, %v1496, %v1498
        %vm1501 = vcmp.eq.f32.partialorder %v1496, 0.0
        %v1502 = vand.u32 %v1496, 2147483648
        %v1503 = vsel %vm1501, %v1502, %v1500
        %v1504 = vadd.f32 %v1503, 1e-06
        %v1505 = vrcp.pop %v1504
        %v1506 = vlaneseq
        %v1507 = vshrl.u32 %v1506, 7
        %v1508 = vsub.s32 1, %v1507
        %v1509 = vrot.slane %v836, %v1508
        %v1510 = vmul.f32 %v1509, %v1491
        %v1511 = vmul.f32 %v1510, %v1505
        %v1512 = vlaneseq
        %v1513 = vshrl.u32 %v1512, 7
        %v1514 = vsub.s32 1, %v1513
        %v1515 = vrot.slane %v837, %v1514
        %v1516 = vadd.f32 %v1511, %v1515
        %v1517 = vpack.c.bf16 %v1516, %v1516
        %v1518 = vlaneseq
        %v1519 = vshrl.u32 %v1518, 7
        %v1520 = vsub.s32 1, %v1519
        %v1521 = vrot.slane %v846, %v1520
        %v1526 = vunpack.c.l.b16 %v842
        %v1527 = vunpack.c.l.b16 %v843
        %v1528 = vunpack.c.l.b16 %v844
        %v1529 = vunpack.c.l.b16 %v845
        %v1530 = vpack.c.b16 %v1527, %v1526
        %v1531 = vpack.c.b16 %v1529, %v1528
        %v1535 = vsel %vm856, %v1517, 0
        %1537 = vmatprep.subr.bf16.mxu0 0
        %1538 = vmatpush1.bf16.msra.mxu0 0
        %1539 = vmatprep.subr.bf16.mxu0 0
        %1540 = vmatpush1.bf16.msra.mxu0 0
        %1541 = vmatprep.subr.bf16.mxu0 0
        %1542 = vmatpush1.bf16.msra.mxu0 0
        %1543 = vmatprep.subr.bf16.mxu0 0
        %1544 = vmatpush1.bf16.msra.mxu0 0
        %1545 = vmatprep.subr.bf16.mxu0 0
        %1546 = vmatpush1.bf16.msra.mxu0 0
        %1547 = vmatprep.subr.bf16.mxu0 0
        %1548 = vmatpush1.bf16.msra.mxu0 0
        %1549 = vmatprep.subr.bf16.mxu0 0
        %1550 = vmatpush1.bf16.msra.mxu0 %v1531
        %1551 = vmatprep.subr.bf16.mxu0 0
        %1552 = vmatpush1.bf16.msra.mxu0 %v1530
        %1553 = vmatprep.subr.bf16.mxu0 0
        %1554 = vmatpush2.bf16.msra.mxu0 0
        %1555 = vmatprep.subr.bf16.mxu0 0
        %1556 = vmatpush2.bf16.msra.mxu0 0
        %1557 = vmatprep.subr.bf16.mxu0 0
        %1558 = vmatpush2.bf16.msra.mxu0 0
        %1559 = vmatprep.subr.bf16.mxu0 0
        %1560 = vmatpush2.bf16.msra.mxu0 0
        %1561 = vmatprep.subr.bf16.mxu0 0
        %1562 = vmatpush2.bf16.msra.mxu0 0
        %1563 = vmatprep.subr.bf16.mxu0 0
        %1564 = vmatpush2.bf16.msra.mxu0 0
        %1565 = vmatprep.subr.bf16.mxu0 0
        %1566 = vmatpush2.bf16.msra.mxu0 0
        %1567 = vmatprep.subr.bf16.mxu0 0
        %1568 = vmatpush2.bf16.msra.mxu0 0
        %1569 = vmatprep.mubr.bf16.mxu0 0
        %1570 = vmatmul.mubr.bf16.gmra.mxu0 %v1535
        %v1571 = vpop.f32.mrf.mxu0
        %v1572 = vadd.f32 %v1521, %v1571
        %v1573 = vpop.f32.mrf.mxu0
        %v1574 = vpop.f32.mrf.mxu0
        %v1575 = vpop.f32.mrf.mxu0
        %1576 = vdwg.mxu0
        %1577 = vrot.lane.b32.xlu0 %v1530, 96
        %v1578 = vpop.permute.xlu0 %1577
        %1579 = vrot.lane.b32.xlu0 %v1531, 96
        %v1580 = vpop.permute.xlu0 %1579
        %1584 = vrot.lane.b32.xlu0 %v1521, 96
        %v1585 = vpop.permute.xlu0 %1584
        %v1588 = vsel %vm856, %v833, 0
        %1590 = vmatprep.subr.bf16.mxu0 0
        %1591 = vmatpush1.bf16.msra.mxu0 0
        %1592 = vmatprep.subr.bf16.mxu0 0
        %1593 = vmatpush1.bf16.msra.mxu0 0
        %1594 = vmatprep.subr.bf16.mxu0 0
        %1595 = vmatpush1.bf16.msra.mxu0 0
        %1596 = vmatprep.subr.bf16.mxu0 0
        %1597 = vmatpush1.bf16.msra.mxu0 0
        %1598 = vmatprep.subr.bf16.mxu0 0
        %1599 = vmatpush1.bf16.msra.mxu0 0
        %1600 = vmatprep.subr.bf16.mxu0 0
        %1601 = vmatpush1.bf16.msra.mxu0 0
        %1602 = vmatprep.subr.bf16.mxu0 0
        %1603 = vmatpush1.bf16.msra.mxu0 %v1580
        %1604 = vmatprep.subr.bf16.mxu0 0
        %1605 = vmatpush1.bf16.msra.mxu0 %v1578
        %1606 = vmatprep.subr.bf16.mxu0 0
        %1607 = vmatpush2.bf16.msra.mxu0 0
        %1608 = vmatprep.subr.bf16.mxu0 0
        %1609 = vmatpush2.bf16.msra.mxu0 0
        %1610 = vmatprep.subr.bf16.mxu0 0
        %1611 = vmatpush2.bf16.msra.mxu0 0
        %1612 = vmatprep.subr.bf16.mxu0 0
        %1613 = vmatpush2.bf16.msra.mxu0 0
        %1614 = vmatprep.subr.bf16.mxu0 0
        %1615 = vmatpush2.bf16.msra.mxu0 0
        %1616 = vmatprep.subr.bf16.mxu0 0
        %1617 = vmatpush2.bf16.msra.mxu0 0
        %1618 = vmatprep.subr.bf16.mxu0 0
        %1619 = vmatpush2.bf16.msra.mxu0 0
        %1620 = vmatprep.subr.bf16.mxu0 0
        %1621 = vmatpush2.bf16.msra.mxu0 0
        %1622 = vmatprep.mubr.bf16.mxu0 0
        %1623 = vmatmul.mubr.bf16.gmra.mxu0 %v1588
        %v1624 = vpop.f32.mrf.mxu0
        %v1625 = vadd.f32 %v1585, %v1624
        %v1626 = vpop.f32.mrf.mxu0
        %v1627 = vpop.f32.mrf.mxu0
        %v1628 = vpop.f32.mrf.mxu0
        %1629 = vdwg.mxu0
        %1631 = vrot.lane.b32.xlu0 %v1572, 120
        %v1632 = vpop.permute.xlu0 %1631
        %1634 = vrot.lane.b32.xlu0 %v1572, 112
        %v1635 = vpop.permute.xlu0 %1634
        %1637 = vrot.lane.b32.xlu0 %v1572, 104
        %v1638 = vpop.permute.xlu0 %1637
        %v1640 = vpack.c.bf16 %v1572, %v1572
        %v1641 = vpack.c.bf16 %v1632, %v1632
        %v1642 = vpack.c.bf16 %v1635, %v1635
        %v1643 = vpack.c.bf16 %v1638, %v1638
        %1645 = vrot.lane.b32.xlu0 %v1625, 120
        %v1646 = vpop.permute.xlu0 %1645
        %1648 = vrot.lane.b32.xlu0 %v1625, 112
        %v1649 = vpop.permute.xlu0 %1648
        %1651 = vrot.lane.b32.xlu0 %v1625, 104
        %v1652 = vpop.permute.xlu0 %1651
        %v1654 = vpack.c.bf16 %v1625, %v1625
        %v1655 = vpack.c.bf16 %v1646, %v1646
        %v1656 = vpack.c.bf16 %v1649, %v1649
        %v1657 = vpack.c.bf16 %v1652, %v1652
        %v1659 = vsel %vm965, %v1640, 0
        %v1662 = vsel %vm965, %v1654, 0
        %1664 = vmatprep.subr.bf16.mxu0 0
        %1665 = vmatpush1.bf16.xpose.msra.mxu0 0
        %1666 = vmatprep.subr.bf16.mxu0 0
        %1667 = vmatpush1.bf16.xpose.msra.mxu0 0
        %1668 = vmatprep.subr.bf16.mxu0 0
        %1669 = vmatpush1.bf16.xpose.msra.mxu0 0
        %1670 = vmatprep.subr.bf16.mxu0 0
        %1671 = vmatpush1.bf16.xpose.msra.mxu0 0
        %1672 = vmatprep.subr.bf16.mxu0 0
        %1673 = vmatpush1.bf16.xpose.msra.mxu0 0
        %1674 = vmatprep.subr.bf16.mxu0 0
        %1675 = vmatpush1.bf16.xpose.msra.mxu0 0
        %1676 = vmatprep.subr.bf16.mxu0 0
        %1677 = vmatpush1.bf16.xpose.msra.mxu0 0
        %1678 = vmatprep.subr.bf16.mxu0 0
        %1679 = vmatpush1.bf16.xpose.msra.mxu0 %v1662
        %1680 = vmatprep.subr.bf16.mxu0 0
        %1681 = vmatpush2.bf16.xpose.msra.mxu0 0
        %1682 = vmatprep.subr.bf16.mxu0 0
        %1683 = vmatpush2.bf16.xpose.msra.mxu0 0
        %1684 = vmatprep.subr.bf16.mxu0 0
        %1685 = vmatpush2.bf16.xpose.msra.mxu0 0
        %1686 = vmatprep.subr.bf16.mxu0 0
        %1687 = vmatpush2.bf16.xpose.msra.mxu0 0
        %1688 = vmatprep.subr.bf16.mxu0 0
        %1689 = vmatpush2.bf16.xpose.msra.mxu0 0
        %1690 = vmatprep.subr.bf16.mxu0 0
        %1691 = vmatpush2.bf16.xpose.msra.mxu0 0
        %1692 = vmatprep.subr.bf16.mxu0 0
        %1693 = vmatpush2.bf16.xpose.msra.mxu0 0
        %1694 = vmatprep.subr.bf16.mxu0 0
        %1695 = vmatpush2.bf16.xpose.msra.mxu0 0
        %1696 = vmatprep.mubr.bf16.mxu0 0
        %1697 = vmatmul.mubr.bf16.gmra.mxu0 %v1659
        %v1698 = vpop.f32.mrf.mxu0
        %v1699 = vadd.f32 0.0, %v1698
        %v1700 = vpop.f32.mrf.mxu0
        %v1701 = vpop.f32.mrf.mxu0
        %v1702 = vpop.f32.mrf.mxu0
        %1703 = vdwg.mxu0
        %v1705 = vsel %vm965, %v1641, 0
        %v1708 = vsel %vm965, %v1655, 0
        %1710 = vmatprep.subr.bf16.mxu0 0
        %1711 = vmatpush1.bf16.xpose.msra.mxu0 0
        %1712 = vmatprep.subr.bf16.mxu0 0
        %1713 = vmatpush1.bf16.xpose.msra.mxu0 0
        %1714 = vmatprep.subr.bf16.mxu0 0
        %1715 = vmatpush1.bf16.xpose.msra.mxu0 0
        %1716 = vmatprep.subr.bf16.mxu0 0
        %1717 = vmatpush1.bf16.xpose.msra.mxu0 0
        %1718 = vmatprep.subr.bf16.mxu0 0
        %1719 = vmatpush1.bf16.xpose.msra.mxu0 0
        %1720 = vmatprep.subr.bf16.mxu0 0
        %1721 = vmatpush1.bf16.xpose.msra.mxu0 0
        %1722 = vmatprep.subr.bf16.mxu0 0
        %1723 = vmatpush1.bf16.xpose.msra.mxu0 0
        %1724 = vmatprep.subr.bf16.mxu0 0
        %1725 = vmatpush1.bf16.xpose.msra.mxu0 %v1708
        %1726 = vmatprep.subr.bf16.mxu0 0
        %1727 = vmatpush2.bf16.xpose.msra.mxu0 0
        %1728 = vmatprep.subr.bf16.mxu0 0
        %1729 = vmatpush2.bf16.xpose.msra.mxu0 0
        %1730 = vmatprep.subr.bf16.mxu0 0
        %1731 = vmatpush2.bf16.xpose.msra.mxu0 0
        %1732 = vmatprep.subr.bf16.mxu0 0
        %1733 = vmatpush2.bf16.xpose.msra.mxu0 0
        %1734 = vmatprep.subr.bf16.mxu0 0
        %1735 = vmatpush2.bf16.xpose.msra.mxu0 0
        %1736 = vmatprep.subr.bf16.mxu0 0
        %1737 = vmatpush2.bf16.xpose.msra.mxu0 0
        %1738 = vmatprep.subr.bf16.mxu0 0
        %1739 = vmatpush2.bf16.xpose.msra.mxu0 0
        %1740 = vmatprep.subr.bf16.mxu0 0
        %1741 = vmatpush2.bf16.xpose.msra.mxu0 0
        %1742 = vmatprep.mubr.bf16.mxu0 0
        %1743 = vmatmul.mubr.bf16.gmra.mxu0 %v1705
        %v1744 = vpop.f32.mrf.mxu0
        %v1745 = vadd.f32 0.0, %v1744
        %v1746 = vpop.f32.mrf.mxu0
        %v1747 = vpop.f32.mrf.mxu0
        %v1748 = vpop.f32.mrf.mxu0
        %1749 = vdwg.mxu0
        %v1751 = vsel %vm965, %v1642, 0
        %v1754 = vsel %vm965, %v1656, 0
        %1756 = vmatprep.subr.bf16.mxu0 0
        %1757 = vmatpush1.bf16.xpose.msra.mxu0 0
        %1758 = vmatprep.subr.bf16.mxu0 0
        %1759 = vmatpush1.bf16.xpose.msra.mxu0 0
        %1760 = vmatprep.subr.bf16.mxu0 0
        %1761 = vmatpush1.bf16.xpose.msra.mxu0 0
        %1762 = vmatprep.subr.bf16.mxu0 0
        %1763 = vmatpush1.bf16.xpose.msra.mxu0 0
        %1764 = vmatprep.subr.bf16.mxu0 0
        %1765 = vmatpush1.bf16.xpose.msra.mxu0 0
        %1766 = vmatprep.subr.bf16.mxu0 0
        %1767 = vmatpush1.bf16.xpose.msra.mxu0 0
        %1768 = vmatprep.subr.bf16.mxu0 0
        %1769 = vmatpush1.bf16.xpose.msra.mxu0 0
        %1770 = vmatprep.subr.bf16.mxu0 0
        %1771 = vmatpush1.bf16.xpose.msra.mxu0 %v1754
        %1772 = vmatprep.subr.bf16.mxu0 0
        %1773 = vmatpush2.bf16.xpose.msra.mxu0 0
        %1774 = vmatprep.subr.bf16.mxu0 0
        %1775 = vmatpush2.bf16.xpose.msra.mxu0 0
        %1776 = vmatprep.subr.bf16.mxu0 0
        %1777 = vmatpush2.bf16.xpose.msra.mxu0 0
        %1778 = vmatprep.subr.bf16.mxu0 0
        %1779 = vmatpush2.bf16.xpose.msra.mxu0 0
        %1780 = vmatprep.subr.bf16.mxu0 0
        %1781 = vmatpush2.bf16.xpose.msra.mxu0 0
        %1782 = vmatprep.subr.bf16.mxu0 0
        %1783 = vmatpush2.bf16.xpose.msra.mxu0 0
        %1784 = vmatprep.subr.bf16.mxu0 0
        %1785 = vmatpush2.bf16.xpose.msra.mxu0 0
        %1786 = vmatprep.subr.bf16.mxu0 0
        %1787 = vmatpush2.bf16.xpose.msra.mxu0 0
        %1788 = vmatprep.mubr.bf16.mxu0 0
        %1789 = vmatmul.mubr.bf16.gmra.mxu0 %v1751
        %v1790 = vpop.f32.mrf.mxu0
        %v1791 = vadd.f32 0.0, %v1790
        %v1792 = vpop.f32.mrf.mxu0
        %v1793 = vpop.f32.mrf.mxu0
        %v1794 = vpop.f32.mrf.mxu0
        %1795 = vdwg.mxu0
        %v1797 = vsel %vm965, %v1643, 0
        %v1800 = vsel %vm965, %v1657, 0
        %1802 = vmatprep.subr.bf16.mxu0 0
        %1803 = vmatpush1.bf16.xpose.msra.mxu0 0
        %1804 = vmatprep.subr.bf16.mxu0 0
        %1805 = vmatpush1.bf16.xpose.msra.mxu0 0
        %1806 = vmatprep.subr.bf16.mxu0 0
        %1807 = vmatpush1.bf16.xpose.msra.mxu0 0
        %1808 = vmatprep.subr.bf16.mxu0 0
        %1809 = vmatpush1.bf16.xpose.msra.mxu0 0
        %1810 = vmatprep.subr.bf16.mxu0 0
        %1811 = vmatpush1.bf16.xpose.msra.mxu0 0
        %1812 = vmatprep.subr.bf16.mxu0 0
        %1813 = vmatpush1.bf16.xpose.msra.mxu0 0
        %1814 = vmatprep.subr.bf16.mxu0 0
        %1815 = vmatpush1.bf16.xpose.msra.mxu0 0
        %1816 = vmatprep.subr.bf16.mxu0 0
        %1817 = vmatpush1.bf16.xpose.msra.mxu0 %v1800
        %1818 = vmatprep.subr.bf16.mxu0 0
        %1819 = vmatpush2.bf16.xpose.msra.mxu0 0
        %1820 = vmatprep.subr.bf16.mxu0 0
        %1821 = vmatpush2.bf16.xpose.msra.mxu0 0
        %1822 = vmatprep.subr.bf16.mxu0 0
        %1823 = vmatpush2.bf16.xpose.msra.mxu0 0
        %1824 = vmatprep.subr.bf16.mxu0 0
        %1825 = vmatpush2.bf16.xpose.msra.mxu0 0
        %1826 = vmatprep.subr.bf16.mxu0 0
        %1827 = vmatpush2.bf16.xpose.msra.mxu0 0
        %1828 = vmatprep.subr.bf16.mxu0 0
        %1829 = vmatpush2.bf16.xpose.msra.mxu0 0
        %1830 = vmatprep.subr.bf16.mxu0 0
        %1831 = vmatpush2.bf16.xpose.msra.mxu0 0
        %1832 = vmatprep.subr.bf16.mxu0 0
        %1833 = vmatpush2.bf16.xpose.msra.mxu0 0
        %1834 = vmatprep.mubr.bf16.mxu0 0
        %1835 = vmatmul.mubr.bf16.gmra.mxu0 %v1797
        %v1836 = vpop.f32.mrf.mxu0
        %v1837 = vadd.f32 0.0, %v1836
        %v1838 = vpop.f32.mrf.mxu0
        %v1839 = vpop.f32.mrf.mxu0
        %v1840 = vpop.f32.mrf.mxu0
        %1841 = vdwg.mxu0
        %v1842 = vmul.f32 %v1699, 0.35355338
        %v1843 = vmul.f32 %v1745, 0.35355338
        %v1844 = vmul.f32 %v1791, 0.35355338
        %v1845 = vmul.f32 %v1837, 0.35355338
        %v1847 = vlaneseq
        %v1848 = vshrl.u32 %v1847, 7
        %v1849 = vsub.s32 0, %v1848
        %v1850 = vrot.slane %v834, %v1849
        %v1852 = vadd.f32 %v1842, %v1850
        %v1853 = vadd.f32 %v1843, %v1850
        %v1854 = vadd.f32 %v1844, %v1850
        %v1855 = vadd.f32 %v1845, %v1850
        %v1856 = vsel %vm965, %v1852, -inf
        %1857 = vmax.xlane.f32.xlu0 %v1856
        %v1858 = vpop.xlane.xlu0 %1857
        %v1859 = vsel %vm965, %v1853, -inf
        %1860 = vmax.xlane.f32.xlu0 %v1859
        %v1861 = vpop.xlane.xlu0 %1860
        %v1862 = vsel %vm965, %v1854, -inf
        %1863 = vmax.xlane.f32.xlu0 %v1862
        %v1864 = vpop.xlane.xlu0 %1863
        %v1865 = vsel %vm965, %v1855, -inf
        %1866 = vmax.xlane.f32.xlu0 %v1865
        %v1867 = vpop.xlane.xlu0 %1866
        %v1868 = vsub.f32 %v1852, %v1858
        %v1869 = vsub.f32 %v1853, %v1861
        %v1870 = vsub.f32 %v1854, %v1864
        %v1871 = vsub.f32 %v1855, %v1867
        %v1872 = vmul.f32 %v1868, 1.442695
        %v1873 = vpow.pop %v1872
        %v1874 = vmul.f32 %v1869, 1.442695
        %v1875 = vpow.pop %v1874
        %v1876 = vmul.f32 %v1870, 1.442695
        %v1877 = vpow.pop %v1876
        %v1878 = vmul.f32 %v1871, 1.442695
        %v1879 = vpow.pop %v1878
        %v1880 = vsel %vm965, %v1873, 0.0
        %1881 = vadd.xlane.f32.xlu0 %v1880
        %v1882 = vpop.xlane.xlu0 %1881
        %v1883 = vsel %vm965, %v1875, 0.0
        %1884 = vadd.xlane.f32.xlu0 %v1883
        %v1885 = vpop.xlane.xlu0 %1884
        %v1886 = vsel %vm965, %v1877, 0.0
        %1887 = vadd.xlane.f32.xlu0 %v1886
        %v1888 = vpop.xlane.xlu0 %1887
        %v1889 = vsel %vm965, %v1879, 0.0
        %1890 = vadd.xlane.f32.xlu0 %v1889
        %v1891 = vpop.xlane.xlu0 %1890
        %v1892 = vrcp.pop %v1882
        %v1893 = vrcp.pop %v1885
        %v1894 = vrcp.pop %v1888
        %v1895 = vrcp.pop %v1891
        %v1896 = vmul.f32 %v1873, %v1892
        %v1897 = vmul.f32 %v1875, %v1893
        %v1898 = vmul.f32 %v1877, %v1894
        %v1899 = vmul.f32 %v1879, %v1895
        %v1900 = vpack.c.bf16 %v1896, %v1896
        %v1901 = vpack.c.bf16 %v1897, %v1897
        %v1902 = vpack.c.bf16 %v1898, %v1898
        %v1903 = vpack.c.bf16 %v1899, %v1899
        %1905 = vrot.lane.b32.xlu0 %v1654, 96
        %v1906 = vpop.permute.xlu0 %1905
        %v1908 = vsel %vm965, %v1900, 0
        %v1911 = vsel %vm1220, %v1906, 0
        %1913 = vmatprep.subr.bf16.mxu0 0
        %1914 = vmatpush1.bf16.msra.mxu0 0
        %1915 = vmatprep.subr.bf16.mxu0 0
        %1916 = vmatpush1.bf16.msra.mxu0 0
        %1917 = vmatprep.subr.bf16.mxu0 0
        %1918 = vmatpush1.bf16.msra.mxu0 0
        %1919 = vmatprep.subr.bf16.mxu0 0
        %1920 = vmatpush1.bf16.msra.mxu0 0
        %1921 = vmatprep.subr.bf16.mxu0 0
        %1922 = vmatpush1.bf16.msra.mxu0 0
        %1923 = vmatprep.subr.bf16.mxu0 0
        %1924 = vmatpush1.bf16.msra.mxu0 0
        %1925 = vmatprep.subr.bf16.mxu0 0
        %1926 = vmatpush1.bf16.msra.mxu0 0
        %1927 = vmatprep.subr.bf16.mxu0 0
        %1928 = vmatpush1.bf16.msra.mxu0 %v1911
        %1929 = vmatprep.subr.bf16.mxu0 0
        %1930 = vmatpush2.bf16.msra.mxu0 0
        %1931 = vmatprep.subr.bf16.mxu0 0
        %1932 = vmatpush2.bf16.msra.mxu0 0
        %1933 = vmatprep.subr.bf16.mxu0 0
        %1934 = vmatpush2.bf16.msra.mxu0 0
        %1935 = vmatprep.subr.bf16.mxu0 0
        %1936 = vmatpush2.bf16.msra.mxu0 0
        %1937 = vmatprep.subr.bf16.mxu0 0
        %1938 = vmatpush2.bf16.msra.mxu0 0
        %1939 = vmatprep.subr.bf16.mxu0 0
        %1940 = vmatpush2.bf16.msra.mxu0 0
        %1941 = vmatprep.subr.bf16.mxu0 0
        %1942 = vmatpush2.bf16.msra.mxu0 0
        %1943 = vmatprep.subr.bf16.mxu0 0
        %1944 = vmatpush2.bf16.msra.mxu0 0
        %1945 = vmatprep.mubr.bf16.mxu0 0
        %1946 = vmatmul.mubr.bf16.gmra.mxu0 %v1908
        %v1947 = vpop.f32.mrf.mxu0
        %v1948 = vadd.f32 0.0, %v1947
        %v1949 = vpop.f32.mrf.mxu0
        %v1950 = vpop.f32.mrf.mxu0
        %v1951 = vpop.f32.mrf.mxu0
        %1952 = vdwg.mxu0
        %1954 = vrot.lane.b32.xlu0 %v1655, 96
        %v1955 = vpop.permute.xlu0 %1954
        %v1957 = vsel %vm965, %v1901, 0
        %v1960 = vsel %vm1220, %v1955, 0
        %1962 = vmatprep.subr.bf16.mxu0 0
        %1963 = vmatpush1.bf16.msra.mxu0 0
        %1964 = vmatprep.subr.bf16.mxu0 0
        %1965 = vmatpush1.bf16.msra.mxu0 0
        %1966 = vmatprep.subr.bf16.mxu0 0
        %1967 = vmatpush1.bf16.msra.mxu0 0
        %1968 = vmatprep.subr.bf16.mxu0 0
        %1969 = vmatpush1.bf16.msra.mxu0 0
        %1970 = vmatprep.subr.bf16.mxu0 0
        %1971 = vmatpush1.bf16.msra.mxu0 0
        %1972 = vmatprep.subr.bf16.mxu0 0
        %1973 = vmatpush1.bf16.msra.mxu0 0
        %1974 = vmatprep.subr.bf16.mxu0 0
        %1975 = vmatpush1.bf16.msra.mxu0 0
        %1976 = vmatprep.subr.bf16.mxu0 0
        %1977 = vmatpush1.bf16.msra.mxu0 %v1960
        %1978 = vmatprep.subr.bf16.mxu0 0
        %1979 = vmatpush2.bf16.msra.mxu0 0
        %1980 = vmatprep.subr.bf16.mxu0 0
        %1981 = vmatpush2.bf16.msra.mxu0 0
        %1982 = vmatprep.subr.bf16.mxu0 0
        %1983 = vmatpush2.bf16.msra.mxu0 0
        %1984 = vmatprep.subr.bf16.mxu0 0
        %1985 = vmatpush2.bf16.msra.mxu0 0
        %1986 = vmatprep.subr.bf16.mxu0 0
        %1987 = vmatpush2.bf16.msra.mxu0 0
        %1988 = vmatprep.subr.bf16.mxu0 0
        %1989 = vmatpush2.bf16.msra.mxu0 0
        %1990 = vmatprep.subr.bf16.mxu0 0
        %1991 = vmatpush2.bf16.msra.mxu0 0
        %1992 = vmatprep.subr.bf16.mxu0 0
        %1993 = vmatpush2.bf16.msra.mxu0 0
        %1994 = vmatprep.mubr.bf16.mxu0 0
        %1995 = vmatmul.mubr.bf16.gmra.mxu0 %v1957
        %v1996 = vpop.f32.mrf.mxu0
        %v1997 = vadd.f32 0.0, %v1996
        %v1998 = vpop.f32.mrf.mxu0
        %v1999 = vpop.f32.mrf.mxu0
        %v2000 = vpop.f32.mrf.mxu0
        %2001 = vdwg.mxu0
        %2003 = vrot.lane.b32.xlu0 %v1656, 96
        %v2004 = vpop.permute.xlu0 %2003
        %v2006 = vsel %vm965, %v1902, 0
        %v2009 = vsel %vm1220, %v2004, 0
        %2011 = vmatprep.subr.bf16.mxu0 0
        %2012 = vmatpush1.bf16.msra.mxu0 0
        %2013 = vmatprep.subr.bf16.mxu0 0
        %2014 = vmatpush1.bf16.msra.mxu0 0
        %2015 = vmatprep.subr.bf16.mxu0 0
        %2016 = vmatpush1.bf16.msra.mxu0 0
        %2017 = vmatprep.subr.bf16.mxu0 0
        %2018 = vmatpush1.bf16.msra.mxu0 0
        %2019 = vmatprep.subr.bf16.mxu0 0
        %2020 = vmatpush1.bf16.msra.mxu0 0
        %2021 = vmatprep.subr.bf16.mxu0 0
        %2022 = vmatpush1.bf16.msra.mxu0 0
        %2023 = vmatprep.subr.bf16.mxu0 0
        %2024 = vmatpush1.bf16.msra.mxu0 0
        %2025 = vmatprep.subr.bf16.mxu0 0
        %2026 = vmatpush1.bf16.msra.mxu0 %v2009
        %2027 = vmatprep.subr.bf16.mxu0 0
        %2028 = vmatpush2.bf16.msra.mxu0 0
        %2029 = vmatprep.subr.bf16.mxu0 0
        %2030 = vmatpush2.bf16.msra.mxu0 0
        %2031 = vmatprep.subr.bf16.mxu0 0
        %2032 = vmatpush2.bf16.msra.mxu0 0
        %2033 = vmatprep.subr.bf16.mxu0 0
        %2034 = vmatpush2.bf16.msra.mxu0 0
        %2035 = vmatprep.subr.bf16.mxu0 0
        %2036 = vmatpush2.bf16.msra.mxu0 0
        %2037 = vmatprep.subr.bf16.mxu0 0
        %2038 = vmatpush2.bf16.msra.mxu0 0
        %2039 = vmatprep.subr.bf16.mxu0 0
        %2040 = vmatpush2.bf16.msra.mxu0 0
        %2041 = vmatprep.subr.bf16.mxu0 0
        %2042 = vmatpush2.bf16.msra.mxu0 0
        %2043 = vmatprep.mubr.bf16.mxu0 0
        %2044 = vmatmul.mubr.bf16.gmra.mxu0 %v2006
        %v2045 = vpop.f32.mrf.mxu0
        %v2046 = vadd.f32 0.0, %v2045
        %v2047 = vpop.f32.mrf.mxu0
        %v2048 = vpop.f32.mrf.mxu0
        %v2049 = vpop.f32.mrf.mxu0
        %2050 = vdwg.mxu0
        %2052 = vrot.lane.b32.xlu0 %v1657, 96
        %v2053 = vpop.permute.xlu0 %2052
        %v2055 = vsel %vm965, %v1903, 0
        %v2058 = vsel %vm1220, %v2053, 0
        %2060 = vmatprep.subr.bf16.mxu0 0
        %2061 = vmatpush1.bf16.msra.mxu0 0
        %2062 = vmatprep.subr.bf16.mxu0 0
        %2063 = vmatpush1.bf16.msra.mxu0 0
        %2064 = vmatprep.subr.bf16.mxu0 0
        %2065 = vmatpush1.bf16.msra.mxu0 0
        %2066 = vmatprep.subr.bf16.mxu0 0
        %2067 = vmatpush1.bf16.msra.mxu0 0
        %2068 = vmatprep.subr.bf16.mxu0 0
        %2069 = vmatpush1.bf16.msra.mxu0 0
        %2070 = vmatprep.subr.bf16.mxu0 0
        %2071 = vmatpush1.bf16.msra.mxu0 0
        %2072 = vmatprep.subr.bf16.mxu0 0
        %2073 = vmatpush1.bf16.msra.mxu0 0
        %2074 = vmatprep.subr.bf16.mxu0 0
        %2075 = vmatpush1.bf16.msra.mxu0 %v2058
        %2076 = vmatprep.subr.bf16.mxu0 0
        %2077 = vmatpush2.bf16.msra.mxu0 0
        %2078 = vmatprep.subr.bf16.mxu0 0
        %2079 = vmatpush2.bf16.msra.mxu0 0
        %2080 = vmatprep.subr.bf16.mxu0 0
        %2081 = vmatpush2.bf16.msra.mxu0 0
        %2082 = vmatprep.subr.bf16.mxu0 0
        %2083 = vmatpush2.bf16.msra.mxu0 0
        %2084 = vmatprep.subr.bf16.mxu0 0
        %2085 = vmatpush2.bf16.msra.mxu0 0
        %2086 = vmatprep.subr.bf16.mxu0 0
        %2087 = vmatpush2.bf16.msra.mxu0 0
        %2088 = vmatprep.subr.bf16.mxu0 0
        %2089 = vmatpush2.bf16.msra.mxu0 0
        %2090 = vmatprep.subr.bf16.mxu0 0
        %2091 = vmatpush2.bf16.msra.mxu0 0
        %2092 = vmatprep.mubr.bf16.mxu0 0
        %2093 = vmatmul.mubr.bf16.gmra.mxu0 %v2055
        %v2094 = vpop.f32.mrf.mxu0
        %v2095 = vadd.f32 0.0, %v2094
        %v2096 = vpop.f32.mrf.mxu0
        %v2097 = vpop.f32.mrf.mxu0
        %v2098 = vpop.f32.mrf.mxu0
        %2099 = vdwg.mxu0
        %2101 = vrot.lane.b32.xlu0 %v1997, 8
        %v2102 = vpop.permute.xlu0 %2101
        %2105 = vrot.lane.b32.xlu0 %v2046, 16
        %v2106 = vpop.permute.xlu0 %2105
        %2109 = vrot.lane.b32.xlu0 %v2095, 24
        %v2110 = vpop.permute.xlu0 %2109
        %v2112 = vsel %vm965, %v1948, %v2102
        %v2113 = vsel %vm1421, %v2112, %v2106
        %v2114 = vsel %vm1423, %v2113, %v2110
        %v2115 = vpack.c.bf16 %v2114, %v2114
        %v2120 = vunpack.c.l.b16 %v851
        %v2121 = vunpack.c.l.b16 %v852
        %v2122 = vunpack.c.l.b16 %v853
        %v2123 = vunpack.c.l.b16 %v854
        %v2124 = vpack.c.b16 %v2121, %v2120
        %v2125 = vpack.c.b16 %v2123, %v2122
        %v2129 = vsel %vm856, %v2115, 0
        %2131 = vmatprep.subr.bf16.mxu0 0
        %2132 = vmatpush1.bf16.msra.mxu0 0
        %2133 = vmatprep.subr.bf16.mxu0 0
        %2134 = vmatpush1.bf16.msra.mxu0 0
        %2135 = vmatprep.subr.bf16.mxu0 0
        %2136 = vmatpush1.bf16.msra.mxu0 0
        %2137 = vmatprep.subr.bf16.mxu0 0
        %2138 = vmatpush1.bf16.msra.mxu0 0
        %2139 = vmatprep.subr.bf16.mxu0 0
        %2140 = vmatpush1.bf16.msra.mxu0 0
        %2141 = vmatprep.subr.bf16.mxu0 0
        %2142 = vmatpush1.bf16.msra.mxu0 0
        %2143 = vmatprep.subr.bf16.mxu0 0
        %2144 = vmatpush1.bf16.msra.mxu0 %v2125
        %2145 = vmatprep.subr.bf16.mxu0 0
        %2146 = vmatpush1.bf16.msra.mxu0 %v2124
        %2147 = vmatprep.subr.bf16.mxu0 0
        %2148 = vmatpush2.bf16.msra.mxu0 0
        %2149 = vmatprep.subr.bf16.mxu0 0
        %2150 = vmatpush2.bf16.msra.mxu0 0
        %2151 = vmatprep.subr.bf16.mxu0 0
        %2152 = vmatpush2.bf16.msra.mxu0 0
        %2153 = vmatprep.subr.bf16.mxu0 0
        %2154 = vmatpush2.bf16.msra.mxu0 0
        %2155 = vmatprep.subr.bf16.mxu0 0
        %2156 = vmatpush2.bf16.msra.mxu0 0
        %2157 = vmatprep.subr.bf16.mxu0 0
        %2158 = vmatpush2.bf16.msra.mxu0 0
        %2159 = vmatprep.subr.bf16.mxu0 0
        %2160 = vmatpush2.bf16.msra.mxu0 0
        %2161 = vmatprep.subr.bf16.mxu0 0
        %2162 = vmatpush2.bf16.msra.mxu0 0
        %2163 = vmatprep.mubr.bf16.mxu0 0
        %2164 = vmatmul.mubr.bf16.gmra.mxu0 %v2129
        %v2165 = vpop.f32.mrf.mxu0
        %v2166 = vadd.f32 0.0, %v2165
        %v2167 = vpop.f32.mrf.mxu0
        %v2168 = vpop.f32.mrf.mxu0
        %v2169 = vpop.f32.mrf.mxu0
        %2170 = vdwg.mxu0
        %v2171 = vadd.f32 %v1486, %v2166
        %v2172 = vlaneseq
        %v2173 = vshrl.u32 %v2172, 7
        %v2174 = vsub.s32 1, %v2173
        %v2175 = vrot.slane %v855, %v2174
        %v2176 = vadd.f32 %v2171, %v2175
        %v2177 = vsel %vm856, %v2176, 0.0
        %2178 = vadd.xlane.f32.xlu0 %v2177
        %v2179 = vpop.xlane.xlu0 %2178
        %v2180 = vmul.f32 %v2179, %v860
        %v2181 = vsub.f32 %v2176, %v2180
        %v2182 = vmul.f32 %v2181, %v2181
        %v2183 = vsel %vm856, %v2182, 0.0
        %2184 = vadd.xlane.f32.xlu0 %v2183
        %v2185 = vpop.xlane.xlu0 %2184
        %v2186 = vmul.f32 %v2185, 0.032258064
        %v2187 = vrsqrt.pop %v2186
        %v2188 = vmul.f32 %v2186, %v2187
        %vm2189 = vcmp.eq.f32.partialorder %v2186, inf
        %v2190 = vsel %vm2189, %v2186, %v2188
        %vm2191 = vcmp.eq.f32.partialorder %v2186, 0.0
        %v2192 = vand.u32 %v2186, 2147483648
        %v2193 = vsel %vm2191, %v2192, %v2190
        %v2194 = vadd.f32 %v2193, 1e-06
        %v2195 = vrcp.pop %v2194
        %v2196 = vlaneseq
        %v2197 = vshrl.u32 %v2196, 7
        %v2198 = vsub.s32 2, %v2197
        %v2199 = vrot.slane %v836, %v2198
        %v2200 = vmul.f32 %v2199, %v2181
        %v2201 = vmul.f32 %v2200, %v2195
        %v2202 = vlaneseq
        %v2203 = vshrl.u32 %v2202, 7
        %v2204 = vsub.s32 2, %v2203
        %v2205 = vrot.slane %v837, %v2204
        %v2206 = vadd.f32 %v2201, %v2205
        %v2207 = vpack.c.bf16 %v2206, %v2206
        %v2208 = vld [vmem:[%s686] sm:$0xf]
        %v2209 = vld [vmem:[%s686 + $0x4] sm:$0xf]
        %v2210 = vld [vmem:[%s686 + $0x8] sm:$0xf]
        %v2211 = vld [vmem:[%s686 + $0xc] sm:$0xf]
        %v2212 = vld [vmem:[%s814] sm:$0x1]
        %v2214 = vlaneseq
        %v2215 = vshrl.u32 %v2214, 7
        %v2216 = vsub.s32 0, %v2215
        %v2217 = vrot.slane %v2212, %v2216
        %v2223 = vunpack.c.l.b16 %v2208
        %v2224 = vunpack.c.l.b16 %v2209
        %v2225 = vunpack.c.l.b16 %v2210
        %v2226 = vunpack.c.l.b16 %v2211
        %v2227 = vpack.c.b16 %v2224, %v2223
        %v2228 = vpack.c.b16 %v2226, %v2225
        %v2232 = vsel %vm856, %v2207, 0
        %2234 = vmatprep.subr.bf16.mxu0 0
        %2235 = vmatpush1.bf16.msra.mxu0 0
        %2236 = vmatprep.subr.bf16.mxu0 0
        %2237 = vmatpush1.bf16.msra.mxu0 0
        %2238 = vmatprep.subr.bf16.mxu0 0
        %2239 = vmatpush1.bf16.msra.mxu0 0
        %2240 = vmatprep.subr.bf16.mxu0 0
        %2241 = vmatpush1.bf16.msra.mxu0 0
        %2242 = vmatprep.subr.bf16.mxu0 0
        %2243 = vmatpush1.bf16.msra.mxu0 0
        %2244 = vmatprep.subr.bf16.mxu0 0
        %2245 = vmatpush1.bf16.msra.mxu0 0
        %2246 = vmatprep.subr.bf16.mxu0 0
        %2247 = vmatpush1.bf16.msra.mxu0 %v2228
        %2248 = vmatprep.subr.bf16.mxu0 0
        %2249 = vmatpush1.bf16.msra.mxu0 %v2227
        %2250 = vmatprep.subr.bf16.mxu0 0
        %2251 = vmatpush2.bf16.msra.mxu0 0
        %2252 = vmatprep.subr.bf16.mxu0 0
        %2253 = vmatpush2.bf16.msra.mxu0 0
        %2254 = vmatprep.subr.bf16.mxu0 0
        %2255 = vmatpush2.bf16.msra.mxu0 0
        %2256 = vmatprep.subr.bf16.mxu0 0
        %2257 = vmatpush2.bf16.msra.mxu0 0
        %2258 = vmatprep.subr.bf16.mxu0 0
        %2259 = vmatpush2.bf16.msra.mxu0 0
        %2260 = vmatprep.subr.bf16.mxu0 0
        %2261 = vmatpush2.bf16.msra.mxu0 0
        %2262 = vmatprep.subr.bf16.mxu0 0
        %2263 = vmatpush2.bf16.msra.mxu0 0
        %2264 = vmatprep.subr.bf16.mxu0 0
        %2265 = vmatpush2.bf16.msra.mxu0 0
        %2266 = vmatprep.mubr.bf16.mxu0 0
        %2267 = vmatmul.mubr.bf16.gmra.mxu0 %v2232
        %v2268 = vpop.f32.mrf.mxu0
        %v2269 = vadd.f32 %v2217, %v2268
        %v2270 = vpop.f32.mrf.mxu0
        %v2271 = vpop.f32.mrf.mxu0
        %v2272 = vpop.f32.mrf.mxu0
        %2273 = vdwg.mxu0
        %v2274 = vmax.f32 %v2269, 0.0
        %v2275 = vpack.c.bf16 %v2274, %v2274
        %v2276 = vld [vmem:[%s819] sm:$0xf]
        %v2277 = vld [vmem:[%s819 + $0x4] sm:$0xf]
        %v2278 = vld [vmem:[%s819 + $0x8] sm:$0xf]
        %v2279 = vld [vmem:[%s819 + $0xc] sm:$0xf]
        %v2280 = vld [vmem:[%s819 + $0x10] sm:$0xf]
        %v2281 = vld [vmem:[%s819 + $0x14] sm:$0xf]
        %v2282 = vld [vmem:[%s819 + $0x18] sm:$0xf]
        %v2283 = vld [vmem:[%s819 + $0x1c] sm:$0xf]
        %v2284 = vld [vmem:[%s822] sm:$0x1]
        %v2286 = vlaneseq
        %v2287 = vshrl.u32 %v2286, 7
        %v2288 = vsub.s32 0, %v2287
        %v2289 = vrot.slane %v2284, %v2288
        %v2299 = vunpack.c.l.b16 %v2276
        %v2300 = vunpack.c.l.b16 %v2277
        %v2301 = vunpack.c.l.b16 %v2278
        %v2302 = vunpack.c.l.b16 %v2279
        %v2303 = vunpack.c.l.b16 %v2280
        %v2304 = vunpack.c.l.b16 %v2281
        %v2305 = vunpack.c.l.b16 %v2282
        %v2306 = vunpack.c.l.b16 %v2283
        %v2307 = vpack.c.b16 %v2300, %v2299
        %v2308 = vpack.c.b16 %v2302, %v2301
        %v2309 = vpack.c.b16 %v2304, %v2303
        %v2310 = vpack.c.b16 %v2306, %v2305
        %vm2315 = vcmask 523264
        %v2317 = vsel %vm2315, %v2275, 0
        %2319 = vmatprep.subr.bf16.mxu0 0
        %2320 = vmatpush1.bf16.msra.mxu0 0
        %2321 = vmatprep.subr.bf16.mxu0 0
        %2322 = vmatpush1.bf16.msra.mxu0 0
        %2323 = vmatprep.subr.bf16.mxu0 0
        %2324 = vmatpush1.bf16.msra.mxu0 0
        %2325 = vmatprep.subr.bf16.mxu0 0
        %2326 = vmatpush1.bf16.msra.mxu0 0
        %2327 = vmatprep.subr.bf16.mxu0 0
        %2328 = vmatpush1.bf16.msra.mxu0 %v2310
        %2329 = vmatprep.subr.bf16.mxu0 0
        %2330 = vmatpush1.bf16.msra.mxu0 %v2309
        %2331 = vmatprep.subr.bf16.mxu0 0
        %2332 = vmatpush1.bf16.msra.mxu0 %v2308
        %2333 = vmatprep.subr.bf16.mxu0 0
        %2334 = vmatpush1.bf16.msra.mxu0 %v2307
        %2335 = vmatprep.subr.bf16.mxu0 0
        %2336 = vmatpush2.bf16.msra.mxu0 0
        %2337 = vmatprep.subr.bf16.mxu0 0
        %2338 = vmatpush2.bf16.msra.mxu0 0
        %2339 = vmatprep.subr.bf16.mxu0 0
        %2340 = vmatpush2.bf16.msra.mxu0 0
        %2341 = vmatprep.subr.bf16.mxu0 0
        %2342 = vmatpush2.bf16.msra.mxu0 0
        %2343 = vmatprep.subr.bf16.mxu0 0
        %2344 = vmatpush2.bf16.msra.mxu0 0
        %2345 = vmatprep.subr.bf16.mxu0 0
        %2346 = vmatpush2.bf16.msra.mxu0 0
        %2347 = vmatprep.subr.bf16.mxu0 0
        %2348 = vmatpush2.bf16.msra.mxu0 0
        %2349 = vmatprep.subr.bf16.mxu0 0
        %2350 = vmatpush2.bf16.msra.mxu0 0
        %2351 = vmatprep.mubr.bf16.mxu0 0
        %2352 = vmatmul.mubr.bf16.gmra.mxu0 %v2317
        %v2353 = vpop.f32.mrf.mxu0
        %v2354 = vadd.f32 %v2289, %v2353
        %v2355 = vpop.f32.mrf.mxu0
        %v2356 = vpop.f32.mrf.mxu0
        %v2357 = vpop.f32.mrf.mxu0
        %2358 = vdwg.mxu0
        %v2359 = vadd.f32 %v2176, %v2354
        %2360 = vst.msk [vmem:[#allocation2] sm:$0xff] %vm856, %v2359
        %p2361 = scmp.eq.s32.totalorder %s42, 1
        // Predicated region
        $region109: #{tpu_custom_call.1} parent=83 // pred_check
          %p2362 = pneg %p2361
        $region110: #{tpu_custom_call.1} parent=83 // pred_check_branch
          %2364 = sbr.rel (%p2362) target = $region112
        $region111: #{tpu_custom_call.1} parent=83 // pred_region
          %v2365 = vld [vmem:[%s14] sm:$0x1]
          %v2366 = vld [vmem:[%s15] sm:$0x1]
          %v2367 = vsel %vm856, %v2359, 0.0
          %2368 = vadd.xlane.f32.xlu0 %v2367
          %v2369 = vpop.xlane.xlu0 %2368
          %v2370 = vmul.f32 %v2369, %v860
          %v2371 = vsub.f32 %v2359, %v2370
          %v2372 = vmul.f32 %v2371, %v2371
          %v2373 = vsel %vm856, %v2372, 0.0
          %2374 = vadd.xlane.f32.xlu0 %v2373
          %v2375 = vpop.xlane.xlu0 %2374
          %v2376 = vmul.f32 %v2375, 0.032258064
          %v2377 = vrsqrt.pop %v2376
          %v2378 = vmul.f32 %v2376, %v2377
          %vm2379 = vcmp.eq.f32.partialorder %v2376, inf
          %v2380 = vsel %vm2379, %v2376, %v2378
          %vm2381 = vcmp.eq.f32.partialorder %v2376, 0.0
          %v2382 = vand.u32 %v2376, 2147483648
          %v2383 = vsel %vm2381, %v2382, %v2380
          %v2384 = vadd.f32 %v2383, 1e-06
          %v2385 = vrcp.pop %v2384
          %v2387 = vlaneseq
          %v2388 = vshrl.u32 %v2387, 7
          %v2389 = vsub.s32 0, %v2388
          %v2390 = vrot.slane %v2365, %v2389
          %v2392 = vmul.f32 %v2390, %v2371
          %v2393 = vmul.f32 %v2392, %v2385
          %v2395 = vlaneseq
          %v2396 = vshrl.u32 %v2395, 7
          %v2397 = vsub.s32 0, %v2396
          %v2398 = vrot.slane %v2366, %v2397
          %v2400 = vadd.f32 %v2393, %v2398
          %2401 = vst.msk [vmem:[%s785] sm:$0xff] %vm856, %v2400
        $region112: #{tpu_custom_call.1} parent=83 // pred_fallthru
          _
        %s2402 = sand.u32 %s458, 1
        %s2403 = scalar_lea.sflag [#allocation5], %s2402
        %s2404 = sand.u32 %s458, 1
        %s2405 = smul.addr %s2404, 8
        %s2406 = scalar_lea.vmem [#allocation12], %s2405
        // Predicated region
        $region113: #{tpu_custom_call.1} parent=83 // pred_check
          %p2407 = pneg %p468
        $region114: #{tpu_custom_call.1} parent=83 // pred_check_branch
          %2409 = sbr.rel (%p2407) target = $region116
        $region115: #{tpu_custom_call.1} parent=83 // pred_region
          %s2411 = ssub.s32 128, 128
          %2412 = vsyncadd %s2403, %s2411
          %s2413 = smul.addr %s41, 128
          %s2414 = scalar_lea.hbm %s16, %s2413
          %s2416 = sshll.u32 %s2406, 4
          %s2417 = int_to_ptr.vmem [resolvable:$true] %s2416
          %2419 = dma.vmem_to_hbm [thread:$0]  %s2417, 128, %s2414, %s2403
        $region116: #{tpu_custom_call.1} parent=83 // pred_fallthru
          _
      $region84: #{tpu_custom_call.1} parent=5 // pred_fallthru
        _
      %p2420 = scmp.le.s32.totalorder 2, %s32
      // Predicated region
      $region117: #{tpu_custom_call.1} parent=5 // pred_check
        %p2421 = pneg %p2420
      $region118: #{tpu_custom_call.1} parent=5 // pred_check_branch
        %2423 = sbr.rel (%p2421) target = $region120
      $region119: #{tpu_custom_call.1} parent=5 // pred_region
        %s2424 = ssub.s32 %s32, 2
        // Predicated region
        $region121: #{tpu_custom_call.1} parent=119 // pred_check
          %p2425 = pneg %p474
        $region122: #{tpu_custom_call.1} parent=119 // pred_check_branch
          %2427 = sbr.rel (%p2425) target = $region124
        $region123: #{tpu_custom_call.1} parent=119 // pred_region
          %s2428 = sand.u32 %s459, 1
          %s2429 = scalar_lea.sflag [#allocation5], %s2428
          %s2430 = sand.u32 %s459, 1
          %s2431 = smul.addr %s2430, 8
          %s2432 = scalar_lea.vmem [#allocation12], %s2431
          %2433 = dma.done %s2429, 128
        $region124: #{tpu_custom_call.1} parent=119 // pred_fallthru
          _
      $region120: #{tpu_custom_call.1} parent=5 // pred_fallthru
        _
    $region6: #{tpu_custom_call.1} parent=1 // loop_footer
      %s36 = sadd.s32 1, %s32
    $region7: #{tpu_custom_call.1} parent=1 // loop_footer_branch
      %31 = sbr.rel target = $region3
    $region8: #{tpu_custom_call.1} parent=1 // loop_exit
      _
    %2434 = vsyncpa [#allocation4], 1
    %s2435 = scalar_lea.sflag [#allocation4], 1
    %2436 = vsyncpa %s2435, 1
    %2437 = vsyncpa [#allocation7], 1
    %s2438 = scalar_lea.sflag [#allocation7], 1
    %2439 = vsyncpa %s2438, 1
    %2440 = vsyncpa [#allocation10], 1
    %2441 = vsyncpa [#allocation5], 1
    %s2442 = scalar_lea.sflag [#allocation5], 1
    %2443 = vsyncpa %s2442, 1

</llo_original>
